<compile_context>
chip_gen: v7x
topology: tpu7x:2x2x1
jax: 0.10.0
libtpu: 0.0.40
codegen_flags: <defaults>
</compile_context>

<pallas_src>
import functools

import jax
import jax.numpy as jnp
from jax.experimental import pallas as pl
from jax.experimental.pallas import tpu as pltpu


NUM_CLASSES = 10
IN_FEATURES = 64          # backbone feature width fed to the classifier
HIDDEN = 128              # classifier hidden size (per the module)
C_STEM = 16               # stem output channels
C_PW = 32                 # pointwise-expand channels


# ----------------------------- fused Pallas kernel ---------------------------------

def _fused_effnet_kernel(cols_ref, ws_ref, bs_ref, wdw_ref, bdw_ref,
                         wpw_ref, bpw_ref, whc_ref, bhc_ref,
                         weff_ref, beff_ref, o_ref, halo_ref, *, h, w):
    """Whole forward pass for a block of Bt images; all intermediates stay in VMEM.

    cols_ref : [Bt, H*W, 27] bf16   stem im2col columns (3x3 s2 taps of the RGB image)
    halo_ref : [Bt, H+2, W+2, 16]   f32 VMEM scratch (zero halo for the depthwise conv)
    o_ref    : [Bt, NC]             f32 logits
    """
    bt = cols_ref.shape[0]
    hw = h * w
    c1 = ws_ref.shape[1]

    # ---- stem 3x3 s2 conv as im2col matmul (bf16 MXU operands, f32 acc) + SiLU (f32) ----
    cols = cols_ref[...].reshape(bt * hw, cols_ref.shape[2])
    s = jnp.dot(cols, ws_ref[...], preferred_element_type=jnp.float32) + bs_ref[...]
    s = s * jax.nn.sigmoid(s)                                   # SiLU in f32 (v5e-safe)

    # ---- stem activation into a zero halo-padded VMEM scratch (never leaves VMEM) ----
    halo_ref[...] = jnp.zeros_like(halo_ref)
    halo_ref[:, 1:h + 1, 1:w + 1, :] = s.reshape(bt, h, w, c1)

    # ---- depthwise 3x3 + SiLU: 9 unrolled VPU MACs, 3 hoisted column-shifted slabs ----
    wdw = wdw_ref[...]                                          # [9, c1] f32
    acc = jnp.zeros((bt, h, w, c1), jnp.float32)
    for dj in range(3):
        slab = halo_ref[:, :, dj:dj + w, :]                     # one sublane-shifted load per dj
        for di in range(3):                                     # di slices an untiled dim: free
            w_tap = wdw[di * 3 + dj:di * 3 + dj + 1, :]         # (1, c1)
            acc = acc + slab[:, di:di + h, :, :] * w_tap
    y = acc.reshape(bt * hw, c1) + bdw_ref[...]
    y = y * jax.nn.sigmoid(y)

    # ---- pointwise expand 16->32 + SiLU (MXU bf16 operands, f32 accumulation) ----
    z = jnp.dot(y.astype(jnp.bfloat16), wpw_ref[...],
                preferred_element_type=jnp.float32) + bpw_ref[...]
    z = z * jax.nn.sigmoid(z)

    # ---- head 1x1 conv 32->64 + SiLU ----
    f = jnp.dot(z.astype(jnp.bfloat16), whc_ref[...],
                preferred_element_type=jnp.float32) + bhc_ref[...]
    f = f * jax.nn.sigmoid(f)

    # ---- global average pool over spatial positions (VMEM-resident reduce) ----
    pooled = jnp.mean(f.reshape(bt, hw, f.shape[1]), axis=1)    # [Bt, 64]

    # ---- folded classifier: Linear(64,128)->Dropout(eval)->Linear(128,NC) == one affine ----
    logits = jnp.dot(pooled, weff_ref[...],
                     preferred_element_type=jnp.float32) + beff_ref[...]
    o_ref[...] = logits.astype(o_ref.dtype)


# ----------------------------- Pallas wrapper ---------------------------------

def _pick_batch_tiling(b):
    """Images per grid step (Bt) and number of grid steps.

    Keeps >=2 parallel grid steps whenever possible so v7x's two TensorCores both get work;
    batches up to 8 images per step to amortize per-step overhead.  For much larger batches /
    Bt, raise vmem_limit_bytes via pltpu.CompilerParams.
    """
    if b <= 1:
        return 1, 1
    bt = min(8, pl.cdiv(b, 2))
    return bt, pl.cdiv(b, bt)


def pallas_effnet_fused(cols, kp, h, w):
    """cols: [B, H*W, 27] bf16 stem im2col columns -> logits [B, NUM_CLASSES] f32."""
    b, hw, kdim = cols.shape
    c1 = kp["stem_w"].shape[1]
    nc = kp["eff_w"].shape[1]

    bt, nblk = _pick_batch_tiling(b)
    b_pad = bt * nblk
    if b_pad != b:
        cols = jnp.pad(cols, ((0, b_pad - b), (0, 0), (0, 0)))
    cols = cols.reshape(nblk * bt, hw, kdim)

    kern = functools.partial(_fused_effnet_kernel, h=h, w=w)

    def _full(arr):                       # weights / biases: one full-array block per step
        return pl.BlockSpec(arr.shape, lambda i: (0, 0))

    out = pl.pallas_call(
        kern,
        out_shape=jax.ShapeDtypeStruct((nblk, bt, nc), jnp.float32),
        grid=(nblk,),
        in_specs=[
            pl.BlockSpec((bt, hw, kdim), lambda i: (i, 0, 0)),
            _full(kp["stem_w"]), _full(kp["stem_b"]),
            _full(kp["dw_w"]), _full(kp["dw_b"]),
            _full(kp["pw_w"]), _full(kp["pw_b"]),
            _full(kp["hc_w"]), _full(kp["hc_b"]),
            _full(kp["eff_w"]), _full(kp["eff_b"]),
        ],
        out_specs=pl.BlockSpec((pl.Squeezed(), bt, nc), lambda i: (i, 0, 0)),
        scratch_shapes=[pltpu.VMEM((bt, h + 2, w + 2, c1), jnp.float32)],
        compiler_params=pltpu.CompilerParams(dimension_semantics=("parallel",)),
    )(cols, kp["stem_w"], kp["stem_b"], kp["dw_w"], kp["dw_b"],
      kp["pw_w"], kp["pw_b"], kp["hc_w"], kp["hc_b"], kp["eff_w"], kp["eff_b"])
    return out.reshape(b_pad, nc)[:b]


# ----------------------------- JAX glue (jitted) ---------------------------------

def _stem_im2col(x_nhwc):
    """Stride-2, pad-1, 3x3 im2col of the RGB input -> [B, Ho*Wo, 27] plus (Ho, Wo)."""
    b, h_in, w_in, _ = x_nhwc.shape
    xp = jnp.pad(x_nhwc, ((0, 0), (1, 1), (1, 1), (0, 0)))
    ho = (h_in - 1) // 2 + 1
    wo = (w_in - 1) // 2 + 1
    taps = [xp[:, di:di + 2 * ho:2, dj:dj + 2 * wo:2, :]
            for di in range(3) for dj in range(3)]
    cols = jnp.stack(taps, axis=3).reshape(b, ho * wo, 9 * 3)
    return cols, ho, wo


@jax.jit
def effnet_forward(image_nchw, kp):
    """Matches EffNetModel.forward(image): backbone -> classifier -> dropout(eval) -> out."""
    x = jnp.transpose(image_nchw, (0, 2, 3, 1)).astype(jnp.float32)   # NCHW -> NHWC
    cols, ho, wo = _stem_im2col(x)
    return pallas_effnet_fused(cols.astype(jnp.bfloat16), kp, ho, wo)


# ----------------------------- parameters (classifier pre-folded) ------------------

def init_params(key):
    """Deterministic synthetic parameters (BN folded, eval semantics), kernel-ready layout."""
    ks = jax.random.split(key, 8)

    def w(k, shape, fan_in):
        return jax.random.normal(k, shape, jnp.float32) / jnp.sqrt(jnp.float32(fan_in))

    stem_w = w(ks[0], (27, C_STEM), 27)                 # 3x3 conv, 3 -> 16, [kh*kw*Cin, Cout]
    dw_w = w(ks[1], (9, C_STEM), 9)                     # depthwise 3x3 on 16 channels
    pw_w = w(ks[2], (C_STEM, C_PW), C_STEM)             # pointwise 16 -> 32
    hc_w = w(ks[3], (C_PW, IN_FEATURES), C_PW)          # head 1x1, 32 -> 64
    cls_w = w(ks[4], (IN_FEATURES, HIDDEN), IN_FEATURES)
    cls_b = w(ks[5], (HIDDEN,), IN_FEATURES)
    out_w = w(ks[6], (HIDDEN, NUM_CLASSES), HIDDEN)
    out_b = w(ks[7], (NUM_CLASSES,), HIDDEN)

    # Fold Linear(64,128) -> Dropout(0.3, eval=identity) -> Linear(128,NC) into one affine map
    # (precomputed at init, per review -- no per-call fold).
    eff_w = cls_w @ out_w                               # [64, NC]
    eff_b = cls_b @ out_w + out_b                       # [NC]

    return {
        "stem_w": stem_w.astype(jnp.bfloat16),
        "stem_b": jnp.zeros((1, C_STEM), jnp.float32),
        "dw_w": dw_w,                                   # f32: depthwise MAC stays f32 (v5e-safe)
        "dw_b": jnp.zeros((1, C_STEM), jnp.float32),
        "pw_w": pw_w.astype(jnp.bfloat16),
        "pw_b": jnp.zeros((1, C_PW), jnp.float32),
        "hc_w": hc_w.astype(jnp.bfloat16),
        "hc_b": jnp.zeros((1, IN_FEATURES), jnp.float32),
        "eff_w": eff_w,
        "eff_b": eff_b.reshape(1, NUM_CLASSES),
    }


# ----------------------------- pure-JAX reference (for a silent check) -------------

def reference_forward(image_nchw, kp):
    x = jnp.transpose(image_nchw, (0, 2, 3, 1)).astype(jnp.float32)
    cols, ho, wo = _stem_im2col(x)
    cols = cols.astype(jnp.bfloat16).astype(jnp.float32)   # match kernel's bf16 input quantization
    s = cols @ kp["stem_w"].astype(jnp.float32) + kp["stem_b"]
    s = s * jax.nn.sigmoid(s)
    s4 = s.reshape(x.shape[0], ho, wo, C_STEM)
    sp = jnp.pad(s4, ((0, 0), (1, 1), (1, 1), (0, 0)))
    y = jnp.zeros_like(s4)
    for di in range(3):
        for dj in range(3):
            y = y + sp[:, di:di + ho, dj:dj + wo, :] * kp["dw_w"][di * 3 + dj]
    y = y + kp["dw_b"]
    y = y * jax.nn.sigmoid(y)
    z = y.reshape(x.shape[0], ho * wo, C_STEM) @ kp["pw_w"].astype(jnp.float32) + kp["pw_b"]
    z = z * jax.nn.sigmoid(z)
    f = z @ kp["hc_w"].astype(jnp.float32) + kp["hc_b"]
    f = f * jax.nn.sigmoid(f)
    pooled = jnp.mean(f, axis=1)
    return pooled @ kp["eff_w"] + kp["eff_b"]


# ----------------------------- main ---------------------------------

if __name__ == "__main__":
    key = jax.random.PRNGKey(0)
    pkey, xkey = jax.random.split(key)
    params = init_params(pkey)

    # Small NCHW RGB batch: batch=4 exercises Bt=2 images per grid step over 2 parallel steps.
    image = jax.random.normal(xkey, (4, 3, 32, 32), jnp.float32)

    out = effnet_forward(image, params)
    out = jax.block_until_ready(out)

    assert out.shape == (4, NUM_CLASSES) and out.dtype == jnp.float32
    assert bool(jnp.all(jnp.isfinite(out)))
    ref = reference_forward(image, params)
    assert float(jnp.max(jnp.abs(out - ref))) < 1e-1   # bf16-operand drift tolerance
    print("KERNEL_OK")
</pallas_src>

<mosaic_0001>
module attributes {stable_mosaic.version = 11 : i64} {
  func.func @_fused_effnet_kernel(%arg0: i32, %arg1: memref<2x256x27xbf16, #tpu.memory_space<vmem>>, %arg2: memref<27x16xbf16, #tpu.memory_space<vmem>>, %arg3: memref<1x16xf32, #tpu.memory_space<vmem>>, %arg4: memref<9x16xf32, #tpu.memory_space<vmem>>, %arg5: memref<1x16xf32, #tpu.memory_space<vmem>>, %arg6: memref<16x32xbf16, #tpu.memory_space<vmem>>, %arg7: memref<1x32xf32, #tpu.memory_space<vmem>>, %arg8: memref<32x64xbf16, #tpu.memory_space<vmem>>, %arg9: memref<1x64xf32, #tpu.memory_space<vmem>>, %arg10: memref<64x10xf32, #tpu.memory_space<vmem>>, %arg11: memref<1x10xf32, #tpu.memory_space<vmem>>, %arg12: memref<1x2x10xf32, #tpu.memory_space<vmem>>, %arg13: memref<2x18x18x16xf32, #tpu.memory_space<vmem>>) attributes {dimension_semantics = [#tpu.dimension_semantics<parallel>], iteration_bounds = array<i64: 2>, scalar_prefetch = 0 : i64, scratch_operands = 1 : i64, tpu.core_type = #tpu.core_type<tc>, window_params = [{transform_indices = @transform_0, window_bounds = array<i64: 2, 256, 27>}, {pipeline_mode = #tpu.pipeline_mode<synchronous>, transform_indices = @transform_1, window_bounds = array<i64: 27, 16>}, {pipeline_mode = #tpu.pipeline_mode<synchronous>, transform_indices = @transform_2, window_bounds = array<i64: 1, 16>}, {pipeline_mode = #tpu.pipeline_mode<synchronous>, transform_indices = @transform_3, window_bounds = array<i64: 9, 16>}, {pipeline_mode = #tpu.pipeline_mode<synchronous>, transform_indices = @transform_4, window_bounds = array<i64: 1, 16>}, {pipeline_mode = #tpu.pipeline_mode<synchronous>, transform_indices = @transform_5, window_bounds = array<i64: 16, 32>}, {pipeline_mode = #tpu.pipeline_mode<synchronous>, transform_indices = @transform_6, window_bounds = array<i64: 1, 32>}, {pipeline_mode = #tpu.pipeline_mode<synchronous>, transform_indices = @transform_7, window_bounds = array<i64: 32, 64>}, {pipeline_mode = #tpu.pipeline_mode<synchronous>, transform_indices = @transform_8, window_bounds = array<i64: 1, 64>}, {pipeline_mode = #tpu.pipeline_mode<synchronous>, transform_indices = @transform_9, window_bounds = array<i64: 64, 10>}, {pipeline_mode = #tpu.pipeline_mode<synchronous>, transform_indices = @transform_10, window_bounds = array<i64: 1, 10>}, {transform_indices = @transform_11, window_bounds = array<i64: 1, 2, 10>}]} {
    %c0 = arith.constant 0 : index
    %c0_0 = arith.constant 0 : index
    %c0_1 = arith.constant 0 : index
    %0 = vector.load %arg1[%c0, %c0_0, %c0_1] : memref<2x256x27xbf16, #tpu.memory_space<vmem>>, vector<2x256x27xbf16>
    %1 = vector.shape_cast %0 : vector<2x256x27xbf16> to vector<512x27xbf16>
    %c0_2 = arith.constant 0 : index
    %c0_3 = arith.constant 0 : index
    %2 = vector.load %arg2[%c0_2, %c0_3] : memref<27x16xbf16, #tpu.memory_space<vmem>>, vector<27x16xbf16>
    %cst = arith.constant dense<0.000000e+00> : vector<512x16xf32>
    %3 = tpu.matmul %1, %2, %cst {dimension_numbers = #tpu.dot_dimension_numbers<[1], [0], [0], [1], [0, 0, 1, 1], [], []>} : vector<512x27xbf16>, vector<27x16xbf16>, vector<512x16xf32> -> vector<512x16xf32>
    %c0_4 = arith.constant 0 : index
    %c0_5 = arith.constant 0 : index
    %4 = vector.load %arg3[%c0_4, %c0_5] : memref<1x16xf32, #tpu.memory_space<vmem>>, vector<1x16xf32>
    %5 = vector.broadcast %4 : vector<1x16xf32> to vector<512x16xf32>
    %6 = arith.addf %3, %5 : vector<512x16xf32>
    %7 = arith.negf %6 : vector<512x16xf32>
    %8 = math.exp %7 : vector<512x16xf32>
    %cst_6 = arith.constant 1.000000e+00 : f32
    %9 = vector.broadcast %cst_6 : f32 to vector<512x16xf32>
    %10 = arith.addf %9, %8 : vector<512x16xf32>
    %11 = arith.divf %9, %10 : vector<512x16xf32>
    %12 = arith.mulf %6, %11 : vector<512x16xf32>
    %cst_7 = arith.constant 0.000000e+00 : f32
    %13 = vector.broadcast %cst_7 : f32 to vector<2x18x18x16xf32>
    %c0_8 = arith.constant 0 : index
    %c0_9 = arith.constant 0 : index
    %c0_10 = arith.constant 0 : index
    %c0_11 = arith.constant 0 : index
    %14 = vector.load %arg13[%c0_8, %c0_9, %c0_10, %c0_11] : memref<2x18x18x16xf32, #tpu.memory_space<vmem>>, vector<2x18x18x16xf32>
    tpu.vector_store %arg13[%c0_8, %c0_9, %c0_10, %c0_11], %13 {strides = array<i32>} : memref<2x18x18x16xf32, #tpu.memory_space<vmem>>, vector<2x18x18x16xf32>,
    %15 = vector.shape_cast %12 : vector<512x16xf32> to vector<2x16x16x16xf32>
    %c0_12 = arith.constant 0 : index
    %c1 = arith.constant 1 : index
    %c1_13 = arith.constant 1 : index
    %c0_14 = arith.constant 0 : index
    %16 = vector.load %arg13[%c0_12, %c1, %c1_13, %c0_14] : memref<2x18x18x16xf32, #tpu.memory_space<vmem>>, vector<2x16x16x16xf32>
    tpu.vector_store %arg13[%c0_12, %c1, %c1_13, %c0_14], %15 {strides = array<i32>} : memref<2x18x18x16xf32, #tpu.memory_space<vmem>>, vector<2x16x16x16xf32>,
    %c0_15 = arith.constant 0 : index
    %c0_16 = arith.constant 0 : index
    %17 = vector.load %arg4[%c0_15, %c0_16] : memref<9x16xf32, #tpu.memory_space<vmem>>, vector<9x16xf32>
    %cst_17 = arith.constant 0.000000e+00 : f32
    %18 = vector.broadcast %cst_17 : f32 to vector<2x16x16x16xf32>
    %c0_18 = arith.constant 0 : index
    %c0_19 = arith.constant 0 : index
    %c0_20 = arith.constant 0 : index
    %c0_21 = arith.constant 0 : index
    %19 = vector.load %arg13[%c0_18, %c0_19, %c0_20, %c0_21] : memref<2x18x18x16xf32, #tpu.memory_space<vmem>>, vector<2x18x16x16xf32>
    %20 = vector.extract_strided_slice %17 {offsets = [0, 0], sizes = [1, 16], strides = [1, 1]} : vector<9x16xf32> to vector<1x16xf32>
    %21 = vector.extract_strided_slice %19 {offsets = [0, 0, 0, 0], sizes = [2, 16, 16, 16], strides = [1, 1, 1, 1]} : vector<2x18x16x16xf32> to vector<2x16x16x16xf32>
    %22 = vector.shape_cast %20 : vector<1x16xf32> to vector<1x1x1x16xf32>
    %23 = vector.broadcast %22 : vector<1x1x1x16xf32> to vector<2x16x16x16xf32>
    %24 = arith.mulf %21, %23 : vector<2x16x16x16xf32>
    %25 = arith.addf %18, %24 : vector<2x16x16x16xf32>
    %26 = vector.extract_strided_slice %17 {offsets = [3, 0], sizes = [1, 16], strides = [1, 1]} : vector<9x16xf32> to vector<1x16xf32>
    %27 = vector.extract_strided_slice %19 {offsets = [0, 1, 0, 0], sizes = [2, 16, 16, 16], strides = [1, 1, 1, 1]} : vector<2x18x16x16xf32> to vector<2x16x16x16xf32>
    %28 = vector.shape_cast %26 : vector<1x16xf32> to vector<1x1x1x16xf32>
    %29 = vector.broadcast %28 : vector<1x1x1x16xf32> to vector<2x16x16x16xf32>
    %30 = arith.mulf %27, %29 : vector<2x16x16x16xf32>
    %31 = arith.addf %25, %30 : vector<2x16x16x16xf32>
    %32 = vector.extract_strided_slice %17 {offsets = [6, 0], sizes = [1, 16], strides = [1, 1]} : vector<9x16xf32> to vector<1x16xf32>
    %33 = vector.extract_strided_slice %19 {offsets = [0, 2, 0, 0], sizes = [2, 16, 16, 16], strides = [1, 1, 1, 1]} : vector<2x18x16x16xf32> to vector<2x16x16x16xf32>
    %34 = vector.shape_cast %32 : vector<1x16xf32> to vector<1x1x1x16xf32>
    %35 = vector.broadcast %34 : vector<1x1x1x16xf32> to vector<2x16x16x16xf32>
    %36 = arith.mulf %33, %35 : vector<2x16x16x16xf32>
    %37 = arith.addf %31, %36 : vector<2x16x16x16xf32>
    %c0_22 = arith.constant 0 : index
    %c0_23 = arith.constant 0 : index
    %c1_24 = arith.constant 1 : index
    %c0_25 = arith.constant 0 : index
    %38 = vector.load %arg13[%c0_22, %c0_23, %c1_24, %c0_25] : memref<2x18x18x16xf32, #tpu.memory_space<vmem>>, vector<2x18x16x16xf32>
    %39 = vector.extract_strided_slice %17 {offsets = [1, 0], sizes = [1, 16], strides = [1, 1]} : vector<9x16xf32> to vector<1x16xf32>
    %40 = vector.extract_strided_slice %38 {offsets = [0, 0, 0, 0], sizes = [2, 16, 16, 16], strides = [1, 1, 1, 1]} : vector<2x18x16x16xf32> to vector<2x16x16x16xf32>
    %41 = vector.shape_cast %39 : vector<1x16xf32> to vector<1x1x1x16xf32>
    %42 = vector.broadcast %41 : vector<1x1x1x16xf32> to vector<2x16x16x16xf32>
    %43 = arith.mulf %40, %42 : vector<2x16x16x16xf32>
    %44 = arith.addf %37, %43 : vector<2x16x16x16xf32>
    %45 = vector.extract_strided_slice %17 {offsets = [4, 0], sizes = [1, 16], strides = [1, 1]} : vector<9x16xf32> to vector<1x16xf32>
    %46 = vector.extract_strided_slice %38 {offsets = [0, 1, 0, 0], sizes = [2, 16, 16, 16], strides = [1, 1, 1, 1]} : vector<2x18x16x16xf32> to vector<2x16x16x16xf32>
    %47 = vector.shape_cast %45 : vector<1x16xf32> to vector<1x1x1x16xf32>
    %48 = vector.broadcast %47 : vector<1x1x1x16xf32> to vector<2x16x16x16xf32>
    %49 = arith.mulf %46, %48 : vector<2x16x16x16xf32>
    %50 = arith.addf %44, %49 : vector<2x16x16x16xf32>
    %51 = vector.extract_strided_slice %17 {offsets = [7, 0], sizes = [1, 16], strides = [1, 1]} : vector<9x16xf32> to vector<1x16xf32>
    %52 = vector.extract_strided_slice %38 {offsets = [0, 2, 0, 0], sizes = [2, 16, 16, 16], strides = [1, 1, 1, 1]} : vector<2x18x16x16xf32> to vector<2x16x16x16xf32>
    %53 = vector.shape_cast %51 : vector<1x16xf32> to vector<1x1x1x16xf32>
    %54 = vector.broadcast %53 : vector<1x1x1x16xf32> to vector<2x16x16x16xf32>
    %55 = arith.mulf %52, %54 : vector<2x16x16x16xf32>
    %56 = arith.addf %50, %55 : vector<2x16x16x16xf32>
    %c0_26 = arith.constant 0 : index
    %c0_27 = arith.constant 0 : index
    %c2 = arith.constant 2 : index
    %c0_28 = arith.constant 0 : index
    %57 = vector.load %arg13[%c0_26, %c0_27, %c2, %c0_28] : memref<2x18x18x16xf32, #tpu.memory_space<vmem>>, vector<2x18x16x16xf32>
    %58 = vector.extract_strided_slice %17 {offsets = [2, 0], sizes = [1, 16], strides = [1, 1]} : vector<9x16xf32> to vector<1x16xf32>
    %59 = vector.extract_strided_slice %57 {offsets = [0, 0, 0, 0], sizes = [2, 16, 16, 16], strides = [1, 1, 1, 1]} : vector<2x18x16x16xf32> to vector<2x16x16x16xf32>
    %60 = vector.shape_cast %58 : vector<1x16xf32> to vector<1x1x1x16xf32>
    %61 = vector.broadcast %60 : vector<1x1x1x16xf32> to vector<2x16x16x16xf32>
    %62 = arith.mulf %59, %61 : vector<2x16x16x16xf32>
    %63 = arith.addf %56, %62 : vector<2x16x16x16xf32>
    %64 = vector.extract_strided_slice %17 {offsets = [5, 0], sizes = [1, 16], strides = [1, 1]} : vector<9x16xf32> to vector<1x16xf32>
    %65 = vector.extract_strided_slice %57 {offsets = [0, 1, 0, 0], sizes = [2, 16, 16, 16], strides = [1, 1, 1, 1]} : vector<2x18x16x16xf32> to vector<2x16x16x16xf32>
    %66 = vector.shape_cast %64 : vector<1x16xf32> to vector<1x1x1x16xf32>
    %67 = vector.broadcast %66 : vector<1x1x1x16xf32> to vector<2x16x16x16xf32>
    %68 = arith.mulf %65, %67 : vector<2x16x16x16xf32>
    %69 = arith.addf %63, %68 : vector<2x16x16x16xf32>
    %70 = vector.extract_strided_slice %17 {offsets = [8, 0], sizes = [1, 16], strides = [1, 1]} : vector<9x16xf32> to vector<1x16xf32>
    %71 = vector.extract_strided_slice %57 {offsets = [0, 2, 0, 0], sizes = [2, 16, 16, 16], strides = [1, 1, 1, 1]} : vector<2x18x16x16xf32> to vector<2x16x16x16xf32>
    %72 = vector.shape_cast %70 : vector<1x16xf32> to vector<1x1x1x16xf32>
    %73 = vector.broadcast %72 : vector<1x1x1x16xf32> to vector<2x16x16x16xf32>
    %74 = arith.mulf %71, %73 : vector<2x16x16x16xf32>
    %75 = arith.addf %69, %74 : vector<2x16x16x16xf32>
    %76 = vector.shape_cast %75 : vector<2x16x16x16xf32> to vector<512x16xf32>
    %c0_29 = arith.constant 0 : index
    %c0_30 = arith.constant 0 : index
    %77 = vector.load %arg5[%c0_29, %c0_30] : memref<1x16xf32, #tpu.memory_space<vmem>>, vector<1x16xf32>
    %78 = vector.broadcast %77 : vector<1x16xf32> to vector<512x16xf32>
    %79 = arith.addf %76, %78 : vector<512x16xf32>
    %80 = arith.negf %79 : vector<512x16xf32>
    %81 = math.exp %80 : vector<512x16xf32>
    %cst_31 = arith.constant 1.000000e+00 : f32
    %82 = vector.broadcast %cst_31 : f32 to vector<512x16xf32>
    %83 = arith.addf %82, %81 : vector<512x16xf32>
    %84 = arith.divf %82, %83 : vector<512x16xf32>
    %85 = arith.mulf %79, %84 : vector<512x16xf32>
    %86 = arith.truncf %85 : vector<512x16xf32> to vector<512x16xbf16>
    %c0_32 = arith.constant 0 : index
    %c0_33 = arith.constant 0 : index
    %87 = vector.load %arg6[%c0_32, %c0_33] : memref<16x32xbf16, #tpu.memory_space<vmem>>, vector<16x32xbf16>
    %cst_34 = arith.constant dense<0.000000e+00> : vector<512x32xf32>
    %88 = tpu.matmul %86, %87, %cst_34 {dimension_numbers = #tpu.dot_dimension_numbers<[1], [0], [0], [1], [0, 0, 1, 1], [], []>} : vector<512x16xbf16>, vector<16x32xbf16>, vector<512x32xf32> -> vector<512x32xf32>
    %c0_35 = arith.constant 0 : index
    %c0_36 = arith.constant 0 : index
    %89 = vector.load %arg7[%c0_35, %c0_36] : memref<1x32xf32, #tpu.memory_space<vmem>>, vector<1x32xf32>
    %90 = vector.broadcast %89 : vector<1x32xf32> to vector<512x32xf32>
    %91 = arith.addf %88, %90 : vector<512x32xf32>
    %92 = arith.negf %91 : vector<512x32xf32>
    %93 = math.exp %92 : vector<512x32xf32>
    %cst_37 = arith.constant 1.000000e+00 : f32
    %94 = vector.broadcast %cst_37 : f32 to vector<512x32xf32>
    %95 = arith.addf %94, %93 : vector<512x32xf32>
    %96 = arith.divf %94, %95 : vector<512x32xf32>
    %97 = arith.mulf %91, %96 : vector<512x32xf32>
    %98 = arith.truncf %97 : vector<512x32xf32> to vector<512x32xbf16>
    %c0_38 = arith.constant 0 : index
    %c0_39 = arith.constant 0 : index
    %99 = vector.load %arg8[%c0_38, %c0_39] : memref<32x64xbf16, #tpu.memory_space<vmem>>, vector<32x64xbf16>
    %cst_40 = arith.constant dense<0.000000e+00> : vector<512x64xf32>
    %100 = tpu.matmul %98, %99, %cst_40 {dimension_numbers = #tpu.dot_dimension_numbers<[1], [0], [0], [1], [0, 0, 1, 1], [], []>} : vector<512x32xbf16>, vector<32x64xbf16>, vector<512x64xf32> -> vector<512x64xf32>
    %c0_41 = arith.constant 0 : index
    %c0_42 = arith.constant 0 : index
    %101 = vector.load %arg9[%c0_41, %c0_42] : memref<1x64xf32, #tpu.memory_space<vmem>>, vector<1x64xf32>
    %102 = vector.broadcast %101 : vector<1x64xf32> to vector<512x64xf32>
    %103 = arith.addf %100, %102 : vector<512x64xf32>
    %104 = arith.negf %103 : vector<512x64xf32>
    %105 = math.exp %104 : vector<512x64xf32>
    %cst_43 = arith.constant 1.000000e+00 : f32
    %106 = vector.broadcast %cst_43 : f32 to vector<512x64xf32>
    %107 = arith.addf %106, %105 : vector<512x64xf32>
    %108 = arith.divf %106, %107 : vector<512x64xf32>
    %109 = arith.mulf %103, %108 : vector<512x64xf32>
    %110 = vector.shape_cast %109 : vector<512x64xf32> to vector<2x256x64xf32>
    %cst_44 = arith.constant dense<0.000000e+00> : vector<2x64xf32>
    %111 = vector.multi_reduction <add>, %110, %cst_44 [1] : vector<2x256x64xf32> to vector<2x64xf32>
    %cst_45 = arith.constant 2.560000e+02 : f32
    %112 = vector.broadcast %cst_45 : f32 to vector<2x64xf32>
    %113 = arith.divf %111, %112 : vector<2x64xf32>
    %c0_46 = arith.constant 0 : index
    %c0_47 = arith.constant 0 : index
    %114 = vector.load %arg10[%c0_46, %c0_47] : memref<64x10xf32, #tpu.memory_space<vmem>>, vector<64x10xf32>
    %cst_48 = arith.constant dense<0.000000e+00> : vector<2x10xf32>
    %115 = tpu.matmul %113, %114, %cst_48 {dimension_numbers = #tpu.dot_dimension_numbers<[1], [0], [0], [1], [0, 0, 1, 1], [], []>} : vector<2x64xf32>, vector<64x10xf32>, vector<2x10xf32> -> vector<2x10xf32>
    %c0_49 = arith.constant 0 : index
    %c0_50 = arith.constant 0 : index
    %116 = vector.load %arg11[%c0_49, %c0_50] : memref<1x10xf32, #tpu.memory_space<vmem>>, vector<1x10xf32>
    %117 = vector.broadcast %116 : vector<1x10xf32> to vector<2x10xf32>
    %118 = arith.addf %115, %117 : vector<2x10xf32>
    %c0_51 = arith.constant 0 : index
    %c0_52 = arith.constant 0 : index
    %c0_53 = arith.constant 0 : index
    %119 = vector.load %arg12[%c0_51, %c0_52, %c0_53] : memref<1x2x10xf32, #tpu.memory_space<vmem>>, vector<1x2x10xf32>
    %120 = vector.shape_cast %119 : vector<1x2x10xf32> to vector<2x10xf32>
    %121 = vector.shape_cast %118 : vector<2x10xf32> to vector<1x2x10xf32>
    tpu.vector_store %arg12[%c0_51, %c0_52, %c0_53], %121 {strides = array<i32>} : memref<1x2x10xf32, #tpu.memory_space<vmem>>, vector<1x2x10xf32>,
    return
  }
  func.func @transform_0(%arg0: i32) -> (i32, i32, i32) {
    %c0_i32 = arith.constant 0 : i32
    %c0_i32_0 = arith.constant 0 : i32
    %c0_i32_1 = arith.constant 0 : i32
    return %arg0, %c0_i32, %c0_i32_0 : i32, i32, i32
  }
  func.func @transform_1(%arg0: i32) -> (i32, i32) {
    %c0_i32 = arith.constant 0 : i32
    %c0_i32_0 = arith.constant 0 : i32
    %c0_i32_1 = arith.constant 0 : i32
    return %c0_i32, %c0_i32_0 : i32, i32
  }
  func.func @transform_2(%arg0: i32) -> (i32, i32) {
    %c0_i32 = arith.constant 0 : i32
    %c0_i32_0 = arith.constant 0 : i32
    %c0_i32_1 = arith.constant 0 : i32
    return %c0_i32, %c0_i32_0 : i32, i32
  }
  func.func @transform_3(%arg0: i32) -> (i32, i32) {
    %c0_i32 = arith.constant 0 : i32
    %c0_i32_0 = arith.constant 0 : i32
    %c0_i32_1 = arith.constant 0 : i32
    return %c0_i32, %c0_i32_0 : i32, i32
  }
  func.func @transform_4(%arg0: i32) -> (i32, i32) {
    %c0_i32 = arith.constant 0 : i32
    %c0_i32_0 = arith.constant 0 : i32
    %c0_i32_1 = arith.constant 0 : i32
    return %c0_i32, %c0_i32_0 : i32, i32
  }
  func.func @transform_5(%arg0: i32) -> (i32, i32) {
    %c0_i32 = arith.constant 0 : i32
    %c0_i32_0 = arith.constant 0 : i32
    %c0_i32_1 = arith.constant 0 : i32
    return %c0_i32, %c0_i32_0 : i32, i32
  }
  func.func @transform_6(%arg0: i32) -> (i32, i32) {
    %c0_i32 = arith.constant 0 : i32
    %c0_i32_0 = arith.constant 0 : i32
    %c0_i32_1 = arith.constant 0 : i32
    return %c0_i32, %c0_i32_0 : i32, i32
  }
  func.func @transform_7(%arg0: i32) -> (i32, i32) {
    %c0_i32 = arith.constant 0 : i32
    %c0_i32_0 = arith.constant 0 : i32
    %c0_i32_1 = arith.constant 0 : i32
    return %c0_i32, %c0_i32_0 : i32, i32
  }
  func.func @transform_8(%arg0: i32) -> (i32, i32) {
    %c0_i32 = arith.constant 0 : i32
    %c0_i32_0 = arith.constant 0 : i32
    %c0_i32_1 = arith.constant 0 : i32
    return %c0_i32, %c0_i32_0 : i32, i32
  }
  func.func @transform_9(%arg0: i32) -> (i32, i32) {
    %c0_i32 = arith.constant 0 : i32
    %c0_i32_0 = arith.constant 0 : i32
    %c0_i32_1 = arith.constant 0 : i32
    return %c0_i32, %c0_i32_0 : i32, i32
  }
  func.func @transform_10(%arg0: i32) -> (i32, i32) {
    %c0_i32 = arith.constant 0 : i32
    %c0_i32_0 = arith.constant 0 : i32
    %c0_i32_1 = arith.constant 0 : i32
    return %c0_i32, %c0_i32_0 : i32, i32
  }
  func.func @transform_11(%arg0: i32) -> (i32, i32, i32) {
    %c0_i32 = arith.constant 0 : i32
    %c0_i32_0 = arith.constant 0 : i32
    %c0_i32_1 = arith.constant 0 : i32
    return %arg0, %c0_i32, %c0_i32_0 : i32, i32, i32
  }
}

</mosaic_0001>

<llo_original>
// kernel: effnet_forward.1
$region0: #{effnet_forward.1}
  #allocation0 [shape = 'u32[]', space=smem, size = 0x4, offset = 0x4, fixed_abs, tag = 'smem constant byte address 0x4 - core index']
  #allocation1 [shape = 'u32[144,128]{1,0:T(1,128)}', space=vmem, size = 0x12000, scoped, tag = 'internal scratch']
  #allocation2 [shape = 'f32[2,18,18,16]{3,2,1,0:T(8,128)}', space=vmem, size = 0x6c000, scoped, tag = 'scratch operand']
  %s0 = inlined_call_operand.vmem [shape: bf16[4,256,27], index: 0, kind: input, shape index: {}]
  %s1 = inlined_call_operand.vmem [shape: bf16[27,16], index: 1, kind: input, shape index: {}]
  %s2 = inlined_call_operand.vmem [shape: f32[1,16], index: 2, kind: input, shape index: {}]
  %s3 = inlined_call_operand.vmem [shape: f32[9,16], index: 3, kind: input, shape index: {}]
  %s4 = inlined_call_operand.vmem [shape: f32[1,16], index: 4, kind: input, shape index: {}]
  %s5 = inlined_call_operand.vmem [shape: bf16[16,32], index: 5, kind: input, shape index: {}]
  %s6 = inlined_call_operand.vmem [shape: f32[1,32], index: 6, kind: input, shape index: {}]
  %s7 = inlined_call_operand.vmem [shape: bf16[32,64], index: 7, kind: input, shape index: {}]
  %s8 = inlined_call_operand.vmem [shape: f32[1,64], index: 8, kind: input, shape index: {}]
  %s9 = inlined_call_operand.vmem [shape: f32[64,10], index: 9, kind: input, shape index: {}]
  %s10 = inlined_call_operand.vmem [shape: f32[1,10], index: 10, kind: input, shape index: {}]
  %s11 = inlined_call_operand.hbm [shape: f32[2,2,10], index: 11, kind: output, shape index: {}]
  %s12 = sld [smem:[#allocation0]]
  $region77: #{effnet_forward.1} parent=0
    _
  %s14 = ssub.s32 1, %s12
  %s15 = scalar_select 0, %s14, %s12
  $region1: #{effnet_forward.1} parent=0
    #allocation3 [shape = 'u8[2048]{0}', space=vmem, size = 0x800, scoped, tag = 'output window, operand 0']
    #allocation4 [shape = 's32[2]{0}', space=sflag, size = 0x8, scoped, tag = 'scoped memory for effnet_forward.1']
    %16 = vsyncpa [#allocation4], 0
    %s17 = scalar_lea.sflag [#allocation4], 1
    %18 = vsyncpa %s17, 0
    loop: start=0, step=1, limit=4
    $region2: #{effnet_forward.1} parent=1 // loop_pre_header
      _
    $region3: #{effnet_forward.1} parent=1 // loop_header
      %s20 = sphi 0, %s24
      %p21 = scmp.ge.s32.totalorder %s20, 4
      %s30 = sphi 0, %s32
      %s33 = sphi 0, %s30
      %s34 = sphi 0, %s33
      %s50 = sphi 0, %s34
      %s54 = sphi 0, %s54
      %s56 = sphi 0, %s54
      %s57 = sphi 0, %s56
      %s71 = sphi 0, %s57
      %s75 = sphi 0, %s75
      %s77 = sphi 0, %s75
      %s78 = sphi 0, %s77
      %s92 = sphi 0, %s78
      %s96 = sphi 0, %s96
      %s98 = sphi 0, %s96
      %s99 = sphi 0, %s98
      %s113 = sphi 0, %s99
      %s117 = sphi 0, %s117
      %s119 = sphi 0, %s117
      %s120 = sphi 0, %s119
      %s134 = sphi 0, %s120
      %s138 = sphi 0, %s138
      %s140 = sphi 0, %s138
      %s141 = sphi 0, %s140
      %s155 = sphi 0, %s141
      %s159 = sphi 0, %s159
      %s161 = sphi 0, %s159
      %s162 = sphi 0, %s161
      %s176 = sphi 0, %s162
      %s180 = sphi 0, %s180
      %s182 = sphi 0, %s180
      %s183 = sphi 0, %s182
      %s197 = sphi 0, %s183
      %s201 = sphi 0, %s201
      %s203 = sphi 0, %s201
      %s204 = sphi 0, %s203
      %s218 = sphi 0, %s204
      %s222 = sphi 0, %s222
      %s224 = sphi 0, %s222
      %s225 = sphi 0, %s224
      %s239 = sphi 0, %s225
      %s243 = sphi 0, %s243
      %s245 = sphi 0, %s243
      %s246 = sphi 0, %s245
      %s260 = sphi 0, %s246
      %s266 = sphi 0, %s268
      %s269 = sphi 0, %s266
      %s270 = sphi 0, %s269
      %s286 = sphi 0, %s270
    $region4: #{effnet_forward.1} parent=1 // loop_header_branch
      %23 = sbr.rel (%p21) target = $region8
    $region5: #{effnet_forward.1} parent=1 // loop_body
      %s25 = ssub.s32 %s20, 1
      %s26 = ssub.s32 %s20, 2
      %s27 = sadd.s32 %s20, 1
      %s28 = ssub.s32 %s20, %s27
      %p29 = scmp.eq.s32.totalorder %s28, 0
      %s31 = sadd.s32 %s30, 1
      %s32 = scalar_select %p29, %s30, %s31
      %p35 = pneg %p29
      %p36 = scmp.eq.s32.totalorder %s20, 1
      %p37 = por %p35, %p36
      %p38 = scmp.ne.s32.totalorder %s30, %s33
      %p39 = scmp.eq.s32.totalorder %s20, 0
      %p40 = por %p38, %p39
      %p41 = scmp.ne.s32.totalorder %s30, %s33
      %p42 = scmp.eq.s32.totalorder %s25, 1
      %p43 = por %p41, %p42
      %p44 = scmp.ne.s32.totalorder %s33, %s34
      %p45 = scmp.eq.s32.totalorder %s25, 0
      %p46 = por %p44, %p45
      %p47 = scmp.ne.s32.totalorder %s33, %s34
      %p48 = scmp.eq.s32.totalorder %s26, 1
      %p49 = por %p47, %p48
      %p51 = scmp.ne.s32.totalorder %s34, %s50
      %p52 = scmp.eq.s32.totalorder %s26, 0
      %p53 = por %p51, %p52
      %s55 = sadd.s32 %s54, 1
      %p58 = scmp.eq.s32.totalorder %s20, 1
      %p59 = scmp.ne.s32.totalorder %s54, %s56
      %p60 = scmp.eq.s32.totalorder %s20, 0
      %p61 = por %p59, %p60
      %p62 = scmp.ne.s32.totalorder %s54, %s56
      %p63 = scmp.eq.s32.totalorder %s25, 1
      %p64 = por %p62, %p63
      %p65 = scmp.ne.s32.totalorder %s56, %s57
      %p66 = scmp.eq.s32.totalorder %s25, 0
      %p67 = por %p65, %p66
      %p68 = scmp.ne.s32.totalorder %s56, %s57
      %p69 = scmp.eq.s32.totalorder %s26, 1
      %p70 = por %p68, %p69
      %p72 = scmp.ne.s32.totalorder %s57, %s71
      %p73 = scmp.eq.s32.totalorder %s26, 0
      %p74 = por %p72, %p73
      %s76 = sadd.s32 %s75, 1
      %p79 = scmp.eq.s32.totalorder %s20, 1
      %p80 = scmp.ne.s32.totalorder %s75, %s77
      %p81 = scmp.eq.s32.totalorder %s20, 0
      %p82 = por %p80, %p81
      %p83 = scmp.ne.s32.totalorder %s75, %s77
      %p84 = scmp.eq.s32.totalorder %s25, 1
      %p85 = por %p83, %p84
      %p86 = scmp.ne.s32.totalorder %s77, %s78
      %p87 = scmp.eq.s32.totalorder %s25, 0
      %p88 = por %p86, %p87
      %p89 = scmp.ne.s32.totalorder %s77, %s78
      %p90 = scmp.eq.s32.totalorder %s26, 1
      %p91 = por %p89, %p90
      %p93 = scmp.ne.s32.totalorder %s78, %s92
      %p94 = scmp.eq.s32.totalorder %s26, 0
      %p95 = por %p93, %p94
      %s97 = sadd.s32 %s96, 1
      %p100 = scmp.eq.s32.totalorder %s20, 1
      %p101 = scmp.ne.s32.totalorder %s96, %s98
      %p102 = scmp.eq.s32.totalorder %s20, 0
      %p103 = por %p101, %p102
      %p104 = scmp.ne.s32.totalorder %s96, %s98
      %p105 = scmp.eq.s32.totalorder %s25, 1
      %p106 = por %p104, %p105
      %p107 = scmp.ne.s32.totalorder %s98, %s99
      %p108 = scmp.eq.s32.totalorder %s25, 0
      %p109 = por %p107, %p108
      %p110 = scmp.ne.s32.totalorder %s98, %s99
      %p111 = scmp.eq.s32.totalorder %s26, 1
      %p112 = por %p110, %p111
      %p114 = scmp.ne.s32.totalorder %s99, %s113
      %p115 = scmp.eq.s32.totalorder %s26, 0
      %p116 = por %p114, %p115
      %s118 = sadd.s32 %s117, 1
      %p121 = scmp.eq.s32.totalorder %s20, 1
      %p122 = scmp.ne.s32.totalorder %s117, %s119
      %p123 = scmp.eq.s32.totalorder %s20, 0
      %p124 = por %p122, %p123
      %p125 = scmp.ne.s32.totalorder %s117, %s119
      %p126 = scmp.eq.s32.totalorder %s25, 1
      %p127 = por %p125, %p126
      %p128 = scmp.ne.s32.totalorder %s119, %s120
      %p129 = scmp.eq.s32.totalorder %s25, 0
      %p130 = por %p128, %p129
      %p131 = scmp.ne.s32.totalorder %s119, %s120
      %p132 = scmp.eq.s32.totalorder %s26, 1
      %p133 = por %p131, %p132
      %p135 = scmp.ne.s32.totalorder %s120, %s134
      %p136 = scmp.eq.s32.totalorder %s26, 0
      %p137 = por %p135, %p136
      %s139 = sadd.s32 %s138, 1
      %p142 = scmp.eq.s32.totalorder %s20, 1
      %p143 = scmp.ne.s32.totalorder %s138, %s140
      %p144 = scmp.eq.s32.totalorder %s20, 0
      %p145 = por %p143, %p144
      %p146 = scmp.ne.s32.totalorder %s138, %s140
      %p147 = scmp.eq.s32.totalorder %s25, 1
      %p148 = por %p146, %p147
      %p149 = scmp.ne.s32.totalorder %s140, %s141
      %p150 = scmp.eq.s32.totalorder %s25, 0
      %p151 = por %p149, %p150
      %p152 = scmp.ne.s32.totalorder %s140, %s141
      %p153 = scmp.eq.s32.totalorder %s26, 1
      %p154 = por %p152, %p153
      %p156 = scmp.ne.s32.totalorder %s141, %s155
      %p157 = scmp.eq.s32.totalorder %s26, 0
      %p158 = por %p156, %p157
      %s160 = sadd.s32 %s159, 1
      %p163 = scmp.eq.s32.totalorder %s20, 1
      %p164 = scmp.ne.s32.totalorder %s159, %s161
      %p165 = scmp.eq.s32.totalorder %s20, 0
      %p166 = por %p164, %p165
      %p167 = scmp.ne.s32.totalorder %s159, %s161
      %p168 = scmp.eq.s32.totalorder %s25, 1
      %p169 = por %p167, %p168
      %p170 = scmp.ne.s32.totalorder %s161, %s162
      %p171 = scmp.eq.s32.totalorder %s25, 0
      %p172 = por %p170, %p171
      %p173 = scmp.ne.s32.totalorder %s161, %s162
      %p174 = scmp.eq.s32.totalorder %s26, 1
      %p175 = por %p173, %p174
      %p177 = scmp.ne.s32.totalorder %s162, %s176
      %p178 = scmp.eq.s32.totalorder %s26, 0
      %p179 = por %p177, %p178
      %s181 = sadd.s32 %s180, 1
      %p184 = scmp.eq.s32.totalorder %s20, 1
      %p185 = scmp.ne.s32.totalorder %s180, %s182
      %p186 = scmp.eq.s32.totalorder %s20, 0
      %p187 = por %p185, %p186
      %p188 = scmp.ne.s32.totalorder %s180, %s182
      %p189 = scmp.eq.s32.totalorder %s25, 1
      %p190 = por %p188, %p189
      %p191 = scmp.ne.s32.totalorder %s182, %s183
      %p192 = scmp.eq.s32.totalorder %s25, 0
      %p193 = por %p191, %p192
      %p194 = scmp.ne.s32.totalorder %s182, %s183
      %p195 = scmp.eq.s32.totalorder %s26, 1
      %p196 = por %p194, %p195
      %p198 = scmp.ne.s32.totalorder %s183, %s197
      %p199 = scmp.eq.s32.totalorder %s26, 0
      %p200 = por %p198, %p199
      %s202 = sadd.s32 %s201, 1
      %p205 = scmp.eq.s32.totalorder %s20, 1
      %p206 = scmp.ne.s32.totalorder %s201, %s203
      %p207 = scmp.eq.s32.totalorder %s20, 0
      %p208 = por %p206, %p207
      %p209 = scmp.ne.s32.totalorder %s201, %s203
      %p210 = scmp.eq.s32.totalorder %s25, 1
      %p211 = por %p209, %p210
      %p212 = scmp.ne.s32.totalorder %s203, %s204
      %p213 = scmp.eq.s32.totalorder %s25, 0
      %p214 = por %p212, %p213
      %p215 = scmp.ne.s32.totalorder %s203, %s204
      %p216 = scmp.eq.s32.totalorder %s26, 1
      %p217 = por %p215, %p216
      %p219 = scmp.ne.s32.totalorder %s204, %s218
      %p220 = scmp.eq.s32.totalorder %s26, 0
      %p221 = por %p219, %p220
      %s223 = sadd.s32 %s222, 1
      %p226 = scmp.eq.s32.totalorder %s20, 1
      %p227 = scmp.ne.s32.totalorder %s222, %s224
      %p228 = scmp.eq.s32.totalorder %s20, 0
      %p229 = por %p227, %p228
      %p230 = scmp.ne.s32.totalorder %s222, %s224
      %p231 = scmp.eq.s32.totalorder %s25, 1
      %p232 = por %p230, %p231
      %p233 = scmp.ne.s32.totalorder %s224, %s225
      %p234 = scmp.eq.s32.totalorder %s25, 0
      %p235 = por %p233, %p234
      %p236 = scmp.ne.s32.totalorder %s224, %s225
      %p237 = scmp.eq.s32.totalorder %s26, 1
      %p238 = por %p236, %p237
      %p240 = scmp.ne.s32.totalorder %s225, %s239
      %p241 = scmp.eq.s32.totalorder %s26, 0
      %p242 = por %p240, %p241
      %s244 = sadd.s32 %s243, 1
      %p247 = scmp.eq.s32.totalorder %s20, 1
      %p248 = scmp.ne.s32.totalorder %s243, %s245
      %p249 = scmp.eq.s32.totalorder %s20, 0
      %p250 = por %p248, %p249
      %p251 = scmp.ne.s32.totalorder %s243, %s245
      %p252 = scmp.eq.s32.totalorder %s25, 1
      %p253 = por %p251, %p252
      %p254 = scmp.ne.s32.totalorder %s245, %s246
      %p255 = scmp.eq.s32.totalorder %s25, 0
      %p256 = por %p254, %p255
      %p257 = scmp.ne.s32.totalorder %s245, %s246
      %p258 = scmp.eq.s32.totalorder %s26, 1
      %p259 = por %p257, %p258
      %p261 = scmp.ne.s32.totalorder %s246, %s260
      %p262 = scmp.eq.s32.totalorder %s26, 0
      %p263 = por %p261, %p262
      %s264 = ssub.s32 %s20, %s27
      %p265 = scmp.eq.s32.totalorder %s264, 0
      %s267 = sadd.s32 %s266, 1
      %s268 = scalar_select %p265, %s266, %s267
      %p271 = pneg %p265
      %p272 = scmp.eq.s32.totalorder %s20, 1
      %p273 = por %p271, %p272
      %p274 = scmp.ne.s32.totalorder %s266, %s269
      %p275 = scmp.eq.s32.totalorder %s20, 0
      %p276 = por %p274, %p275
      %p277 = scmp.ne.s32.totalorder %s266, %s269
      %p278 = scmp.eq.s32.totalorder %s25, 1
      %p279 = por %p277, %p278
      %p280 = scmp.ne.s32.totalorder %s269, %s270
      %p281 = scmp.eq.s32.totalorder %s25, 0
      %p282 = por %p280, %p281
      %p283 = scmp.ne.s32.totalorder %s269, %s270
      %p284 = scmp.eq.s32.totalorder %s26, 1
      %p285 = por %p283, %p284
      %p287 = scmp.ne.s32.totalorder %s270, %s286
      %p288 = scmp.eq.s32.totalorder %s26, 0
      %p289 = por %p287, %p288
      %p290 = scmp.le.s32.totalorder 1, %s20
      %p291 = scmp.lt.s32.totalorder %s20, 3
      %p292 = pnand %p290, %p291
      %p293 = pneg %p292
      // Predicated region
      $region9: #{effnet_forward.1} parent=5 // pred_check
        _
      $region10: #{effnet_forward.1} parent=5 // pred_check_branch
        %295 = sbr.rel (%p292) target = $region12
      $region11: #{effnet_forward.1} parent=5 // pred_region
        %s296 = ssub.s32 %s20, 1
        // Predicated region
        $region13: #{effnet_forward.1} parent=11 // pred_check
          %p297 = pneg %p67
        $region14: #{effnet_forward.1} parent=11 // pred_check_branch
          %299 = sbr.rel (%p297) target = $region16
        $region15: #{effnet_forward.1} parent=11 // pred_region
          _
        $region16: #{effnet_forward.1} parent=11 // pred_fallthru
          _
        // Predicated region
        $region17: #{effnet_forward.1} parent=11 // pred_check
          %p300 = pneg %p88
        $region18: #{effnet_forward.1} parent=11 // pred_check_branch
          %302 = sbr.rel (%p300) target = $region20
        $region19: #{effnet_forward.1} parent=11 // pred_region
          _
        $region20: #{effnet_forward.1} parent=11 // pred_fallthru
          _
        // Predicated region
        $region21: #{effnet_forward.1} parent=11 // pred_check
          %p303 = pneg %p109
        $region22: #{effnet_forward.1} parent=11 // pred_check_branch
          %305 = sbr.rel (%p303) target = $region24
        $region23: #{effnet_forward.1} parent=11 // pred_region
          _
        $region24: #{effnet_forward.1} parent=11 // pred_fallthru
          _
        // Predicated region
        $region25: #{effnet_forward.1} parent=11 // pred_check
          %p306 = pneg %p130
        $region26: #{effnet_forward.1} parent=11 // pred_check_branch
          %308 = sbr.rel (%p306) target = $region28
        $region27: #{effnet_forward.1} parent=11 // pred_region
          _
        $region28: #{effnet_forward.1} parent=11 // pred_fallthru
          _
        // Predicated region
        $region29: #{effnet_forward.1} parent=11 // pred_check
          %p309 = pneg %p151
        $region30: #{effnet_forward.1} parent=11 // pred_check_branch
          %311 = sbr.rel (%p309) target = $region32
        $region31: #{effnet_forward.1} parent=11 // pred_region
          _
        $region32: #{effnet_forward.1} parent=11 // pred_fallthru
          _
        // Predicated region
        $region33: #{effnet_forward.1} parent=11 // pred_check
          %p312 = pneg %p172
        $region34: #{effnet_forward.1} parent=11 // pred_check_branch
          %314 = sbr.rel (%p312) target = $region36
        $region35: #{effnet_forward.1} parent=11 // pred_region
          _
        $region36: #{effnet_forward.1} parent=11 // pred_fallthru
          _
        // Predicated region
        $region37: #{effnet_forward.1} parent=11 // pred_check
          %p315 = pneg %p193
        $region38: #{effnet_forward.1} parent=11 // pred_check_branch
          %317 = sbr.rel (%p315) target = $region40
        $region39: #{effnet_forward.1} parent=11 // pred_region
          _
        $region40: #{effnet_forward.1} parent=11 // pred_fallthru
          _
        // Predicated region
        $region41: #{effnet_forward.1} parent=11 // pred_check
          %p318 = pneg %p214
        $region42: #{effnet_forward.1} parent=11 // pred_check_branch
          %320 = sbr.rel (%p318) target = $region44
        $region43: #{effnet_forward.1} parent=11 // pred_region
          _
        $region44: #{effnet_forward.1} parent=11 // pred_fallthru
          _
        // Predicated region
        $region45: #{effnet_forward.1} parent=11 // pred_check
          %p321 = pneg %p235
        $region46: #{effnet_forward.1} parent=11 // pred_check_branch
          %323 = sbr.rel (%p321) target = $region48
        $region47: #{effnet_forward.1} parent=11 // pred_region
          _
        $region48: #{effnet_forward.1} parent=11 // pred_fallthru
          _
        // Predicated region
        $region49: #{effnet_forward.1} parent=11 // pred_check
          %p324 = pneg %p256
        $region50: #{effnet_forward.1} parent=11 // pred_check_branch
          %326 = sbr.rel (%p324) target = $region52
        $region51: #{effnet_forward.1} parent=11 // pred_region
          _
        $region52: #{effnet_forward.1} parent=11 // pred_fallthru
          _
      $region12: #{effnet_forward.1} parent=5 // pred_fallthru
        _
      %p327 = scmp.lt.s32.totalorder %s20, 2
      // Predicated region
      $region53: #{effnet_forward.1} parent=5 // pred_check
        %p328 = pneg %p327
      $region54: #{effnet_forward.1} parent=5 // pred_check_branch
        %330 = sbr.rel (%p328) target = $region56
      $region55: #{effnet_forward.1} parent=5 // pred_region
        // Predicated region
        $region57: #{effnet_forward.1} parent=55 // pred_check
          %p331 = pneg %p40
        $region58: #{effnet_forward.1} parent=55 // pred_check_branch
          %333 = sbr.rel (%p331) target = $region60
        $region59: #{effnet_forward.1} parent=55 // pred_region
          %s334 = smul.u32 2, %s20
          %p335 = scmp.lt.s32.totalorder %s334, 3
          %s336 = scalar_select %p335, %s334, 3
          %s337 = smul.addr %s336, 32
          %s338 = smul.addr %s337, 4
          %s339 = scalar_lea.vmem %s0, %s338
          %s340 = smul.u32 2, %s20
        $region60: #{effnet_forward.1} parent=55 // pred_fallthru
          _
      $region56: #{effnet_forward.1} parent=5 // pred_fallthru
        _
      %p341 = scmp.le.s32.totalorder 1, %s20
      %p342 = scmp.lt.s32.totalorder %s20, 3
      %p343 = pnand %p341, %p342
      %p344 = pneg %p343
      // Predicated region
      $region61: #{effnet_forward.1} parent=5 // pred_check
        _
      $region62: #{effnet_forward.1} parent=5 // pred_check_branch
        %346 = sbr.rel (%p343) target = $region64
      $region63: #{effnet_forward.1} parent=5 // pred_region
        %s347 = ssub.s32 %s20, 1
        %s348 = smul.u32 2, %s25
        %p349 = scmp.lt.s32.totalorder %s348, 3
        %s350 = scalar_select %p349, %s348, 3
        %s351 = smul.addr %s350, 32
        %s352 = smul.addr %s351, 4
        %s353 = scalar_lea.vmem %s0, %s352
        %p354 = pneg %p46
        %p355 = pneg %p43
        %p356 = pneg %p67
        %p357 = pneg %p64
        %p358 = pneg %p88
        %p359 = pneg %p85
        %p360 = pneg %p109
        %p361 = pneg %p106
        %p362 = pneg %p130
        %p363 = pneg %p127
        %p364 = pneg %p151
        %p365 = pneg %p148
        %p366 = pneg %p172
        %p367 = pneg %p169
        %p368 = pneg %p193
        %p369 = pneg %p190
        %p370 = pneg %p214
        %p371 = pneg %p211
        %p372 = pneg %p235
        %p373 = pneg %p232
        %p374 = pneg %p256
        %p375 = pneg %p253
        %p376 = pneg %p282
        %p377 = pneg %p279
        %s378 = sand.u32 %s269, 1
        %s379 = scalar_lea.sflag [#allocation4], %s378
        %s380 = sand.u32 %s269, 1
        %s381 = smul.addr %s380, 2
        %s382 = scalar_lea.vmem [#allocation3], %s381
        %s383 = smul.u32 2, %s25
        %p384 = scmp.lt.s32.totalorder %s383, 3
        %s385 = scalar_select %p384, %s383, 3
        %s386 = smul.addr %s385, 32
        %s387 = smul.addr %s386, 4
        %s388 = scalar_lea.vmem %s0, %s387
        %s389 = smul.u32 2, %s25
        %v391 = vld [vmem:[%s388] sm:$0xf]
        %v392 = vld [vmem:[%s388 + $0x4] sm:$0xf]
        %v393 = vld [vmem:[%s388 + $0x8] sm:$0xf]
        %v394 = vld [vmem:[%s388 + $0xc] sm:$0xf]
        %v395 = vld [vmem:[%s388 + $0x10] sm:$0xf]
        %v396 = vld [vmem:[%s388 + $0x14] sm:$0xf]
        %v397 = vld [vmem:[%s388 + $0x18] sm:$0xf]
        %v398 = vld [vmem:[%s388 + $0x1c] sm:$0xf]
        %v399 = vld [vmem:[%s388 + $0x20] sm:$0xf]
        %v400 = vld [vmem:[%s388 + $0x24] sm:$0xf]
        %v401 = vld [vmem:[%s388 + $0x28] sm:$0xf]
        %v402 = vld [vmem:[%s388 + $0x2c] sm:$0xf]
        %v403 = vld [vmem:[%s388 + $0x30] sm:$0xf]
        %v404 = vld [vmem:[%s388 + $0x34] sm:$0xf]
        %v405 = vld [vmem:[%s388 + $0x38] sm:$0xf]
        %v406 = vld [vmem:[%s388 + $0x3c] sm:$0xf]
        %v407 = vld [vmem:[%s388 + $0x40] sm:$0xf]
        %v408 = vld [vmem:[%s388 + $0x44] sm:$0xf]
        %v409 = vld [vmem:[%s388 + $0x48] sm:$0xf]
        %v410 = vld [vmem:[%s388 + $0x4c] sm:$0xf]
        %v411 = vld [vmem:[%s388 + $0x50] sm:$0xf]
        %v412 = vld [vmem:[%s388 + $0x54] sm:$0xf]
        %v413 = vld [vmem:[%s388 + $0x58] sm:$0xf]
        %v414 = vld [vmem:[%s388 + $0x5c] sm:$0xf]
        %v415 = vld [vmem:[%s388 + $0x60] sm:$0xf]
        %v416 = vld [vmem:[%s388 + $0x64] sm:$0xf]
        %v417 = vld [vmem:[%s388 + $0x68] sm:$0xf]
        %v418 = vld [vmem:[%s388 + $0x6c] sm:$0xf]
        %v419 = vld [vmem:[%s388 + $0x70] sm:$0xf]
        %v420 = vld [vmem:[%s388 + $0x74] sm:$0xf]
        %v421 = vld [vmem:[%s388 + $0x78] sm:$0xf]
        %v422 = vld [vmem:[%s388 + $0x7c] sm:$0xf]
        %v423 = vld [vmem:[%s388 + $0x80] sm:$0xf]
        %v424 = vld [vmem:[%s388 + $0x84] sm:$0xf]
        %v425 = vld [vmem:[%s388 + $0x88] sm:$0xf]
        %v426 = vld [vmem:[%s388 + $0x8c] sm:$0xf]
        %v427 = vld [vmem:[%s388 + $0x90] sm:$0xf]
        %v428 = vld [vmem:[%s388 + $0x94] sm:$0xf]
        %v429 = vld [vmem:[%s388 + $0x98] sm:$0xf]
        %v430 = vld [vmem:[%s388 + $0x9c] sm:$0xf]
        %v431 = vld [vmem:[%s388 + $0xa0] sm:$0xf]
        %v432 = vld [vmem:[%s388 + $0xa4] sm:$0xf]
        %v433 = vld [vmem:[%s388 + $0xa8] sm:$0xf]
        %v434 = vld [vmem:[%s388 + $0xac] sm:$0xf]
        %v435 = vld [vmem:[%s388 + $0xb0] sm:$0xf]
        %v436 = vld [vmem:[%s388 + $0xb4] sm:$0xf]
        %v437 = vld [vmem:[%s388 + $0xb8] sm:$0xf]
        %v438 = vld [vmem:[%s388 + $0xbc] sm:$0xf]
        %v439 = vld [vmem:[%s388 + $0xc0] sm:$0xf]
        %v440 = vld [vmem:[%s388 + $0xc4] sm:$0xf]
        %v441 = vld [vmem:[%s388 + $0xc8] sm:$0xf]
        %v442 = vld [vmem:[%s388 + $0xcc] sm:$0xf]
        %v443 = vld [vmem:[%s388 + $0xd0] sm:$0xf]
        %v444 = vld [vmem:[%s388 + $0xd4] sm:$0xf]
        %v445 = vld [vmem:[%s388 + $0xd8] sm:$0xf]
        %v446 = vld [vmem:[%s388 + $0xdc] sm:$0xf]
        %v447 = vld [vmem:[%s388 + $0xe0] sm:$0xf]
        %v448 = vld [vmem:[%s388 + $0xe4] sm:$0xf]
        %v449 = vld [vmem:[%s388 + $0xe8] sm:$0xf]
        %v450 = vld [vmem:[%s388 + $0xec] sm:$0xf]
        %v451 = vld [vmem:[%s388 + $0xf0] sm:$0xf]
        %v452 = vld [vmem:[%s388 + $0xf4] sm:$0xf]
        %v453 = vld [vmem:[%s388 + $0xf8] sm:$0xf]
        %v454 = vld [vmem:[%s388 + $0xfc] sm:$0xf]
        %v455 = vld [vmem:[%s1] sm:$0xf]
        %v456 = vld [vmem:[%s1 + $0x4] sm:$0xf]
        %v457 = vld [vmem:[%s1 + $0x8] sm:$0xf]
        %v458 = vld [vmem:[%s1 + $0xc] sm:$0x3]
        %v459 = vld [vmem:[%s2] sm:$0x1]
        %v461 = vlaneseq
        %v462 = vshrl.u32 %v461, 7
        %v463 = vsub.s32 0, %v462
        %v464 = vrot.slane %v459, %v463
        %v530 = vunpack.c.l.b16 %v391
        %v531 = vunpack.c.l.b16 %v392
        %v532 = vunpack.c.l.b16 %v393
        %v533 = vunpack.c.l.b16 %v394
        %v534 = vunpack.c.l.b16 %v395
        %v535 = vunpack.c.l.b16 %v396
        %v536 = vunpack.c.l.b16 %v397
        %v537 = vunpack.c.l.b16 %v398
        %v538 = vunpack.c.l.b16 %v399
        %v539 = vunpack.c.l.b16 %v400
        %v540 = vunpack.c.l.b16 %v401
        %v541 = vunpack.c.l.b16 %v402
        %v542 = vunpack.c.l.b16 %v403
        %v543 = vunpack.c.l.b16 %v404
        %v544 = vunpack.c.l.b16 %v405
        %v545 = vunpack.c.l.b16 %v406
        %v546 = vunpack.c.l.b16 %v407
        %v547 = vunpack.c.l.b16 %v408
        %v548 = vunpack.c.l.b16 %v409
        %v549 = vunpack.c.l.b16 %v410
        %v550 = vunpack.c.l.b16 %v411
        %v551 = vunpack.c.l.b16 %v412
        %v552 = vunpack.c.l.b16 %v413
        %v553 = vunpack.c.l.b16 %v414
        %v554 = vunpack.c.l.b16 %v415
        %v555 = vunpack.c.l.b16 %v416
        %v556 = vunpack.c.l.b16 %v417
        %v557 = vunpack.c.l.b16 %v418
        %v558 = vunpack.c.l.b16 %v419
        %v559 = vunpack.c.l.b16 %v420
        %v560 = vunpack.c.l.b16 %v421
        %v561 = vunpack.c.l.b16 %v422
        %v562 = vunpack.c.l.b16 %v423
        %v563 = vunpack.c.l.b16 %v424
        %v564 = vunpack.c.l.b16 %v425
        %v565 = vunpack.c.l.b16 %v426
        %v566 = vunpack.c.l.b16 %v427
        %v567 = vunpack.c.l.b16 %v428
        %v568 = vunpack.c.l.b16 %v429
        %v569 = vunpack.c.l.b16 %v430
        %v570 = vunpack.c.l.b16 %v431
        %v571 = vunpack.c.l.b16 %v432
        %v572 = vunpack.c.l.b16 %v433
        %v573 = vunpack.c.l.b16 %v434
        %v574 = vunpack.c.l.b16 %v435
        %v575 = vunpack.c.l.b16 %v436
        %v576 = vunpack.c.l.b16 %v437
        %v577 = vunpack.c.l.b16 %v438
        %v578 = vunpack.c.l.b16 %v439
        %v579 = vunpack.c.l.b16 %v440
        %v580 = vunpack.c.l.b16 %v441
        %v581 = vunpack.c.l.b16 %v442
        %v582 = vunpack.c.l.b16 %v443
        %v583 = vunpack.c.l.b16 %v444
        %v584 = vunpack.c.l.b16 %v445
        %v585 = vunpack.c.l.b16 %v446
        %v586 = vunpack.c.l.b16 %v447
        %v587 = vunpack.c.l.b16 %v448
        %v588 = vunpack.c.l.b16 %v449
        %v589 = vunpack.c.l.b16 %v450
        %v590 = vunpack.c.l.b16 %v451
        %v591 = vunpack.c.l.b16 %v452
        %v592 = vunpack.c.l.b16 %v453
        %v593 = vunpack.c.l.b16 %v454
        %v594 = vpack.c.b16 %v531, %v530
        %v595 = vpack.c.b16 %v533, %v532
        %v596 = vpack.c.b16 %v535, %v534
        %v597 = vpack.c.b16 %v537, %v536
        %v598 = vpack.c.b16 %v539, %v538
        %v599 = vpack.c.b16 %v541, %v540
        %v600 = vpack.c.b16 %v543, %v542
        %v601 = vpack.c.b16 %v545, %v544
        %v602 = vpack.c.b16 %v547, %v546
        %v603 = vpack.c.b16 %v549, %v548
        %v604 = vpack.c.b16 %v551, %v550
        %v605 = vpack.c.b16 %v553, %v552
        %v606 = vpack.c.b16 %v555, %v554
        %v607 = vpack.c.b16 %v557, %v556
        %v608 = vpack.c.b16 %v559, %v558
        %v609 = vpack.c.b16 %v561, %v560
        %v610 = vpack.c.b16 %v563, %v562
        %v611 = vpack.c.b16 %v565, %v564
        %v612 = vpack.c.b16 %v567, %v566
        %v613 = vpack.c.b16 %v569, %v568
        %v614 = vpack.c.b16 %v571, %v570
        %v615 = vpack.c.b16 %v573, %v572
        %v616 = vpack.c.b16 %v575, %v574
        %v617 = vpack.c.b16 %v577, %v576
        %v618 = vpack.c.b16 %v579, %v578
        %v619 = vpack.c.b16 %v581, %v580
        %v620 = vpack.c.b16 %v583, %v582
        %v621 = vpack.c.b16 %v585, %v584
        %v622 = vpack.c.b16 %v587, %v586
        %v623 = vpack.c.b16 %v589, %v588
        %v624 = vpack.c.b16 %v591, %v590
        %v625 = vpack.c.b16 %v593, %v592
        %v630 = vunpack.c.l.b16 %v455
        %v631 = vunpack.c.l.b16 %v456
        %v632 = vunpack.c.l.b16 %v457
        %v633 = vunpack.c.l.b16 %v458
        %v634 = vpack.c.b16 %v631, %v630
        %v635 = vpack.c.b16 %v633, %v632
        %vm637 = vcmask 220160
        %v639 = vsel %vm637, %v594, 0
        %v642 = vsel %vm637, %v595, 0
        %v645 = vsel %vm637, %v596, 0
        %v648 = vsel %vm637, %v597, 0
        %v651 = vsel %vm637, %v598, 0
        %v654 = vsel %vm637, %v599, 0
        %v657 = vsel %vm637, %v600, 0
        %v660 = vsel %vm637, %v601, 0
        %v663 = vsel %vm637, %v602, 0
        %v666 = vsel %vm637, %v603, 0
        %v669 = vsel %vm637, %v604, 0
        %v672 = vsel %vm637, %v605, 0
        %v675 = vsel %vm637, %v606, 0
        %v678 = vsel %vm637, %v607, 0
        %v681 = vsel %vm637, %v608, 0
        %v684 = vsel %vm637, %v609, 0
        %v687 = vsel %vm637, %v610, 0
        %v690 = vsel %vm637, %v611, 0
        %v693 = vsel %vm637, %v612, 0
        %v696 = vsel %vm637, %v613, 0
        %v699 = vsel %vm637, %v614, 0
        %v702 = vsel %vm637, %v615, 0
        %v705 = vsel %vm637, %v616, 0
        %v708 = vsel %vm637, %v617, 0
        %v711 = vsel %vm637, %v618, 0
        %v714 = vsel %vm637, %v619, 0
        %v717 = vsel %vm637, %v620, 0
        %v720 = vsel %vm637, %v621, 0
        %v723 = vsel %vm637, %v622, 0
        %v726 = vsel %vm637, %v623, 0
        %v729 = vsel %vm637, %v624, 0
        %v732 = vsel %vm637, %v625, 0
        %vm734 = vcmask 1044480
        %vm735 = vcmask 1045504
        %v736 = vsel %vm734, 4294967295, 65535
        %v737 = vsel %vm735, %v736, 0
        %v739 = vand.u32 %v635, %v737
        %741 = vmatprep.subr.bf16.mxu0 0
        %742 = vmatpush1.bf16.msra.mxu0 %v634
        %743 = vmatprep.subr.bf16.mxu0 0
        %744 = vmatpush1.bf16.msra.mxu0 %v739
        %745 = vmatprep.subr.bf16.mxu0 0
        %746 = vmatpush1.bf16.msra.mxu0 0
        %747 = vmatprep.subr.bf16.mxu0 0
        %748 = vmatpush1.bf16.msra.mxu0 0
        %749 = vmatprep.subr.bf16.mxu0 0
        %750 = vmatpush1.bf16.msra.mxu0 0
        %751 = vmatprep.subr.bf16.mxu0 0
        %752 = vmatpush1.bf16.msra.mxu0 0
        %753 = vmatprep.subr.bf16.mxu0 0
        %754 = vmatpush1.bf16.msra.mxu0 0
        %755 = vmatprep.subr.bf16.mxu0 0
        %756 = vmatpush1.bf16.msra.mxu0 0
        %757 = vmatprep.subr.bf16.mxu0 0
        %758 = vmatpush1.bf16.msra.mxu0 0
        %759 = vmatprep.subr.bf16.mxu0 0
        %760 = vmatpush1.bf16.msra.mxu0 0
        %761 = vmatprep.subr.bf16.mxu0 0
        %762 = vmatpush1.bf16.msra.mxu0 0
        %763 = vmatprep.subr.bf16.mxu0 0
        %764 = vmatpush1.bf16.msra.mxu0 0
        %765 = vmatprep.subr.bf16.mxu0 0
        %766 = vmatpush1.bf16.msra.mxu0 0
        %767 = vmatprep.subr.bf16.mxu0 0
        %768 = vmatpush1.bf16.msra.mxu0 0
        %769 = vmatprep.subr.bf16.mxu0 0
        %770 = vmatpush1.bf16.msra.mxu0 0
        %771 = vmatprep.subr.bf16.mxu0 0
        %772 = vmatpush1.bf16.msra.mxu0 0
        %773 = vmatprep.mubr.bf16.mxu0 0
        %774 = vmatmul.mubr.bf16.gmra.mrb[0].mxu0 %v639
        %v775 = vpop.f32.mrb[0].mxu0
        %v776 = vadd.f32 %v464, %v775
        %v777 = vpop.f32.mrb[0].mxu0
        %v778 = vpop.f32.mrb[0].mxu0
        %v779 = vadd.f32 %v464, %v778
        %v780 = vpop.f32.mrb[0].mxu0
        %781 = vmatprep.mubr.bf16.mxu0 0
        %782 = vmatmul.mubr.bf16.gmra.mrb[0].mxu0 %v642
        %v783 = vpop.f32.mrb[0].mxu0
        %v784 = vadd.f32 %v464, %v783
        %v785 = vpop.f32.mrb[0].mxu0
        %v786 = vpop.f32.mrb[0].mxu0
        %v787 = vadd.f32 %v464, %v786
        %v788 = vpop.f32.mrb[0].mxu0
        %789 = vmatprep.mubr.bf16.mxu0 0
        %790 = vmatmul.mubr.bf16.gmra.mrb[0].mxu0 %v645
        %v791 = vpop.f32.mrb[0].mxu0
        %v792 = vadd.f32 %v464, %v791
        %v793 = vpop.f32.mrb[0].mxu0
        %v794 = vpop.f32.mrb[0].mxu0
        %v795 = vadd.f32 %v464, %v794
        %v796 = vpop.f32.mrb[0].mxu0
        %797 = vmatprep.mubr.bf16.mxu0 0
        %798 = vmatmul.mubr.bf16.gmra.mrb[0].mxu0 %v648
        %v799 = vpop.f32.mrb[0].mxu0
        %v800 = vadd.f32 %v464, %v799
        %v801 = vpop.f32.mrb[0].mxu0
        %v802 = vpop.f32.mrb[0].mxu0
        %v803 = vadd.f32 %v464, %v802
        %v804 = vpop.f32.mrb[0].mxu0
        %805 = vmatprep.mubr.bf16.mxu0 0
        %806 = vmatmul.mubr.bf16.gmra.mrb[0].mxu0 %v651
        %v807 = vpop.f32.mrb[0].mxu0
        %v808 = vadd.f32 %v464, %v807
        %v809 = vpop.f32.mrb[0].mxu0
        %v810 = vpop.f32.mrb[0].mxu0
        %v811 = vadd.f32 %v464, %v810
        %v812 = vpop.f32.mrb[0].mxu0
        %813 = vmatprep.mubr.bf16.mxu0 0
        %814 = vmatmul.mubr.bf16.gmra.mrb[0].mxu0 %v654
        %v815 = vpop.f32.mrb[0].mxu0
        %v816 = vadd.f32 %v464, %v815
        %v817 = vpop.f32.mrb[0].mxu0
        %v818 = vpop.f32.mrb[0].mxu0
        %v819 = vadd.f32 %v464, %v818
        %v820 = vpop.f32.mrb[0].mxu0
        %821 = vmatprep.mubr.bf16.mxu0 0
        %822 = vmatmul.mubr.bf16.gmra.mrb[0].mxu0 %v657
        %v823 = vpop.f32.mrb[0].mxu0
        %v824 = vadd.f32 %v464, %v823
        %v825 = vpop.f32.mrb[0].mxu0
        %v826 = vpop.f32.mrb[0].mxu0
        %v827 = vadd.f32 %v464, %v826
        %v828 = vpop.f32.mrb[0].mxu0
        %829 = vmatprep.mubr.bf16.mxu0 0
        %830 = vmatmul.mubr.bf16.gmra.mrb[0].mxu0 %v660
        %v831 = vpop.f32.mrb[0].mxu0
        %v832 = vadd.f32 %v464, %v831
        %v833 = vpop.f32.mrb[0].mxu0
        %v834 = vpop.f32.mrb[0].mxu0
        %v835 = vadd.f32 %v464, %v834
        %v836 = vpop.f32.mrb[0].mxu0
        %837 = vmatprep.mubr.bf16.mxu0 0
        %838 = vmatmul.mubr.bf16.gmra.mrb[0].mxu0 %v663
        %v839 = vpop.f32.mrb[0].mxu0
        %v840 = vadd.f32 %v464, %v839
        %v841 = vpop.f32.mrb[0].mxu0
        %v842 = vpop.f32.mrb[0].mxu0
        %v843 = vadd.f32 %v464, %v842
        %v844 = vpop.f32.mrb[0].mxu0
        %845 = vmatprep.mubr.bf16.mxu0 0
        %846 = vmatmul.mubr.bf16.gmra.mrb[0].mxu0 %v666
        %v847 = vpop.f32.mrb[0].mxu0
        %v848 = vadd.f32 %v464, %v847
        %v849 = vpop.f32.mrb[0].mxu0
        %v850 = vpop.f32.mrb[0].mxu0
        %v851 = vadd.f32 %v464, %v850
        %v852 = vpop.f32.mrb[0].mxu0
        %853 = vmatprep.mubr.bf16.mxu0 0
        %854 = vmatmul.mubr.bf16.gmra.mrb[0].mxu0 %v669
        %v855 = vpop.f32.mrb[0].mxu0
        %v856 = vadd.f32 %v464, %v855
        %v857 = vpop.f32.mrb[0].mxu0
        %v858 = vpop.f32.mrb[0].mxu0
        %v859 = vadd.f32 %v464, %v858
        %v860 = vpop.f32.mrb[0].mxu0
        %861 = vmatprep.mubr.bf16.mxu0 0
        %862 = vmatmul.mubr.bf16.gmra.mrb[0].mxu0 %v672
        %v863 = vpop.f32.mrb[0].mxu0
        %v864 = vadd.f32 %v464, %v863
        %v865 = vpop.f32.mrb[0].mxu0
        %v866 = vpop.f32.mrb[0].mxu0
        %v867 = vadd.f32 %v464, %v866
        %v868 = vpop.f32.mrb[0].mxu0
        %869 = vmatprep.mubr.bf16.mxu0 0
        %870 = vmatmul.mubr.bf16.gmra.mrb[0].mxu0 %v675
        %v871 = vpop.f32.mrb[0].mxu0
        %v872 = vadd.f32 %v464, %v871
        %v873 = vpop.f32.mrb[0].mxu0
        %v874 = vpop.f32.mrb[0].mxu0
        %v875 = vadd.f32 %v464, %v874
        %v876 = vpop.f32.mrb[0].mxu0
        %877 = vmatprep.mubr.bf16.mxu0 0
        %878 = vmatmul.mubr.bf16.gmra.mrb[0].mxu0 %v678
        %v879 = vpop.f32.mrb[0].mxu0
        %v880 = vadd.f32 %v464, %v879
        %v881 = vpop.f32.mrb[0].mxu0
        %v882 = vpop.f32.mrb[0].mxu0
        %v883 = vadd.f32 %v464, %v882
        %v884 = vpop.f32.mrb[0].mxu0
        %885 = vmatprep.mubr.bf16.mxu0 0
        %886 = vmatmul.mubr.bf16.gmra.mrb[0].mxu0 %v681
        %v887 = vpop.f32.mrb[0].mxu0
        %v888 = vadd.f32 %v464, %v887
        %v889 = vpop.f32.mrb[0].mxu0
        %v890 = vpop.f32.mrb[0].mxu0
        %v891 = vadd.f32 %v464, %v890
        %v892 = vpop.f32.mrb[0].mxu0
        %893 = vmatprep.mubr.bf16.mxu0 0
        %894 = vmatmul.mubr.bf16.gmra.mrb[0].mxu0 %v684
        %v895 = vpop.f32.mrb[0].mxu0
        %v896 = vadd.f32 %v464, %v895
        %v897 = vpop.f32.mrb[0].mxu0
        %v898 = vpop.f32.mrb[0].mxu0
        %v899 = vadd.f32 %v464, %v898
        %v900 = vpop.f32.mrb[0].mxu0
        %901 = vmatprep.mubr.bf16.mxu0 0
        %902 = vmatmul.mubr.bf16.gmra.mrb[0].mxu0 %v687
        %v903 = vpop.f32.mrb[0].mxu0
        %v904 = vadd.f32 %v464, %v903
        %v905 = vpop.f32.mrb[0].mxu0
        %v906 = vpop.f32.mrb[0].mxu0
        %v907 = vadd.f32 %v464, %v906
        %v908 = vpop.f32.mrb[0].mxu0
        %909 = vmatprep.mubr.bf16.mxu0 0
        %910 = vmatmul.mubr.bf16.gmra.mrb[0].mxu0 %v690
        %v911 = vpop.f32.mrb[0].mxu0
        %v912 = vadd.f32 %v464, %v911
        %v913 = vpop.f32.mrb[0].mxu0
        %v914 = vpop.f32.mrb[0].mxu0
        %v915 = vadd.f32 %v464, %v914
        %v916 = vpop.f32.mrb[0].mxu0
        %917 = vmatprep.mubr.bf16.mxu0 0
        %918 = vmatmul.mubr.bf16.gmra.mrb[0].mxu0 %v693
        %v919 = vpop.f32.mrb[0].mxu0
        %v920 = vadd.f32 %v464, %v919
        %v921 = vpop.f32.mrb[0].mxu0
        %v922 = vpop.f32.mrb[0].mxu0
        %v923 = vadd.f32 %v464, %v922
        %v924 = vpop.f32.mrb[0].mxu0
        %925 = vmatprep.mubr.bf16.mxu0 0
        %926 = vmatmul.mubr.bf16.gmra.mrb[0].mxu0 %v696
        %v927 = vpop.f32.mrb[0].mxu0
        %v928 = vadd.f32 %v464, %v927
        %v929 = vpop.f32.mrb[0].mxu0
        %v930 = vpop.f32.mrb[0].mxu0
        %v931 = vadd.f32 %v464, %v930
        %v932 = vpop.f32.mrb[0].mxu0
        %933 = vmatprep.mubr.bf16.mxu0 0
        %934 = vmatmul.mubr.bf16.gmra.mrb[0].mxu0 %v699
        %v935 = vpop.f32.mrb[0].mxu0
        %v936 = vadd.f32 %v464, %v935
        %v937 = vpop.f32.mrb[0].mxu0
        %v938 = vpop.f32.mrb[0].mxu0
        %v939 = vadd.f32 %v464, %v938
        %v940 = vpop.f32.mrb[0].mxu0
        %941 = vmatprep.mubr.bf16.mxu0 0
        %942 = vmatmul.mubr.bf16.gmra.mrb[0].mxu0 %v702
        %v943 = vpop.f32.mrb[0].mxu0
        %v944 = vadd.f32 %v464, %v943
        %v945 = vpop.f32.mrb[0].mxu0
        %v946 = vpop.f32.mrb[0].mxu0
        %v947 = vadd.f32 %v464, %v946
        %v948 = vpop.f32.mrb[0].mxu0
        %949 = vmatprep.mubr.bf16.mxu0 0
        %950 = vmatmul.mubr.bf16.gmra.mrb[0].mxu0 %v705
        %v951 = vpop.f32.mrb[0].mxu0
        %v952 = vadd.f32 %v464, %v951
        %v953 = vpop.f32.mrb[0].mxu0
        %v954 = vpop.f32.mrb[0].mxu0
        %v955 = vadd.f32 %v464, %v954
        %v956 = vpop.f32.mrb[0].mxu0
        %957 = vmatprep.mubr.bf16.mxu0 0
        %958 = vmatmul.mubr.bf16.gmra.mrb[0].mxu0 %v708
        %v959 = vpop.f32.mrb[0].mxu0
        %v960 = vadd.f32 %v464, %v959
        %v961 = vpop.f32.mrb[0].mxu0
        %v962 = vpop.f32.mrb[0].mxu0
        %v963 = vadd.f32 %v464, %v962
        %v964 = vpop.f32.mrb[0].mxu0
        %965 = vmatprep.mubr.bf16.mxu0 0
        %966 = vmatmul.mubr.bf16.gmra.mrb[0].mxu0 %v711
        %v967 = vpop.f32.mrb[0].mxu0
        %v968 = vadd.f32 %v464, %v967
        %v969 = vpop.f32.mrb[0].mxu0
        %v970 = vpop.f32.mrb[0].mxu0
        %v971 = vadd.f32 %v464, %v970
        %v972 = vpop.f32.mrb[0].mxu0
        %973 = vmatprep.mubr.bf16.mxu0 0
        %974 = vmatmul.mubr.bf16.gmra.mrb[0].mxu0 %v714
        %v975 = vpop.f32.mrb[0].mxu0
        %v976 = vadd.f32 %v464, %v975
        %v977 = vpop.f32.mrb[0].mxu0
        %v978 = vpop.f32.mrb[0].mxu0
        %v979 = vadd.f32 %v464, %v978
        %v980 = vpop.f32.mrb[0].mxu0
        %981 = vmatprep.mubr.bf16.mxu0 0
        %982 = vmatmul.mubr.bf16.gmra.mrb[0].mxu0 %v717
        %v983 = vpop.f32.mrb[0].mxu0
        %v984 = vadd.f32 %v464, %v983
        %v985 = vpop.f32.mrb[0].mxu0
        %v986 = vpop.f32.mrb[0].mxu0
        %v987 = vadd.f32 %v464, %v986
        %v988 = vpop.f32.mrb[0].mxu0
        %989 = vmatprep.mubr.bf16.mxu0 0
        %990 = vmatmul.mubr.bf16.gmra.mrb[0].mxu0 %v720
        %v991 = vpop.f32.mrb[0].mxu0
        %v992 = vadd.f32 %v464, %v991
        %v993 = vpop.f32.mrb[0].mxu0
        %v994 = vpop.f32.mrb[0].mxu0
        %v995 = vadd.f32 %v464, %v994
        %v996 = vpop.f32.mrb[0].mxu0
        %997 = vmatprep.mubr.bf16.mxu0 0
        %998 = vmatmul.mubr.bf16.gmra.mrb[0].mxu0 %v723
        %v999 = vpop.f32.mrb[0].mxu0
        %v1000 = vadd.f32 %v464, %v999
        %v1001 = vpop.f32.mrb[0].mxu0
        %v1002 = vpop.f32.mrb[0].mxu0
        %v1003 = vadd.f32 %v464, %v1002
        %v1004 = vpop.f32.mrb[0].mxu0
        %1005 = vmatprep.mubr.bf16.mxu0 0
        %1006 = vmatmul.mubr.bf16.gmra.mrb[0].mxu0 %v726
        %v1007 = vpop.f32.mrb[0].mxu0
        %v1008 = vadd.f32 %v464, %v1007
        %v1009 = vpop.f32.mrb[0].mxu0
        %v1010 = vpop.f32.mrb[0].mxu0
        %v1011 = vadd.f32 %v464, %v1010
        %v1012 = vpop.f32.mrb[0].mxu0
        %1013 = vmatprep.mubr.bf16.mxu0 0
        %1014 = vmatmul.mubr.bf16.gmra.mrb[0].mxu0 %v729
        %v1015 = vpop.f32.mrb[0].mxu0
        %v1016 = vadd.f32 %v464, %v1015
        %v1017 = vpop.f32.mrb[0].mxu0
        %v1018 = vpop.f32.mrb[0].mxu0
        %v1019 = vadd.f32 %v464, %v1018
        %v1020 = vpop.f32.mrb[0].mxu0
        %1021 = vmatprep.mubr.bf16.mxu0 0
        %1022 = vmatmul.mubr.bf16.gmra.mrb[0].mxu0 %v732
        %v1023 = vpop.f32.mrb[0].mxu0
        %v1024 = vadd.f32 %v464, %v1023
        %v1025 = vpop.f32.mrb[0].mxu0
        %v1026 = vpop.f32.mrb[0].mxu0
        %v1027 = vadd.f32 %v464, %v1026
        %v1028 = vpop.f32.mrb[0].mxu0
        %1029 = vdwg.mxu0
        %v1030 = vxor.u32 %v776, 2147483648
        %v1031 = vxor.u32 %v779, 2147483648
        %v1032 = vxor.u32 %v784, 2147483648
        %v1033 = vxor.u32 %v787, 2147483648
        %v1034 = vxor.u32 %v792, 2147483648
        %v1035 = vxor.u32 %v795, 2147483648
        %v1036 = vxor.u32 %v800, 2147483648
        %v1037 = vxor.u32 %v803, 2147483648
        %v1038 = vxor.u32 %v808, 2147483648
        %v1039 = vxor.u32 %v811, 2147483648
        %v1040 = vxor.u32 %v816, 2147483648
        %v1041 = vxor.u32 %v819, 2147483648
        %v1042 = vxor.u32 %v824, 2147483648
        %v1043 = vxor.u32 %v827, 2147483648
        %v1044 = vxor.u32 %v832, 2147483648
        %v1045 = vxor.u32 %v835, 2147483648
        %v1046 = vxor.u32 %v840, 2147483648
        %v1047 = vxor.u32 %v843, 2147483648
        %v1048 = vxor.u32 %v848, 2147483648
        %v1049 = vxor.u32 %v851, 2147483648
        %v1050 = vxor.u32 %v856, 2147483648
        %v1051 = vxor.u32 %v859, 2147483648
        %v1052 = vxor.u32 %v864, 2147483648
        %v1053 = vxor.u32 %v867, 2147483648
        %v1054 = vxor.u32 %v872, 2147483648
        %v1055 = vxor.u32 %v875, 2147483648
        %v1056 = vxor.u32 %v880, 2147483648
        %v1057 = vxor.u32 %v883, 2147483648
        %v1058 = vxor.u32 %v888, 2147483648
        %v1059 = vxor.u32 %v891, 2147483648
        %v1060 = vxor.u32 %v896, 2147483648
        %v1061 = vxor.u32 %v899, 2147483648
        %v1062 = vxor.u32 %v904, 2147483648
        %v1063 = vxor.u32 %v907, 2147483648
        %v1064 = vxor.u32 %v912, 2147483648
        %v1065 = vxor.u32 %v915, 2147483648
        %v1066 = vxor.u32 %v920, 2147483648
        %v1067 = vxor.u32 %v923, 2147483648
        %v1068 = vxor.u32 %v928, 2147483648
        %v1069 = vxor.u32 %v931, 2147483648
        %v1070 = vxor.u32 %v936, 2147483648
        %v1071 = vxor.u32 %v939, 2147483648
        %v1072 = vxor.u32 %v944, 2147483648
        %v1073 = vxor.u32 %v947, 2147483648
        %v1074 = vxor.u32 %v952, 2147483648
        %v1075 = vxor.u32 %v955, 2147483648
        %v1076 = vxor.u32 %v960, 2147483648
        %v1077 = vxor.u32 %v963, 2147483648
        %v1078 = vxor.u32 %v968, 2147483648
        %v1079 = vxor.u32 %v971, 2147483648
        %v1080 = vxor.u32 %v976, 2147483648
        %v1081 = vxor.u32 %v979, 2147483648
        %v1082 = vxor.u32 %v984, 2147483648
        %v1083 = vxor.u32 %v987, 2147483648
        %v1084 = vxor.u32 %v992, 2147483648
        %v1085 = vxor.u32 %v995, 2147483648
        %v1086 = vxor.u32 %v1000, 2147483648
        %v1087 = vxor.u32 %v1003, 2147483648
        %v1088 = vxor.u32 %v1008, 2147483648
        %v1089 = vxor.u32 %v1011, 2147483648
        %v1090 = vxor.u32 %v1016, 2147483648
        %v1091 = vxor.u32 %v1019, 2147483648
        %v1092 = vxor.u32 %v1024, 2147483648
        %v1093 = vxor.u32 %v1027, 2147483648
        %v1094 = vmul.f32 %v1030, 1.442695
        %v1095 = vpow.pop %v1094
        %v1096 = vmul.f32 %v1031, 1.442695
        %v1097 = vpow.pop %v1096
        %v1098 = vmul.f32 %v1032, 1.442695
        %v1099 = vpow.pop %v1098
        %v1100 = vmul.f32 %v1033, 1.442695
        %v1101 = vpow.pop %v1100
        %v1102 = vmul.f32 %v1034, 1.442695
        %v1103 = vpow.pop %v1102
        %v1104 = vmul.f32 %v1035, 1.442695
        %v1105 = vpow.pop %v1104
        %v1106 = vmul.f32 %v1036, 1.442695
        %v1107 = vpow.pop %v1106
        %v1108 = vmul.f32 %v1037, 1.442695
        %v1109 = vpow.pop %v1108
        %v1110 = vmul.f32 %v1038, 1.442695
        %v1111 = vpow.pop %v1110
        %v1112 = vmul.f32 %v1039, 1.442695
        %v1113 = vpow.pop %v1112
        %v1114 = vmul.f32 %v1040, 1.442695
        %v1115 = vpow.pop %v1114
        %v1116 = vmul.f32 %v1041, 1.442695
        %v1117 = vpow.pop %v1116
        %v1118 = vmul.f32 %v1042, 1.442695
        %v1119 = vpow.pop %v1118
        %v1120 = vmul.f32 %v1043, 1.442695
        %v1121 = vpow.pop %v1120
        %v1122 = vmul.f32 %v1044, 1.442695
        %v1123 = vpow.pop %v1122
        %v1124 = vmul.f32 %v1045, 1.442695
        %v1125 = vpow.pop %v1124
        %v1126 = vmul.f32 %v1046, 1.442695
        %v1127 = vpow.pop %v1126
        %v1128 = vmul.f32 %v1047, 1.442695
        %v1129 = vpow.pop %v1128
        %v1130 = vmul.f32 %v1048, 1.442695
        %v1131 = vpow.pop %v1130
        %v1132 = vmul.f32 %v1049, 1.442695
        %v1133 = vpow.pop %v1132
        %v1134 = vmul.f32 %v1050, 1.442695
        %v1135 = vpow.pop %v1134
        %v1136 = vmul.f32 %v1051, 1.442695
        %v1137 = vpow.pop %v1136
        %v1138 = vmul.f32 %v1052, 1.442695
        %v1139 = vpow.pop %v1138
        %v1140 = vmul.f32 %v1053, 1.442695
        %v1141 = vpow.pop %v1140
        %v1142 = vmul.f32 %v1054, 1.442695
        %v1143 = vpow.pop %v1142
        %v1144 = vmul.f32 %v1055, 1.442695
        %v1145 = vpow.pop %v1144
        %v1146 = vmul.f32 %v1056, 1.442695
        %v1147 = vpow.pop %v1146
        %v1148 = vmul.f32 %v1057, 1.442695
        %v1149 = vpow.pop %v1148
        %v1150 = vmul.f32 %v1058, 1.442695
        %v1151 = vpow.pop %v1150
        %v1152 = vmul.f32 %v1059, 1.442695
        %v1153 = vpow.pop %v1152
        %v1154 = vmul.f32 %v1060, 1.442695
        %v1155 = vpow.pop %v1154
        %v1156 = vmul.f32 %v1061, 1.442695
        %v1157 = vpow.pop %v1156
        %v1158 = vmul.f32 %v1062, 1.442695
        %v1159 = vpow.pop %v1158
        %v1160 = vmul.f32 %v1063, 1.442695
        %v1161 = vpow.pop %v1160
        %v1162 = vmul.f32 %v1064, 1.442695
        %v1163 = vpow.pop %v1162
        %v1164 = vmul.f32 %v1065, 1.442695
        %v1165 = vpow.pop %v1164
        %v1166 = vmul.f32 %v1066, 1.442695
        %v1167 = vpow.pop %v1166
        %v1168 = vmul.f32 %v1067, 1.442695
        %v1169 = vpow.pop %v1168
        %v1170 = vmul.f32 %v1068, 1.442695
        %v1171 = vpow.pop %v1170
        %v1172 = vmul.f32 %v1069, 1.442695
        %v1173 = vpow.pop %v1172
        %v1174 = vmul.f32 %v1070, 1.442695
        %v1175 = vpow.pop %v1174
        %v1176 = vmul.f32 %v1071, 1.442695
        %v1177 = vpow.pop %v1176
        %v1178 = vmul.f32 %v1072, 1.442695
        %v1179 = vpow.pop %v1178
        %v1180 = vmul.f32 %v1073, 1.442695
        %v1181 = vpow.pop %v1180
        %v1182 = vmul.f32 %v1074, 1.442695
        %v1183 = vpow.pop %v1182
        %v1184 = vmul.f32 %v1075, 1.442695
        %v1185 = vpow.pop %v1184
        %v1186 = vmul.f32 %v1076, 1.442695
        %v1187 = vpow.pop %v1186
        %v1188 = vmul.f32 %v1077, 1.442695
        %v1189 = vpow.pop %v1188
        %v1190 = vmul.f32 %v1078, 1.442695
        %v1191 = vpow.pop %v1190
        %v1192 = vmul.f32 %v1079, 1.442695
        %v1193 = vpow.pop %v1192
        %v1194 = vmul.f32 %v1080, 1.442695
        %v1195 = vpow.pop %v1194
        %v1196 = vmul.f32 %v1081, 1.442695
        %v1197 = vpow.pop %v1196
        %v1198 = vmul.f32 %v1082, 1.442695
        %v1199 = vpow.pop %v1198
        %v1200 = vmul.f32 %v1083, 1.442695
        %v1201 = vpow.pop %v1200
        %v1202 = vmul.f32 %v1084, 1.442695
        %v1203 = vpow.pop %v1202
        %v1204 = vmul.f32 %v1085, 1.442695
        %v1205 = vpow.pop %v1204
        %v1206 = vmul.f32 %v1086, 1.442695
        %v1207 = vpow.pop %v1206
        %v1208 = vmul.f32 %v1087, 1.442695
        %v1209 = vpow.pop %v1208
        %v1210 = vmul.f32 %v1088, 1.442695
        %v1211 = vpow.pop %v1210
        %v1212 = vmul.f32 %v1089, 1.442695
        %v1213 = vpow.pop %v1212
        %v1214 = vmul.f32 %v1090, 1.442695
        %v1215 = vpow.pop %v1214
        %v1216 = vmul.f32 %v1091, 1.442695
        %v1217 = vpow.pop %v1216
        %v1218 = vmul.f32 %v1092, 1.442695
        %v1219 = vpow.pop %v1218
        %v1220 = vmul.f32 %v1093, 1.442695
        %v1221 = vpow.pop %v1220
        %v1222 = vadd.f32 %v1095, 1.0
        %v1223 = vadd.f32 %v1097, 1.0
        %v1224 = vadd.f32 %v1099, 1.0
        %v1225 = vadd.f32 %v1101, 1.0
        %v1226 = vadd.f32 %v1103, 1.0
        %v1227 = vadd.f32 %v1105, 1.0
        %v1228 = vadd.f32 %v1107, 1.0
        %v1229 = vadd.f32 %v1109, 1.0
        %v1230 = vadd.f32 %v1111, 1.0
        %v1231 = vadd.f32 %v1113, 1.0
        %v1232 = vadd.f32 %v1115, 1.0
        %v1233 = vadd.f32 %v1117, 1.0
        %v1234 = vadd.f32 %v1119, 1.0
        %v1235 = vadd.f32 %v1121, 1.0
        %v1236 = vadd.f32 %v1123, 1.0
        %v1237 = vadd.f32 %v1125, 1.0
        %v1238 = vadd.f32 %v1127, 1.0
        %v1239 = vadd.f32 %v1129, 1.0
        %v1240 = vadd.f32 %v1131, 1.0
        %v1241 = vadd.f32 %v1133, 1.0
        %v1242 = vadd.f32 %v1135, 1.0
        %v1243 = vadd.f32 %v1137, 1.0
        %v1244 = vadd.f32 %v1139, 1.0
        %v1245 = vadd.f32 %v1141, 1.0
        %v1246 = vadd.f32 %v1143, 1.0
        %v1247 = vadd.f32 %v1145, 1.0
        %v1248 = vadd.f32 %v1147, 1.0
        %v1249 = vadd.f32 %v1149, 1.0
        %v1250 = vadd.f32 %v1151, 1.0
        %v1251 = vadd.f32 %v1153, 1.0
        %v1252 = vadd.f32 %v1155, 1.0
        %v1253 = vadd.f32 %v1157, 1.0
        %v1254 = vadd.f32 %v1159, 1.0
        %v1255 = vadd.f32 %v1161, 1.0
        %v1256 = vadd.f32 %v1163, 1.0
        %v1257 = vadd.f32 %v1165, 1.0
        %v1258 = vadd.f32 %v1167, 1.0
        %v1259 = vadd.f32 %v1169, 1.0
        %v1260 = vadd.f32 %v1171, 1.0
        %v1261 = vadd.f32 %v1173, 1.0
        %v1262 = vadd.f32 %v1175, 1.0
        %v1263 = vadd.f32 %v1177, 1.0
        %v1264 = vadd.f32 %v1179, 1.0
        %v1265 = vadd.f32 %v1181, 1.0
        %v1266 = vadd.f32 %v1183, 1.0
        %v1267 = vadd.f32 %v1185, 1.0
        %v1268 = vadd.f32 %v1187, 1.0
        %v1269 = vadd.f32 %v1189, 1.0
        %v1270 = vadd.f32 %v1191, 1.0
        %v1271 = vadd.f32 %v1193, 1.0
        %v1272 = vadd.f32 %v1195, 1.0
        %v1273 = vadd.f32 %v1197, 1.0
        %v1274 = vadd.f32 %v1199, 1.0
        %v1275 = vadd.f32 %v1201, 1.0
        %v1276 = vadd.f32 %v1203, 1.0
        %v1277 = vadd.f32 %v1205, 1.0
        %v1278 = vadd.f32 %v1207, 1.0
        %v1279 = vadd.f32 %v1209, 1.0
        %v1280 = vadd.f32 %v1211, 1.0
        %v1281 = vadd.f32 %v1213, 1.0
        %v1282 = vadd.f32 %v1215, 1.0
        %v1283 = vadd.f32 %v1217, 1.0
        %v1284 = vadd.f32 %v1219, 1.0
        %v1285 = vadd.f32 %v1221, 1.0
        %v1286 = vrcp.pop %v1222
        %v1287 = vmul.f32 1.0, %v1286
        %v1288 = vrcp.pop %v1223
        %v1289 = vmul.f32 1.0, %v1288
        %v1290 = vrcp.pop %v1224
        %v1291 = vmul.f32 1.0, %v1290
        %v1292 = vrcp.pop %v1225
        %v1293 = vmul.f32 1.0, %v1292
        %v1294 = vrcp.pop %v1226
        %v1295 = vmul.f32 1.0, %v1294
        %v1296 = vrcp.pop %v1227
        %v1297 = vmul.f32 1.0, %v1296
        %v1298 = vrcp.pop %v1228
        %v1299 = vmul.f32 1.0, %v1298
        %v1300 = vrcp.pop %v1229
        %v1301 = vmul.f32 1.0, %v1300
        %v1302 = vrcp.pop %v1230
        %v1303 = vmul.f32 1.0, %v1302
        %v1304 = vrcp.pop %v1231
        %v1305 = vmul.f32 1.0, %v1304
        %v1306 = vrcp.pop %v1232
        %v1307 = vmul.f32 1.0, %v1306
        %v1308 = vrcp.pop %v1233
        %v1309 = vmul.f32 1.0, %v1308
        %v1310 = vrcp.pop %v1234
        %v1311 = vmul.f32 1.0, %v1310
        %v1312 = vrcp.pop %v1235
        %v1313 = vmul.f32 1.0, %v1312
        %v1314 = vrcp.pop %v1236
        %v1315 = vmul.f32 1.0, %v1314
        %v1316 = vrcp.pop %v1237
        %v1317 = vmul.f32 1.0, %v1316
        %v1318 = vrcp.pop %v1238
        %v1319 = vmul.f32 1.0, %v1318
        %v1320 = vrcp.pop %v1239
        %v1321 = vmul.f32 1.0, %v1320
        %v1322 = vrcp.pop %v1240
        %v1323 = vmul.f32 1.0, %v1322
        %v1324 = vrcp.pop %v1241
        %v1325 = vmul.f32 1.0, %v1324
        %v1326 = vrcp.pop %v1242
        %v1327 = vmul.f32 1.0, %v1326
        %v1328 = vrcp.pop %v1243
        %v1329 = vmul.f32 1.0, %v1328
        %v1330 = vrcp.pop %v1244
        %v1331 = vmul.f32 1.0, %v1330
        %v1332 = vrcp.pop %v1245
        %v1333 = vmul.f32 1.0, %v1332
        %v1334 = vrcp.pop %v1246
        %v1335 = vmul.f32 1.0, %v1334
        %v1336 = vrcp.pop %v1247
        %v1337 = vmul.f32 1.0, %v1336
        %v1338 = vrcp.pop %v1248
        %v1339 = vmul.f32 1.0, %v1338
        %v1340 = vrcp.pop %v1249
        %v1341 = vmul.f32 1.0, %v1340
        %v1342 = vrcp.pop %v1250
        %v1343 = vmul.f32 1.0, %v1342
        %v1344 = vrcp.pop %v1251
        %v1345 = vmul.f32 1.0, %v1344
        %v1346 = vrcp.pop %v1252
        %v1347 = vmul.f32 1.0, %v1346
        %v1348 = vrcp.pop %v1253
        %v1349 = vmul.f32 1.0, %v1348
        %v1350 = vrcp.pop %v1254
        %v1351 = vmul.f32 1.0, %v1350
        %v1352 = vrcp.pop %v1255
        %v1353 = vmul.f32 1.0, %v1352
        %v1354 = vrcp.pop %v1256
        %v1355 = vmul.f32 1.0, %v1354
        %v1356 = vrcp.pop %v1257
        %v1357 = vmul.f32 1.0, %v1356
        %v1358 = vrcp.pop %v1258
        %v1359 = vmul.f32 1.0, %v1358
        %v1360 = vrcp.pop %v1259
        %v1361 = vmul.f32 1.0, %v1360
        %v1362 = vrcp.pop %v1260
        %v1363 = vmul.f32 1.0, %v1362
        %v1364 = vrcp.pop %v1261
        %v1365 = vmul.f32 1.0, %v1364
        %v1366 = vrcp.pop %v1262
        %v1367 = vmul.f32 1.0, %v1366
        %v1368 = vrcp.pop %v1263
        %v1369 = vmul.f32 1.0, %v1368
        %v1370 = vrcp.pop %v1264
        %v1371 = vmul.f32 1.0, %v1370
        %v1372 = vrcp.pop %v1265
        %v1373 = vmul.f32 1.0, %v1372
        %v1374 = vrcp.pop %v1266
        %v1375 = vmul.f32 1.0, %v1374
        %v1376 = vrcp.pop %v1267
        %v1377 = vmul.f32 1.0, %v1376
        %v1378 = vrcp.pop %v1268
        %v1379 = vmul.f32 1.0, %v1378
        %v1380 = vrcp.pop %v1269
        %v1381 = vmul.f32 1.0, %v1380
        %v1382 = vrcp.pop %v1270
        %v1383 = vmul.f32 1.0, %v1382
        %v1384 = vrcp.pop %v1271
        %v1385 = vmul.f32 1.0, %v1384
        %v1386 = vrcp.pop %v1272
        %v1387 = vmul.f32 1.0, %v1386
        %v1388 = vrcp.pop %v1273
        %v1389 = vmul.f32 1.0, %v1388
        %v1390 = vrcp.pop %v1274
        %v1391 = vmul.f32 1.0, %v1390
        %v1392 = vrcp.pop %v1275
        %v1393 = vmul.f32 1.0, %v1392
        %v1394 = vrcp.pop %v1276
        %v1395 = vmul.f32 1.0, %v1394
        %v1396 = vrcp.pop %v1277
        %v1397 = vmul.f32 1.0, %v1396
        %v1398 = vrcp.pop %v1278
        %v1399 = vmul.f32 1.0, %v1398
        %v1400 = vrcp.pop %v1279
        %v1401 = vmul.f32 1.0, %v1400
        %v1402 = vrcp.pop %v1280
        %v1403 = vmul.f32 1.0, %v1402
        %v1404 = vrcp.pop %v1281
        %v1405 = vmul.f32 1.0, %v1404
        %v1406 = vrcp.pop %v1282
        %v1407 = vmul.f32 1.0, %v1406
        %v1408 = vrcp.pop %v1283
        %v1409 = vmul.f32 1.0, %v1408
        %v1410 = vrcp.pop %v1284
        %v1411 = vmul.f32 1.0, %v1410
        %v1412 = vrcp.pop %v1285
        %v1413 = vmul.f32 1.0, %v1412
        %v1414 = vmul.f32 %v776, %v1287
        %v1415 = vmul.f32 %v779, %v1289
        %v1416 = vmul.f32 %v784, %v1291
        %v1417 = vmul.f32 %v787, %v1293
        %v1418 = vmul.f32 %v792, %v1295
        %v1419 = vmul.f32 %v795, %v1297
        %v1420 = vmul.f32 %v800, %v1299
        %v1421 = vmul.f32 %v803, %v1301
        %v1422 = vmul.f32 %v808, %v1303
        %v1423 = vmul.f32 %v811, %v1305
        %v1424 = vmul.f32 %v816, %v1307
        %v1425 = vmul.f32 %v819, %v1309
        %v1426 = vmul.f32 %v824, %v1311
        %v1427 = vmul.f32 %v827, %v1313
        %v1428 = vmul.f32 %v832, %v1315
        %v1429 = vmul.f32 %v835, %v1317
        %v1430 = vmul.f32 %v840, %v1319
        %v1431 = vmul.f32 %v843, %v1321
        %v1432 = vmul.f32 %v848, %v1323
        %v1433 = vmul.f32 %v851, %v1325
        %v1434 = vmul.f32 %v856, %v1327
        %v1435 = vmul.f32 %v859, %v1329
        %v1436 = vmul.f32 %v864, %v1331
        %v1437 = vmul.f32 %v867, %v1333
        %v1438 = vmul.f32 %v872, %v1335
        %v1439 = vmul.f32 %v875, %v1337
        %v1440 = vmul.f32 %v880, %v1339
        %v1441 = vmul.f32 %v883, %v1341
        %v1442 = vmul.f32 %v888, %v1343
        %v1443 = vmul.f32 %v891, %v1345
        %v1444 = vmul.f32 %v896, %v1347
        %v1445 = vmul.f32 %v899, %v1349
        %v1446 = vmul.f32 %v904, %v1351
        %v1447 = vmul.f32 %v907, %v1353
        %v1448 = vmul.f32 %v912, %v1355
        %v1449 = vmul.f32 %v915, %v1357
        %v1450 = vmul.f32 %v920, %v1359
        %v1451 = vmul.f32 %v923, %v1361
        %v1452 = vmul.f32 %v928, %v1363
        %v1453 = vmul.f32 %v931, %v1365
        %v1454 = vmul.f32 %v936, %v1367
        %v1455 = vmul.f32 %v939, %v1369
        %v1456 = vmul.f32 %v944, %v1371
        %v1457 = vmul.f32 %v947, %v1373
        %v1458 = vmul.f32 %v952, %v1375
        %v1459 = vmul.f32 %v955, %v1377
        %v1460 = vmul.f32 %v960, %v1379
        %v1461 = vmul.f32 %v963, %v1381
        %v1462 = vmul.f32 %v968, %v1383
        %v1463 = vmul.f32 %v971, %v1385
        %v1464 = vmul.f32 %v976, %v1387
        %v1465 = vmul.f32 %v979, %v1389
        %v1466 = vmul.f32 %v984, %v1391
        %v1467 = vmul.f32 %v987, %v1393
        %v1468 = vmul.f32 %v992, %v1395
        %v1469 = vmul.f32 %v995, %v1397
        %v1470 = vmul.f32 %v1000, %v1399
        %v1471 = vmul.f32 %v1003, %v1401
        %v1472 = vmul.f32 %v1008, %v1403
        %v1473 = vmul.f32 %v1011, %v1405
        %v1474 = vmul.f32 %v1016, %v1407
        %v1475 = vmul.f32 %v1019, %v1409
        %v1476 = vmul.f32 %v1024, %v1411
        %v1477 = vmul.f32 %v1027, %v1413
        %vm1478 = vcmask 130048
        %1479 = vst.msk [vmem:[#allocation2] sm:$0xff] %vm1478, 0.0
        %1480 = vst.msk [vmem:[#allocation2 + $0x8] sm:$0xff] %vm1478, 0.0
        %vm1481 = vcmask 123904
        %1482 = vst.msk [vmem:[#allocation2 + $0x10] sm:$0x3] %vm1481, 0.0
        %1483 = vst.msk [vmem:[#allocation2 + $0x18] sm:$0xff] %vm1478, 0.0
        %1484 = vst.msk [vmem:[#allocation2 + $0x20] sm:$0xff] %vm1478, 0.0
        %1485 = vst.msk [vmem:[#allocation2 + $0x28] sm:$0x3] %vm1481, 0.0
        %1486 = vst.msk [vmem:[#allocation2 + $0x30] sm:$0xff] %vm1478, 0.0
        %1487 = vst.msk [vmem:[#allocation2 + $0x38] sm:$0xff] %vm1478, 0.0
        %1488 = vst.msk [vmem:[#allocation2 + $0x40] sm:$0x3] %vm1481, 0.0
        %1489 = vst.msk [vmem:[#allocation2 + $0x48] sm:$0xff] %vm1478, 0.0
        %1490 = vst.msk [vmem:[#allocation2 + $0x50] sm:$0xff] %vm1478, 0.0
        %1491 = vst.msk [vmem:[#allocation2 + $0x58] sm:$0x3] %vm1481, 0.0
        %1492 = vst.msk [vmem:[#allocation2 + $0x60] sm:$0xff] %vm1478, 0.0
        %1493 = vst.msk [vmem:[#allocation2 + $0x68] sm:$0xff] %vm1478, 0.0
        %1494 = vst.msk [vmem:[#allocation2 + $0x70] sm:$0x3] %vm1481, 0.0
        %1495 = vst.msk [vmem:[#allocation2 + $0x78] sm:$0xff] %vm1478, 0.0
        %1496 = vst.msk [vmem:[#allocation2 + $0x80] sm:$0xff] %vm1478, 0.0
        %1497 = vst.msk [vmem:[#allocation2 + $0x88] sm:$0x3] %vm1481, 0.0
        %1498 = vst.msk [vmem:[#allocation2 + $0x90] sm:$0xff] %vm1478, 0.0
        %1499 = vst.msk [vmem:[#allocation2 + $0x98] sm:$0xff] %vm1478, 0.0
        %1500 = vst.msk [vmem:[#allocation2 + $0xa0] sm:$0x3] %vm1481, 0.0
        %1501 = vst.msk [vmem:[#allocation2 + $0xa8] sm:$0xff] %vm1478, 0.0
        %1502 = vst.msk [vmem:[#allocation2 + $0xb0] sm:$0xff] %vm1478, 0.0
        %1503 = vst.msk [vmem:[#allocation2 + $0xb8] sm:$0x3] %vm1481, 0.0
        %1504 = vst.msk [vmem:[#allocation2 + $0xc0] sm:$0xff] %vm1478, 0.0
        %1505 = vst.msk [vmem:[#allocation2 + $0xc8] sm:$0xff] %vm1478, 0.0
        %1506 = vst.msk [vmem:[#allocation2 + $0xd0] sm:$0x3] %vm1481, 0.0
        %1507 = vst.msk [vmem:[#allocation2 + $0xd8] sm:$0xff] %vm1478, 0.0
        %1508 = vst.msk [vmem:[#allocation2 + $0xe0] sm:$0xff] %vm1478, 0.0
        %1509 = vst.msk [vmem:[#allocation2 + $0xe8] sm:$0x3] %vm1481, 0.0
        %1510 = vst.msk [vmem:[#allocation2 + $0xf0] sm:$0xff] %vm1478, 0.0
        %1511 = vst.msk [vmem:[#allocation2 + $0xf8] sm:$0xff] %vm1478, 0.0
        %1512 = vst.msk [vmem:[#allocation2 + $0x100] sm:$0x3] %vm1481, 0.0
        %1513 = vst.msk [vmem:[#allocation2 + $0x108] sm:$0xff] %vm1478, 0.0
        %1514 = vst.msk [vmem:[#allocation2 + $0x110] sm:$0xff] %vm1478, 0.0
        %1515 = vst.msk [vmem:[#allocation2 + $0x118] sm:$0x3] %vm1481, 0.0
        %1516 = vst.msk [vmem:[#allocation2 + $0x120] sm:$0xff] %vm1478, 0.0
        %1517 = vst.msk [vmem:[#allocation2 + $0x128] sm:$0xff] %vm1478, 0.0
        %1518 = vst.msk [vmem:[#allocation2 + $0x130] sm:$0x3] %vm1481, 0.0
        %1519 = vst.msk [vmem:[#allocation2 + $0x138] sm:$0xff] %vm1478, 0.0
        %1520 = vst.msk [vmem:[#allocation2 + $0x140] sm:$0xff] %vm1478, 0.0
        %1521 = vst.msk [vmem:[#allocation2 + $0x148] sm:$0x3] %vm1481, 0.0
        %1522 = vst.msk [vmem:[#allocation2 + $0x150] sm:$0xff] %vm1478, 0.0
        %1523 = vst.msk [vmem:[#allocation2 + $0x158] sm:$0xff] %vm1478, 0.0
        %1524 = vst.msk [vmem:[#allocation2 + $0x160] sm:$0x3] %vm1481, 0.0
        %1525 = vst.msk [vmem:[#allocation2 + $0x168] sm:$0xff] %vm1478, 0.0
        %1526 = vst.msk [vmem:[#allocation2 + $0x170] sm:$0xff] %vm1478, 0.0
        %1527 = vst.msk [vmem:[#allocation2 + $0x178] sm:$0x3] %vm1481, 0.0
        %1528 = vst.msk [vmem:[#allocation2 + $0x180] sm:$0xff] %vm1478, 0.0
        %1529 = vst.msk [vmem:[#allocation2 + $0x188] sm:$0xff] %vm1478, 0.0
        %1530 = vst.msk [vmem:[#allocation2 + $0x190] sm:$0x3] %vm1481, 0.0
        %1531 = vst.msk [vmem:[#allocation2 + $0x198] sm:$0xff] %vm1478, 0.0
        %1532 = vst.msk [vmem:[#allocation2 + $0x1a0] sm:$0xff] %vm1478, 0.0
        %1533 = vst.msk [vmem:[#allocation2 + $0x1a8] sm:$0x3] %vm1481, 0.0
        %1534 = vst.msk [vmem:[#allocation2 + $0x1b0] sm:$0xff] %vm1478, 0.0
        %1535 = vst.msk [vmem:[#allocation2 + $0x1b8] sm:$0xff] %vm1478, 0.0
        %1536 = vst.msk [vmem:[#allocation2 + $0x1c0] sm:$0x3] %vm1481, 0.0
        %1537 = vst.msk [vmem:[#allocation2 + $0x1c8] sm:$0xff] %vm1478, 0.0
        %1538 = vst.msk [vmem:[#allocation2 + $0x1d0] sm:$0xff] %vm1478, 0.0
        %1539 = vst.msk [vmem:[#allocation2 + $0x1d8] sm:$0x3] %vm1481, 0.0
        %1540 = vst.msk [vmem:[#allocation2 + $0x1e0] sm:$0xff] %vm1478, 0.0
        %1541 = vst.msk [vmem:[#allocation2 + $0x1e8] sm:$0xff] %vm1478, 0.0
        %1542 = vst.msk [vmem:[#allocation2 + $0x1f0] sm:$0x3] %vm1481, 0.0
        %1543 = vst.msk [vmem:[#allocation2 + $0x1f8] sm:$0xff] %vm1478, 0.0
        %1544 = vst.msk [vmem:[#allocation2 + $0x200] sm:$0xff] %vm1478, 0.0
        %1545 = vst.msk [vmem:[#allocation2 + $0x208] sm:$0x3] %vm1481, 0.0
        %1546 = vst.msk [vmem:[#allocation2 + $0x210] sm:$0xff] %vm1478, 0.0
        %1547 = vst.msk [vmem:[#allocation2 + $0x218] sm:$0xff] %vm1478, 0.0
        %1548 = vst.msk [vmem:[#allocation2 + $0x220] sm:$0x3] %vm1481, 0.0
        %1549 = vst.msk [vmem:[#allocation2 + $0x228] sm:$0xff] %vm1478, 0.0
        %1550 = vst.msk [vmem:[#allocation2 + $0x230] sm:$0xff] %vm1478, 0.0
        %1551 = vst.msk [vmem:[#allocation2 + $0x238] sm:$0x3] %vm1481, 0.0
        %1552 = vst.msk [vmem:[#allocation2 + $0x240] sm:$0xff] %vm1478, 0.0
        %1553 = vst.msk [vmem:[#allocation2 + $0x248] sm:$0xff] %vm1478, 0.0
        %1554 = vst.msk [vmem:[#allocation2 + $0x250] sm:$0x3] %vm1481, 0.0
        %1555 = vst.msk [vmem:[#allocation2 + $0x258] sm:$0xff] %vm1478, 0.0
        %1556 = vst.msk [vmem:[#allocation2 + $0x260] sm:$0xff] %vm1478, 0.0
        %1557 = vst.msk [vmem:[#allocation2 + $0x268] sm:$0x3] %vm1481, 0.0
        %1558 = vst.msk [vmem:[#allocation2 + $0x270] sm:$0xff] %vm1478, 0.0
        %1559 = vst.msk [vmem:[#allocation2 + $0x278] sm:$0xff] %vm1478, 0.0
        %1560 = vst.msk [vmem:[#allocation2 + $0x280] sm:$0x3] %vm1481, 0.0
        %1561 = vst.msk [vmem:[#allocation2 + $0x288] sm:$0xff] %vm1478, 0.0
        %1562 = vst.msk [vmem:[#allocation2 + $0x290] sm:$0xff] %vm1478, 0.0
        %1563 = vst.msk [vmem:[#allocation2 + $0x298] sm:$0x3] %vm1481, 0.0
        %1564 = vst.msk [vmem:[#allocation2 + $0x2a0] sm:$0xff] %vm1478, 0.0
        %1565 = vst.msk [vmem:[#allocation2 + $0x2a8] sm:$0xff] %vm1478, 0.0
        %1566 = vst.msk [vmem:[#allocation2 + $0x2b0] sm:$0x3] %vm1481, 0.0
        %1567 = vst.msk [vmem:[#allocation2 + $0x2b8] sm:$0xff] %vm1478, 0.0
        %1568 = vst.msk [vmem:[#allocation2 + $0x2c0] sm:$0xff] %vm1478, 0.0
        %1569 = vst.msk [vmem:[#allocation2 + $0x2c8] sm:$0x3] %vm1481, 0.0
        %1570 = vst.msk [vmem:[#allocation2 + $0x2d0] sm:$0xff] %vm1478, 0.0
        %1571 = vst.msk [vmem:[#allocation2 + $0x2d8] sm:$0xff] %vm1478, 0.0
        %1572 = vst.msk [vmem:[#allocation2 + $0x2e0] sm:$0x3] %vm1481, 0.0
        %1573 = vst.msk [vmem:[#allocation2 + $0x2e8] sm:$0xff] %vm1478, 0.0
        %1574 = vst.msk [vmem:[#allocation2 + $0x2f0] sm:$0xff] %vm1478, 0.0
        %1575 = vst.msk [vmem:[#allocation2 + $0x2f8] sm:$0x3] %vm1481, 0.0
        %1576 = vst.msk [vmem:[#allocation2 + $0x300] sm:$0xff] %vm1478, 0.0
        %1577 = vst.msk [vmem:[#allocation2 + $0x308] sm:$0xff] %vm1478, 0.0
        %1578 = vst.msk [vmem:[#allocation2 + $0x310] sm:$0x3] %vm1481, 0.0
        %1579 = vst.msk [vmem:[#allocation2 + $0x318] sm:$0xff] %vm1478, 0.0
        %1580 = vst.msk [vmem:[#allocation2 + $0x320] sm:$0xff] %vm1478, 0.0
        %1581 = vst.msk [vmem:[#allocation2 + $0x328] sm:$0x3] %vm1481, 0.0
        %1582 = vst.msk [vmem:[#allocation2 + $0x330] sm:$0xff] %vm1478, 0.0
        %1583 = vst.msk [vmem:[#allocation2 + $0x338] sm:$0xff] %vm1478, 0.0
        %1584 = vst.msk [vmem:[#allocation2 + $0x340] sm:$0x3] %vm1481, 0.0
        %1585 = vst.msk [vmem:[#allocation2 + $0x348] sm:$0xff] %vm1478, 0.0
        %1586 = vst.msk [vmem:[#allocation2 + $0x350] sm:$0xff] %vm1478, 0.0
        %1587 = vst.msk [vmem:[#allocation2 + $0x358] sm:$0x3] %vm1481, 0.0
        %s1588 = scalar_lea.vmem [#allocation2], 24
        %1589 = vst.msk [vmem:[%s1588 + $0x1] sm:$0xff] %vm1478, %v1414
        %1590 = vst.msk [vmem:[%s1588 + $0x9] sm:$0xff] %vm1478, %v1415
        %1591 = vst.msk [vmem:[%s1588 + $0x19] sm:$0xff] %vm1478, %v1416
        %1592 = vst.msk [vmem:[%s1588 + $0x21] sm:$0xff] %vm1478, %v1417
        %1593 = vst.msk [vmem:[%s1588 + $0x31] sm:$0xff] %vm1478, %v1418
        %1594 = vst.msk [vmem:[%s1588 + $0x39] sm:$0xff] %vm1478, %v1419
        %1595 = vst.msk [vmem:[%s1588 + $0x49] sm:$0xff] %vm1478, %v1420
        %1596 = vst.msk [vmem:[%s1588 + $0x51] sm:$0xff] %vm1478, %v1421
        %1597 = vst.msk [vmem:[%s1588 + $0x61] sm:$0xff] %vm1478, %v1422
        %1598 = vst.msk [vmem:[%s1588 + $0x69] sm:$0xff] %vm1478, %v1423
        %1599 = vst.msk [vmem:[%s1588 + $0x79] sm:$0xff] %vm1478, %v1424
        %1600 = vst.msk [vmem:[%s1588 + $0x81] sm:$0xff] %vm1478, %v1425
        %1601 = vst.msk [vmem:[%s1588 + $0x91] sm:$0xff] %vm1478, %v1426
        %1602 = vst.msk [vmem:[%s1588 + $0x99] sm:$0xff] %vm1478, %v1427
        %1603 = vst.msk [vmem:[%s1588 + $0xa9] sm:$0xff] %vm1478, %v1428
        %1604 = vst.msk [vmem:[%s1588 + $0xb1] sm:$0xff] %vm1478, %v1429
        %1605 = vst.msk [vmem:[%s1588 + $0xc1] sm:$0xff] %vm1478, %v1430
        %1606 = vst.msk [vmem:[%s1588 + $0xc9] sm:$0xff] %vm1478, %v1431
        %1607 = vst.msk [vmem:[%s1588 + $0xd9] sm:$0xff] %vm1478, %v1432
        %1608 = vst.msk [vmem:[%s1588 + $0xe1] sm:$0xff] %vm1478, %v1433
        %1609 = vst.msk [vmem:[%s1588 + $0xf1] sm:$0xff] %vm1478, %v1434
        %1610 = vst.msk [vmem:[%s1588 + $0xf9] sm:$0xff] %vm1478, %v1435
        %1611 = vst.msk [vmem:[%s1588 + $0x109] sm:$0xff] %vm1478, %v1436
        %1612 = vst.msk [vmem:[%s1588 + $0x111] sm:$0xff] %vm1478, %v1437
        %1613 = vst.msk [vmem:[%s1588 + $0x121] sm:$0xff] %vm1478, %v1438
        %1614 = vst.msk [vmem:[%s1588 + $0x129] sm:$0xff] %vm1478, %v1439
        %1615 = vst.msk [vmem:[%s1588 + $0x139] sm:$0xff] %vm1478, %v1440
        %1616 = vst.msk [vmem:[%s1588 + $0x141] sm:$0xff] %vm1478, %v1441
        %1617 = vst.msk [vmem:[%s1588 + $0x151] sm:$0xff] %vm1478, %v1442
        %1618 = vst.msk [vmem:[%s1588 + $0x159] sm:$0xff] %vm1478, %v1443
        %1619 = vst.msk [vmem:[%s1588 + $0x169] sm:$0xff] %vm1478, %v1444
        %1620 = vst.msk [vmem:[%s1588 + $0x171] sm:$0xff] %vm1478, %v1445
        %1621 = vst.msk [vmem:[%s1588 + $0x1b1] sm:$0xff] %vm1478, %v1446
        %1622 = vst.msk [vmem:[%s1588 + $0x1b9] sm:$0xff] %vm1478, %v1447
        %1623 = vst.msk [vmem:[%s1588 + $0x1c9] sm:$0xff] %vm1478, %v1448
        %1624 = vst.msk [vmem:[%s1588 + $0x1d1] sm:$0xff] %vm1478, %v1449
        %1625 = vst.msk [vmem:[%s1588 + $0x1e1] sm:$0xff] %vm1478, %v1450
        %1626 = vst.msk [vmem:[%s1588 + $0x1e9] sm:$0xff] %vm1478, %v1451
        %1627 = vst.msk [vmem:[%s1588 + $0x1f9] sm:$0xff] %vm1478, %v1452
        %1628 = vst.msk [vmem:[%s1588 + $0x201] sm:$0xff] %vm1478, %v1453
        %1629 = vst.msk [vmem:[%s1588 + $0x211] sm:$0xff] %vm1478, %v1454
        %1630 = vst.msk [vmem:[%s1588 + $0x219] sm:$0xff] %vm1478, %v1455
        %1631 = vst.msk [vmem:[%s1588 + $0x229] sm:$0xff] %vm1478, %v1456
        %1632 = vst.msk [vmem:[%s1588 + $0x231] sm:$0xff] %vm1478, %v1457
        %1633 = vst.msk [vmem:[%s1588 + $0x241] sm:$0xff] %vm1478, %v1458
        %1634 = vst.msk [vmem:[%s1588 + $0x249] sm:$0xff] %vm1478, %v1459
        %1635 = vst.msk [vmem:[%s1588 + $0x259] sm:$0xff] %vm1478, %v1460
        %1636 = vst.msk [vmem:[%s1588 + $0x261] sm:$0xff] %vm1478, %v1461
        %1637 = vst.msk [vmem:[%s1588 + $0x271] sm:$0xff] %vm1478, %v1462
        %1638 = vst.msk [vmem:[%s1588 + $0x279] sm:$0xff] %vm1478, %v1463
        %1639 = vst.msk [vmem:[%s1588 + $0x289] sm:$0xff] %vm1478, %v1464
        %1640 = vst.msk [vmem:[%s1588 + $0x291] sm:$0xff] %vm1478, %v1465
        %1641 = vst.msk [vmem:[%s1588 + $0x2a1] sm:$0xff] %vm1478, %v1466
        %1642 = vst.msk [vmem:[%s1588 + $0x2a9] sm:$0xff] %vm1478, %v1467
        %1643 = vst.msk [vmem:[%s1588 + $0x2b9] sm:$0xff] %vm1478, %v1468
        %1644 = vst.msk [vmem:[%s1588 + $0x2c1] sm:$0xff] %vm1478, %v1469
        %1645 = vst.msk [vmem:[%s1588 + $0x2d1] sm:$0xff] %vm1478, %v1470
        %1646 = vst.msk [vmem:[%s1588 + $0x2d9] sm:$0xff] %vm1478, %v1471
        %1647 = vst.msk [vmem:[%s1588 + $0x2e9] sm:$0xff] %vm1478, %v1472
        %1648 = vst.msk [vmem:[%s1588 + $0x2f1] sm:$0xff] %vm1478, %v1473
        %1649 = vst.msk [vmem:[%s1588 + $0x301] sm:$0xff] %vm1478, %v1474
        %1650 = vst.msk [vmem:[%s1588 + $0x309] sm:$0xff] %vm1478, %v1475
        %1651 = vst.msk [vmem:[%s1588 + $0x319] sm:$0xff] %vm1478, %v1476
        %1652 = vst.msk [vmem:[%s1588 + $0x321] sm:$0xff] %vm1478, %v1477
        %v1653 = vld [vmem:[%s3] sm:$0xff]
        %v1654 = vld [vmem:[%s3 + $0x8] sm:$0x1]
        %v1655 = vld [vmem:[#allocation2] sm:$0xff]
        %v1656 = vld [vmem:[#allocation2 + $0x8] sm:$0xff]
        %v1657 = vld [vmem:[#allocation2 + $0x18] sm:$0xff]
        %v1658 = vld [vmem:[#allocation2 + $0x20] sm:$0xff]
        %v1659 = vld [vmem:[#allocation2 + $0x30] sm:$0xff]
        %v1660 = vld [vmem:[#allocation2 + $0x38] sm:$0xff]
        %v1661 = vld [vmem:[#allocation2 + $0x48] sm:$0xff]
        %v1662 = vld [vmem:[#allocation2 + $0x50] sm:$0xff]
        %v1663 = vld [vmem:[#allocation2 + $0x60] sm:$0xff]
        %v1664 = vld [vmem:[#allocation2 + $0x68] sm:$0xff]
        %v1665 = vld [vmem:[#allocation2 + $0x78] sm:$0xff]
        %v1666 = vld [vmem:[#allocation2 + $0x80] sm:$0xff]
        %v1667 = vld [vmem:[#allocation2 + $0x90] sm:$0xff]
        %v1668 = vld [vmem:[#allocation2 + $0x98] sm:$0xff]
        %v1669 = vld [vmem:[#allocation2 + $0xa8] sm:$0xff]
        %v1670 = vld [vmem:[#allocation2 + $0xb0] sm:$0xff]
        %v1671 = vld [vmem:[#allocation2 + $0xc0] sm:$0xff]
        %v1672 = vld [vmem:[#allocation2 + $0xc8] sm:$0xff]
        %v1673 = vld [vmem:[#allocation2 + $0xd8] sm:$0xff]
        %v1674 = vld [vmem:[#allocation2 + $0xe0] sm:$0xff]
        %v1675 = vld [vmem:[#allocation2 + $0xf0] sm:$0xff]
        %v1676 = vld [vmem:[#allocation2 + $0xf8] sm:$0xff]
        %v1677 = vld [vmem:[#allocation2 + $0x108] sm:$0xff]
        %v1678 = vld [vmem:[#allocation2 + $0x110] sm:$0xff]
        %v1679 = vld [vmem:[#allocation2 + $0x120] sm:$0xff]
        %v1680 = vld [vmem:[#allocation2 + $0x128] sm:$0xff]
        %v1681 = vld [vmem:[#allocation2 + $0x138] sm:$0xff]
        %v1682 = vld [vmem:[#allocation2 + $0x140] sm:$0xff]
        %v1683 = vld [vmem:[#allocation2 + $0x150] sm:$0xff]
        %v1684 = vld [vmem:[#allocation2 + $0x158] sm:$0xff]
        %v1685 = vld [vmem:[#allocation2 + $0x168] sm:$0xff]
        %v1686 = vld [vmem:[#allocation2 + $0x170] sm:$0xff]
        %v1687 = vld [vmem:[#allocation2 + $0x180] sm:$0xff]
        %v1688 = vld [vmem:[#allocation2 + $0x188] sm:$0xff]
        %v1689 = vld [vmem:[#allocation2 + $0x198] sm:$0xff]
        %v1690 = vld [vmem:[#allocation2 + $0x1a0] sm:$0xff]
        %v1691 = vld [vmem:[#allocation2 + $0x1b0] sm:$0xff]
        %v1692 = vld [vmem:[#allocation2 + $0x1b8] sm:$0xff]
        %v1693 = vld [vmem:[#allocation2 + $0x1c8] sm:$0xff]
        %v1694 = vld [vmem:[#allocation2 + $0x1d0] sm:$0xff]
        %v1695 = vld [vmem:[#allocation2 + $0x1e0] sm:$0xff]
        %v1696 = vld [vmem:[#allocation2 + $0x1e8] sm:$0xff]
        %v1697 = vld [vmem:[#allocation2 + $0x1f8] sm:$0xff]
        %v1698 = vld [vmem:[#allocation2 + $0x200] sm:$0xff]
        %v1699 = vld [vmem:[#allocation2 + $0x210] sm:$0xff]
        %v1700 = vld [vmem:[#allocation2 + $0x218] sm:$0xff]
        %v1701 = vld [vmem:[#allocation2 + $0x228] sm:$0xff]
        %v1702 = vld [vmem:[#allocation2 + $0x230] sm:$0xff]
        %v1703 = vld [vmem:[#allocation2 + $0x240] sm:$0xff]
        %v1704 = vld [vmem:[#allocation2 + $0x248] sm:$0xff]
        %v1705 = vld [vmem:[#allocation2 + $0x258] sm:$0xff]
        %v1706 = vld [vmem:[#allocation2 + $0x260] sm:$0xff]
        %v1707 = vld [vmem:[#allocation2 + $0x270] sm:$0xff]
        %v1708 = vld [vmem:[#allocation2 + $0x278] sm:$0xff]
        %v1709 = vld [vmem:[#allocation2 + $0x288] sm:$0xff]
        %v1710 = vld [vmem:[#allocation2 + $0x290] sm:$0xff]
        %v1711 = vld [vmem:[#allocation2 + $0x2a0] sm:$0xff]
        %v1712 = vld [vmem:[#allocation2 + $0x2a8] sm:$0xff]
        %v1713 = vld [vmem:[#allocation2 + $0x2b8] sm:$0xff]
        %v1714 = vld [vmem:[#allocation2 + $0x2c0] sm:$0xff]
        %v1715 = vld [vmem:[#allocation2 + $0x2d0] sm:$0xff]
        %v1716 = vld [vmem:[#allocation2 + $0x2d8] sm:$0xff]
        %v1717 = vld [vmem:[#allocation2 + $0x2e8] sm:$0xff]
        %v1718 = vld [vmem:[#allocation2 + $0x2f0] sm:$0xff]
        %v1719 = vld [vmem:[#allocation2 + $0x300] sm:$0xff]
        %v1720 = vld [vmem:[#allocation2 + $0x308] sm:$0xff]
        %v1721 = vld [vmem:[#allocation2 + $0x318] sm:$0xff]
        %v1722 = vld [vmem:[#allocation2 + $0x320] sm:$0xff]
        %v1723 = vld [vmem:[#allocation2 + $0x330] sm:$0xff]
        %v1724 = vld [vmem:[#allocation2 + $0x338] sm:$0xff]
        %v1725 = vld [vmem:[#allocation2 + $0x348] sm:$0xff]
        %v1726 = vld [vmem:[#allocation2 + $0x350] sm:$0xff]
        %v1727 = vlaneseq
        %v1728 = vshrl.u32 %v1727, 7
        %v1729 = vsub.s32 0, %v1728
        %v1730 = vrot.slane %v1653, %v1729
        %v1731 = vmul.f32 %v1655, %v1730
        %v1732 = vmul.f32 %v1656, %v1730
        %v1733 = vmul.f32 %v1657, %v1730
        %v1734 = vmul.f32 %v1658, %v1730
        %v1735 = vmul.f32 %v1659, %v1730
        %v1736 = vmul.f32 %v1660, %v1730
        %v1737 = vmul.f32 %v1661, %v1730
        %v1738 = vmul.f32 %v1662, %v1730
        %v1739 = vmul.f32 %v1663, %v1730
        %v1740 = vmul.f32 %v1664, %v1730
        %v1741 = vmul.f32 %v1665, %v1730
        %v1742 = vmul.f32 %v1666, %v1730
        %v1743 = vmul.f32 %v1667, %v1730
        %v1744 = vmul.f32 %v1668, %v1730
        %v1745 = vmul.f32 %v1669, %v1730
        %v1746 = vmul.f32 %v1670, %v1730
        %v1747 = vmul.f32 %v1671, %v1730
        %v1748 = vmul.f32 %v1672, %v1730
        %v1749 = vmul.f32 %v1673, %v1730
        %v1750 = vmul.f32 %v1674, %v1730
        %v1751 = vmul.f32 %v1675, %v1730
        %v1752 = vmul.f32 %v1676, %v1730
        %v1753 = vmul.f32 %v1677, %v1730
        %v1754 = vmul.f32 %v1678, %v1730
        %v1755 = vmul.f32 %v1679, %v1730
        %v1756 = vmul.f32 %v1680, %v1730
        %v1757 = vmul.f32 %v1681, %v1730
        %v1758 = vmul.f32 %v1682, %v1730
        %v1759 = vmul.f32 %v1683, %v1730
        %v1760 = vmul.f32 %v1684, %v1730
        %v1761 = vmul.f32 %v1685, %v1730
        %v1762 = vmul.f32 %v1686, %v1730
        %v1763 = vmul.f32 %v1691, %v1730
        %v1764 = vmul.f32 %v1692, %v1730
        %v1765 = vmul.f32 %v1693, %v1730
        %v1766 = vmul.f32 %v1694, %v1730
        %v1767 = vmul.f32 %v1695, %v1730
        %v1768 = vmul.f32 %v1696, %v1730
        %v1769 = vmul.f32 %v1697, %v1730
        %v1770 = vmul.f32 %v1698, %v1730
        %v1771 = vmul.f32 %v1699, %v1730
        %v1772 = vmul.f32 %v1700, %v1730
        %v1773 = vmul.f32 %v1701, %v1730
        %v1774 = vmul.f32 %v1702, %v1730
        %v1775 = vmul.f32 %v1703, %v1730
        %v1776 = vmul.f32 %v1704, %v1730
        %v1777 = vmul.f32 %v1705, %v1730
        %v1778 = vmul.f32 %v1706, %v1730
        %v1779 = vmul.f32 %v1707, %v1730
        %v1780 = vmul.f32 %v1708, %v1730
        %v1781 = vmul.f32 %v1709, %v1730
        %v1782 = vmul.f32 %v1710, %v1730
        %v1783 = vmul.f32 %v1711, %v1730
        %v1784 = vmul.f32 %v1712, %v1730
        %v1785 = vmul.f32 %v1713, %v1730
        %v1786 = vmul.f32 %v1714, %v1730
        %v1787 = vmul.f32 %v1715, %v1730
        %v1788 = vmul.f32 %v1716, %v1730
        %v1789 = vmul.f32 %v1717, %v1730
        %v1790 = vmul.f32 %v1718, %v1730
        %v1791 = vmul.f32 %v1719, %v1730
        %v1792 = vmul.f32 %v1720, %v1730
        %v1793 = vmul.f32 %v1721, %v1730
        %v1794 = vmul.f32 %v1722, %v1730
        %v1795 = vadd.f32 %v1731, 0.0
        %v1796 = vadd.f32 %v1732, 0.0
        %v1797 = vadd.f32 %v1733, 0.0
        %v1798 = vadd.f32 %v1734, 0.0
        %v1799 = vadd.f32 %v1735, 0.0
        %v1800 = vadd.f32 %v1736, 0.0
        %v1801 = vadd.f32 %v1737, 0.0
        %v1802 = vadd.f32 %v1738, 0.0
        %v1803 = vadd.f32 %v1739, 0.0
        %v1804 = vadd.f32 %v1740, 0.0
        %v1805 = vadd.f32 %v1741, 0.0
        %v1806 = vadd.f32 %v1742, 0.0
        %v1807 = vadd.f32 %v1743, 0.0
        %v1808 = vadd.f32 %v1744, 0.0
        %v1809 = vadd.f32 %v1745, 0.0
        %v1810 = vadd.f32 %v1746, 0.0
        %v1811 = vadd.f32 %v1747, 0.0
        %v1812 = vadd.f32 %v1748, 0.0
        %v1813 = vadd.f32 %v1749, 0.0
        %v1814 = vadd.f32 %v1750, 0.0
        %v1815 = vadd.f32 %v1751, 0.0
        %v1816 = vadd.f32 %v1752, 0.0
        %v1817 = vadd.f32 %v1753, 0.0
        %v1818 = vadd.f32 %v1754, 0.0
        %v1819 = vadd.f32 %v1755, 0.0
        %v1820 = vadd.f32 %v1756, 0.0
        %v1821 = vadd.f32 %v1757, 0.0
        %v1822 = vadd.f32 %v1758, 0.0
        %v1823 = vadd.f32 %v1759, 0.0
        %v1824 = vadd.f32 %v1760, 0.0
        %v1825 = vadd.f32 %v1761, 0.0
        %v1826 = vadd.f32 %v1762, 0.0
        %v1827 = vadd.f32 %v1763, 0.0
        %v1828 = vadd.f32 %v1764, 0.0
        %v1829 = vadd.f32 %v1765, 0.0
        %v1830 = vadd.f32 %v1766, 0.0
        %v1831 = vadd.f32 %v1767, 0.0
        %v1832 = vadd.f32 %v1768, 0.0
        %v1833 = vadd.f32 %v1769, 0.0
        %v1834 = vadd.f32 %v1770, 0.0
        %v1835 = vadd.f32 %v1771, 0.0
        %v1836 = vadd.f32 %v1772, 0.0
        %v1837 = vadd.f32 %v1773, 0.0
        %v1838 = vadd.f32 %v1774, 0.0
        %v1839 = vadd.f32 %v1775, 0.0
        %v1840 = vadd.f32 %v1776, 0.0
        %v1841 = vadd.f32 %v1777, 0.0
        %v1842 = vadd.f32 %v1778, 0.0
        %v1843 = vadd.f32 %v1779, 0.0
        %v1844 = vadd.f32 %v1780, 0.0
        %v1845 = vadd.f32 %v1781, 0.0
        %v1846 = vadd.f32 %v1782, 0.0
        %v1847 = vadd.f32 %v1783, 0.0
        %v1848 = vadd.f32 %v1784, 0.0
        %v1849 = vadd.f32 %v1785, 0.0
        %v1850 = vadd.f32 %v1786, 0.0
        %v1851 = vadd.f32 %v1787, 0.0
        %v1852 = vadd.f32 %v1788, 0.0
        %v1853 = vadd.f32 %v1789, 0.0
        %v1854 = vadd.f32 %v1790, 0.0
        %v1855 = vadd.f32 %v1791, 0.0
        %v1856 = vadd.f32 %v1792, 0.0
        %v1857 = vadd.f32 %v1793, 0.0
        %v1858 = vadd.f32 %v1794, 0.0
        %v1859 = vlaneseq
        %v1860 = vshrl.u32 %v1859, 7
        %v1861 = vsub.s32 3, %v1860
        %v1862 = vrot.slane %v1653, %v1861
        %v1863 = vmul.f32 %v1657, %v1862
        %v1864 = vmul.f32 %v1658, %v1862
        %v1865 = vmul.f32 %v1659, %v1862
        %v1866 = vmul.f32 %v1660, %v1862
        %v1867 = vmul.f32 %v1661, %v1862
        %v1868 = vmul.f32 %v1662, %v1862
        %v1869 = vmul.f32 %v1663, %v1862
        %v1870 = vmul.f32 %v1664, %v1862
        %v1871 = vmul.f32 %v1665, %v1862
        %v1872 = vmul.f32 %v1666, %v1862
        %v1873 = vmul.f32 %v1667, %v1862
        %v1874 = vmul.f32 %v1668, %v1862
        %v1875 = vmul.f32 %v1669, %v1862
        %v1876 = vmul.f32 %v1670, %v1862
        %v1877 = vmul.f32 %v1671, %v1862
        %v1878 = vmul.f32 %v1672, %v1862
        %v1879 = vmul.f32 %v1673, %v1862
        %v1880 = vmul.f32 %v1674, %v1862
        %v1881 = vmul.f32 %v1675, %v1862
        %v1882 = vmul.f32 %v1676, %v1862
        %v1883 = vmul.f32 %v1677, %v1862
        %v1884 = vmul.f32 %v1678, %v1862
        %v1885 = vmul.f32 %v1679, %v1862
        %v1886 = vmul.f32 %v1680, %v1862
        %v1887 = vmul.f32 %v1681, %v1862
        %v1888 = vmul.f32 %v1682, %v1862
        %v1889 = vmul.f32 %v1683, %v1862
        %v1890 = vmul.f32 %v1684, %v1862
        %v1891 = vmul.f32 %v1685, %v1862
        %v1892 = vmul.f32 %v1686, %v1862
        %v1893 = vmul.f32 %v1687, %v1862
        %v1894 = vmul.f32 %v1688, %v1862
        %v1895 = vmul.f32 %v1693, %v1862
        %v1896 = vmul.f32 %v1694, %v1862
        %v1897 = vmul.f32 %v1695, %v1862
        %v1898 = vmul.f32 %v1696, %v1862
        %v1899 = vmul.f32 %v1697, %v1862
        %v1900 = vmul.f32 %v1698, %v1862
        %v1901 = vmul.f32 %v1699, %v1862
        %v1902 = vmul.f32 %v1700, %v1862
        %v1903 = vmul.f32 %v1701, %v1862
        %v1904 = vmul.f32 %v1702, %v1862
        %v1905 = vmul.f32 %v1703, %v1862
        %v1906 = vmul.f32 %v1704, %v1862
        %v1907 = vmul.f32 %v1705, %v1862
        %v1908 = vmul.f32 %v1706, %v1862
        %v1909 = vmul.f32 %v1707, %v1862
        %v1910 = vmul.f32 %v1708, %v1862
        %v1911 = vmul.f32 %v1709, %v1862
        %v1912 = vmul.f32 %v1710, %v1862
        %v1913 = vmul.f32 %v1711, %v1862
        %v1914 = vmul.f32 %v1712, %v1862
        %v1915 = vmul.f32 %v1713, %v1862
        %v1916 = vmul.f32 %v1714, %v1862
        %v1917 = vmul.f32 %v1715, %v1862
        %v1918 = vmul.f32 %v1716, %v1862
        %v1919 = vmul.f32 %v1717, %v1862
        %v1920 = vmul.f32 %v1718, %v1862
        %v1921 = vmul.f32 %v1719, %v1862
        %v1922 = vmul.f32 %v1720, %v1862
        %v1923 = vmul.f32 %v1721, %v1862
        %v1924 = vmul.f32 %v1722, %v1862
        %v1925 = vmul.f32 %v1723, %v1862
        %v1926 = vmul.f32 %v1724, %v1862
        %v1927 = vadd.f32 %v1795, %v1863
        %v1928 = vadd.f32 %v1796, %v1864
        %v1929 = vadd.f32 %v1797, %v1865
        %v1930 = vadd.f32 %v1798, %v1866
        %v1931 = vadd.f32 %v1799, %v1867
        %v1932 = vadd.f32 %v1800, %v1868
        %v1933 = vadd.f32 %v1801, %v1869
        %v1934 = vadd.f32 %v1802, %v1870
        %v1935 = vadd.f32 %v1803, %v1871
        %v1936 = vadd.f32 %v1804, %v1872
        %v1937 = vadd.f32 %v1805, %v1873
        %v1938 = vadd.f32 %v1806, %v1874
        %v1939 = vadd.f32 %v1807, %v1875
        %v1940 = vadd.f32 %v1808, %v1876
        %v1941 = vadd.f32 %v1809, %v1877
        %v1942 = vadd.f32 %v1810, %v1878
        %v1943 = vadd.f32 %v1811, %v1879
        %v1944 = vadd.f32 %v1812, %v1880
        %v1945 = vadd.f32 %v1813, %v1881
        %v1946 = vadd.f32 %v1814, %v1882
        %v1947 = vadd.f32 %v1815, %v1883
        %v1948 = vadd.f32 %v1816, %v1884
        %v1949 = vadd.f32 %v1817, %v1885
        %v1950 = vadd.f32 %v1818, %v1886
        %v1951 = vadd.f32 %v1819, %v1887
        %v1952 = vadd.f32 %v1820, %v1888
        %v1953 = vadd.f32 %v1821, %v1889
        %v1954 = vadd.f32 %v1822, %v1890
        %v1955 = vadd.f32 %v1823, %v1891
        %v1956 = vadd.f32 %v1824, %v1892
        %v1957 = vadd.f32 %v1825, %v1893
        %v1958 = vadd.f32 %v1826, %v1894
        %v1959 = vadd.f32 %v1827, %v1895
        %v1960 = vadd.f32 %v1828, %v1896
        %v1961 = vadd.f32 %v1829, %v1897
        %v1962 = vadd.f32 %v1830, %v1898
        %v1963 = vadd.f32 %v1831, %v1899
        %v1964 = vadd.f32 %v1832, %v1900
        %v1965 = vadd.f32 %v1833, %v1901
        %v1966 = vadd.f32 %v1834, %v1902
        %v1967 = vadd.f32 %v1835, %v1903
        %v1968 = vadd.f32 %v1836, %v1904
        %v1969 = vadd.f32 %v1837, %v1905
        %v1970 = vadd.f32 %v1838, %v1906
        %v1971 = vadd.f32 %v1839, %v1907
        %v1972 = vadd.f32 %v1840, %v1908
        %v1973 = vadd.f32 %v1841, %v1909
        %v1974 = vadd.f32 %v1842, %v1910
        %v1975 = vadd.f32 %v1843, %v1911
        %v1976 = vadd.f32 %v1844, %v1912
        %v1977 = vadd.f32 %v1845, %v1913
        %v1978 = vadd.f32 %v1846, %v1914
        %v1979 = vadd.f32 %v1847, %v1915
        %v1980 = vadd.f32 %v1848, %v1916
        %v1981 = vadd.f32 %v1849, %v1917
        %v1982 = vadd.f32 %v1850, %v1918
        %v1983 = vadd.f32 %v1851, %v1919
        %v1984 = vadd.f32 %v1852, %v1920
        %v1985 = vadd.f32 %v1853, %v1921
        %v1986 = vadd.f32 %v1854, %v1922
        %v1987 = vadd.f32 %v1855, %v1923
        %v1988 = vadd.f32 %v1856, %v1924
        %v1989 = vadd.f32 %v1857, %v1925
        %v1990 = vadd.f32 %v1858, %v1926
        %v1991 = vlaneseq
        %v1992 = vshrl.u32 %v1991, 7
        %v1993 = vsub.s32 6, %v1992
        %v1994 = vrot.slane %v1653, %v1993
        %v1995 = vmul.f32 %v1659, %v1994
        %v1996 = vmul.f32 %v1660, %v1994
        %v1997 = vmul.f32 %v1661, %v1994
        %v1998 = vmul.f32 %v1662, %v1994
        %v1999 = vmul.f32 %v1663, %v1994
        %v2000 = vmul.f32 %v1664, %v1994
        %v2001 = vmul.f32 %v1665, %v1994
        %v2002 = vmul.f32 %v1666, %v1994
        %v2003 = vmul.f32 %v1667, %v1994
        %v2004 = vmul.f32 %v1668, %v1994
        %v2005 = vmul.f32 %v1669, %v1994
        %v2006 = vmul.f32 %v1670, %v1994
        %v2007 = vmul.f32 %v1671, %v1994
        %v2008 = vmul.f32 %v1672, %v1994
        %v2009 = vmul.f32 %v1673, %v1994
        %v2010 = vmul.f32 %v1674, %v1994
        %v2011 = vmul.f32 %v1675, %v1994
        %v2012 = vmul.f32 %v1676, %v1994
        %v2013 = vmul.f32 %v1677, %v1994
        %v2014 = vmul.f32 %v1678, %v1994
        %v2015 = vmul.f32 %v1679, %v1994
        %v2016 = vmul.f32 %v1680, %v1994
        %v2017 = vmul.f32 %v1681, %v1994
        %v2018 = vmul.f32 %v1682, %v1994
        %v2019 = vmul.f32 %v1683, %v1994
        %v2020 = vmul.f32 %v1684, %v1994
        %v2021 = vmul.f32 %v1685, %v1994
        %v2022 = vmul.f32 %v1686, %v1994
        %v2023 = vmul.f32 %v1687, %v1994
        %v2024 = vmul.f32 %v1688, %v1994
        %v2025 = vmul.f32 %v1689, %v1994
        %v2026 = vmul.f32 %v1690, %v1994
        %v2027 = vmul.f32 %v1695, %v1994
        %v2028 = vmul.f32 %v1696, %v1994
        %v2029 = vmul.f32 %v1697, %v1994
        %v2030 = vmul.f32 %v1698, %v1994
        %v2031 = vmul.f32 %v1699, %v1994
        %v2032 = vmul.f32 %v1700, %v1994
        %v2033 = vmul.f32 %v1701, %v1994
        %v2034 = vmul.f32 %v1702, %v1994
        %v2035 = vmul.f32 %v1703, %v1994
        %v2036 = vmul.f32 %v1704, %v1994
        %v2037 = vmul.f32 %v1705, %v1994
        %v2038 = vmul.f32 %v1706, %v1994
        %v2039 = vmul.f32 %v1707, %v1994
        %v2040 = vmul.f32 %v1708, %v1994
        %v2041 = vmul.f32 %v1709, %v1994
        %v2042 = vmul.f32 %v1710, %v1994
        %v2043 = vmul.f32 %v1711, %v1994
        %v2044 = vmul.f32 %v1712, %v1994
        %v2045 = vmul.f32 %v1713, %v1994
        %v2046 = vmul.f32 %v1714, %v1994
        %v2047 = vmul.f32 %v1715, %v1994
        %v2048 = vmul.f32 %v1716, %v1994
        %v2049 = vmul.f32 %v1717, %v1994
        %v2050 = vmul.f32 %v1718, %v1994
        %v2051 = vmul.f32 %v1719, %v1994
        %v2052 = vmul.f32 %v1720, %v1994
        %v2053 = vmul.f32 %v1721, %v1994
        %v2054 = vmul.f32 %v1722, %v1994
        %v2055 = vmul.f32 %v1723, %v1994
        %v2056 = vmul.f32 %v1724, %v1994
        %v2057 = vmul.f32 %v1725, %v1994
        %v2058 = vmul.f32 %v1726, %v1994
        %v2059 = vadd.f32 %v1927, %v1995
        %v2060 = vadd.f32 %v1928, %v1996
        %v2061 = vadd.f32 %v1929, %v1997
        %v2062 = vadd.f32 %v1930, %v1998
        %v2063 = vadd.f32 %v1931, %v1999
        %v2064 = vadd.f32 %v1932, %v2000
        %v2065 = vadd.f32 %v1933, %v2001
        %v2066 = vadd.f32 %v1934, %v2002
        %v2067 = vadd.f32 %v1935, %v2003
        %v2068 = vadd.f32 %v1936, %v2004
        %v2069 = vadd.f32 %v1937, %v2005
        %v2070 = vadd.f32 %v1938, %v2006
        %v2071 = vadd.f32 %v1939, %v2007
        %v2072 = vadd.f32 %v1940, %v2008
        %v2073 = vadd.f32 %v1941, %v2009
        %v2074 = vadd.f32 %v1942, %v2010
        %v2075 = vadd.f32 %v1943, %v2011
        %v2076 = vadd.f32 %v1944, %v2012
        %v2077 = vadd.f32 %v1945, %v2013
        %v2078 = vadd.f32 %v1946, %v2014
        %v2079 = vadd.f32 %v1947, %v2015
        %v2080 = vadd.f32 %v1948, %v2016
        %v2081 = vadd.f32 %v1949, %v2017
        %v2082 = vadd.f32 %v1950, %v2018
        %v2083 = vadd.f32 %v1951, %v2019
        %v2084 = vadd.f32 %v1952, %v2020
        %v2085 = vadd.f32 %v1953, %v2021
        %v2086 = vadd.f32 %v1954, %v2022
        %v2087 = vadd.f32 %v1955, %v2023
        %v2088 = vadd.f32 %v1956, %v2024
        %v2089 = vadd.f32 %v1957, %v2025
        %v2090 = vadd.f32 %v1958, %v2026
        %v2091 = vadd.f32 %v1959, %v2027
        %v2092 = vadd.f32 %v1960, %v2028
        %v2093 = vadd.f32 %v1961, %v2029
        %v2094 = vadd.f32 %v1962, %v2030
        %v2095 = vadd.f32 %v1963, %v2031
        %v2096 = vadd.f32 %v1964, %v2032
        %v2097 = vadd.f32 %v1965, %v2033
        %v2098 = vadd.f32 %v1966, %v2034
        %v2099 = vadd.f32 %v1967, %v2035
        %v2100 = vadd.f32 %v1968, %v2036
        %v2101 = vadd.f32 %v1969, %v2037
        %v2102 = vadd.f32 %v1970, %v2038
        %v2103 = vadd.f32 %v1971, %v2039
        %v2104 = vadd.f32 %v1972, %v2040
        %v2105 = vadd.f32 %v1973, %v2041
        %v2106 = vadd.f32 %v1974, %v2042
        %v2107 = vadd.f32 %v1975, %v2043
        %v2108 = vadd.f32 %v1976, %v2044
        %v2109 = vadd.f32 %v1977, %v2045
        %v2110 = vadd.f32 %v1978, %v2046
        %v2111 = vadd.f32 %v1979, %v2047
        %v2112 = vadd.f32 %v1980, %v2048
        %v2113 = vadd.f32 %v1981, %v2049
        %v2114 = vadd.f32 %v1982, %v2050
        %v2115 = vadd.f32 %v1983, %v2051
        %v2116 = vadd.f32 %v1984, %v2052
        %v2117 = vadd.f32 %v1985, %v2053
        %v2118 = vadd.f32 %v1986, %v2054
        %v2119 = vadd.f32 %v1987, %v2055
        %v2120 = vadd.f32 %v1988, %v2056
        %v2121 = vadd.f32 %v1989, %v2057
        %v2122 = vadd.f32 %v1990, %v2058
        %v2123 = vld [vmem:[#allocation2 + $0x1] sm:$0xff]
        %v2124 = vld [vmem:[#allocation2 + $0x9] sm:$0xff]
        %v2125 = vld [vmem:[#allocation2 + $0x19] sm:$0xff]
        %v2126 = vld [vmem:[#allocation2 + $0x21] sm:$0xff]
        %v2127 = vld [vmem:[#allocation2 + $0x31] sm:$0xff]
        %v2128 = vld [vmem:[#allocation2 + $0x39] sm:$0xff]
        %v2129 = vld [vmem:[#allocation2 + $0x49] sm:$0xff]
        %v2130 = vld [vmem:[#allocation2 + $0x51] sm:$0xff]
        %v2131 = vld [vmem:[#allocation2 + $0x61] sm:$0xff]
        %v2132 = vld [vmem:[#allocation2 + $0x69] sm:$0xff]
        %v2133 = vld [vmem:[#allocation2 + $0x79] sm:$0xff]
        %v2134 = vld [vmem:[#allocation2 + $0x81] sm:$0xff]
        %v2135 = vld [vmem:[#allocation2 + $0x91] sm:$0xff]
        %v2136 = vld [vmem:[#allocation2 + $0x99] sm:$0xff]
        %v2137 = vld [vmem:[#allocation2 + $0xa9] sm:$0xff]
        %v2138 = vld [vmem:[#allocation2 + $0xb1] sm:$0xff]
        %v2139 = vld [vmem:[#allocation2 + $0xc1] sm:$0xff]
        %v2140 = vld [vmem:[#allocation2 + $0xc9] sm:$0xff]
        %v2141 = vld [vmem:[#allocation2 + $0xd9] sm:$0xff]
        %v2142 = vld [vmem:[#allocation2 + $0xe1] sm:$0xff]
        %v2143 = vld [vmem:[#allocation2 + $0xf1] sm:$0xff]
        %v2144 = vld [vmem:[#allocation2 + $0xf9] sm:$0xff]
        %v2145 = vld [vmem:[#allocation2 + $0x109] sm:$0xff]
        %v2146 = vld [vmem:[#allocation2 + $0x111] sm:$0xff]
        %v2147 = vld [vmem:[#allocation2 + $0x121] sm:$0xff]
        %v2148 = vld [vmem:[#allocation2 + $0x129] sm:$0xff]
        %v2149 = vld [vmem:[#allocation2 + $0x139] sm:$0xff]
        %v2150 = vld [vmem:[#allocation2 + $0x141] sm:$0xff]
        %v2151 = vld [vmem:[#allocation2 + $0x151] sm:$0xff]
        %v2152 = vld [vmem:[#allocation2 + $0x159] sm:$0xff]
        %v2153 = vld [vmem:[#allocation2 + $0x169] sm:$0xff]
        %v2154 = vld [vmem:[#allocation2 + $0x171] sm:$0xff]
        %v2155 = vld [vmem:[#allocation2 + $0x181] sm:$0xff]
        %v2156 = vld [vmem:[#allocation2 + $0x189] sm:$0xff]
        %v2157 = vld [vmem:[#allocation2 + $0x199] sm:$0xff]
        %v2158 = vld [vmem:[#allocation2 + $0x1a1] sm:$0xff]
        %v2159 = vld [vmem:[#allocation2 + $0x1b1] sm:$0xff]
        %v2160 = vld [vmem:[#allocation2 + $0x1b9] sm:$0xff]
        %v2161 = vld [vmem:[#allocation2 + $0x1c9] sm:$0xff]
        %v2162 = vld [vmem:[#allocation2 + $0x1d1] sm:$0xff]
        %v2163 = vld [vmem:[#allocation2 + $0x1e1] sm:$0xff]
        %v2164 = vld [vmem:[#allocation2 + $0x1e9] sm:$0xff]
        %v2165 = vld [vmem:[#allocation2 + $0x1f9] sm:$0xff]
        %v2166 = vld [vmem:[#allocation2 + $0x201] sm:$0xff]
        %v2167 = vld [vmem:[#allocation2 + $0x211] sm:$0xff]
        %v2168 = vld [vmem:[#allocation2 + $0x219] sm:$0xff]
        %v2169 = vld [vmem:[#allocation2 + $0x229] sm:$0xff]
        %v2170 = vld [vmem:[#allocation2 + $0x231] sm:$0xff]
        %v2171 = vld [vmem:[#allocation2 + $0x241] sm:$0xff]
        %v2172 = vld [vmem:[#allocation2 + $0x249] sm:$0xff]
        %v2173 = vld [vmem:[#allocation2 + $0x259] sm:$0xff]
        %v2174 = vld [vmem:[#allocation2 + $0x261] sm:$0xff]
        %v2175 = vld [vmem:[#allocation2 + $0x271] sm:$0xff]
        %v2176 = vld [vmem:[#allocation2 + $0x279] sm:$0xff]
        %v2177 = vld [vmem:[#allocation2 + $0x289] sm:$0xff]
        %v2178 = vld [vmem:[#allocation2 + $0x291] sm:$0xff]
        %v2179 = vld [vmem:[#allocation2 + $0x2a1] sm:$0xff]
        %v2180 = vld [vmem:[#allocation2 + $0x2a9] sm:$0xff]
        %v2181 = vld [vmem:[#allocation2 + $0x2b9] sm:$0xff]
        %v2182 = vld [vmem:[#allocation2 + $0x2c1] sm:$0xff]
        %v2183 = vld [vmem:[#allocation2 + $0x2d1] sm:$0xff]
        %v2184 = vld [vmem:[#allocation2 + $0x2d9] sm:$0xff]
        %v2185 = vld [vmem:[#allocation2 + $0x2e9] sm:$0xff]
        %v2186 = vld [vmem:[#allocation2 + $0x2f1] sm:$0xff]
        %v2187 = vld [vmem:[#allocation2 + $0x301] sm:$0xff]
        %v2188 = vld [vmem:[#allocation2 + $0x309] sm:$0xff]
        %v2189 = vld [vmem:[#allocation2 + $0x319] sm:$0xff]
        %v2190 = vld [vmem:[#allocation2 + $0x321] sm:$0xff]
        %v2191 = vld [vmem:[#allocation2 + $0x331] sm:$0xff]
        %v2192 = vld [vmem:[#allocation2 + $0x339] sm:$0xff]
        %v2193 = vld [vmem:[#allocation2 + $0x349] sm:$0xff]
        %v2194 = vld [vmem:[#allocation2 + $0x351] sm:$0xff]
        %v2195 = vlaneseq
        %v2196 = vshrl.u32 %v2195, 7
        %v2197 = vsub.s32 1, %v2196
        %v2198 = vrot.slane %v1653, %v2197
        %v2199 = vmul.f32 %v2123, %v2198
        %v2200 = vmul.f32 %v2124, %v2198
        %v2201 = vmul.f32 %v2125, %v2198
        %v2202 = vmul.f32 %v2126, %v2198
        %v2203 = vmul.f32 %v2127, %v2198
        %v2204 = vmul.f32 %v2128, %v2198
        %v2205 = vmul.f32 %v2129, %v2198
        %v2206 = vmul.f32 %v2130, %v2198
        %v2207 = vmul.f32 %v2131, %v2198
        %v2208 = vmul.f32 %v2132, %v2198
        %v2209 = vmul.f32 %v2133, %v2198
        %v2210 = vmul.f32 %v2134, %v2198
        %v2211 = vmul.f32 %v2135, %v2198
        %v2212 = vmul.f32 %v2136, %v2198
        %v2213 = vmul.f32 %v2137, %v2198
        %v2214 = vmul.f32 %v2138, %v2198
        %v2215 = vmul.f32 %v2139, %v2198
        %v2216 = vmul.f32 %v2140, %v2198
        %v2217 = vmul.f32 %v2141, %v2198
        %v2218 = vmul.f32 %v2142, %v2198
        %v2219 = vmul.f32 %v2143, %v2198
        %v2220 = vmul.f32 %v2144, %v2198
        %v2221 = vmul.f32 %v2145, %v2198
        %v2222 = vmul.f32 %v2146, %v2198
        %v2223 = vmul.f32 %v2147, %v2198
        %v2224 = vmul.f32 %v2148, %v2198
        %v2225 = vmul.f32 %v2149, %v2198
        %v2226 = vmul.f32 %v2150, %v2198
        %v2227 = vmul.f32 %v2151, %v2198
        %v2228 = vmul.f32 %v2152, %v2198
        %v2229 = vmul.f32 %v2153, %v2198
        %v2230 = vmul.f32 %v2154, %v2198
        %v2231 = vmul.f32 %v2159, %v2198
        %v2232 = vmul.f32 %v2160, %v2198
        %v2233 = vmul.f32 %v2161, %v2198
        %v2234 = vmul.f32 %v2162, %v2198
        %v2235 = vmul.f32 %v2163, %v2198
        %v2236 = vmul.f32 %v2164, %v2198
        %v2237 = vmul.f32 %v2165, %v2198
        %v2238 = vmul.f32 %v2166, %v2198
        %v2239 = vmul.f32 %v2167, %v2198
        %v2240 = vmul.f32 %v2168, %v2198
        %v2241 = vmul.f32 %v2169, %v2198
        %v2242 = vmul.f32 %v2170, %v2198
        %v2243 = vmul.f32 %v2171, %v2198
        %v2244 = vmul.f32 %v2172, %v2198
        %v2245 = vmul.f32 %v2173, %v2198
        %v2246 = vmul.f32 %v2174, %v2198
        %v2247 = vmul.f32 %v2175, %v2198
        %v2248 = vmul.f32 %v2176, %v2198
        %v2249 = vmul.f32 %v2177, %v2198
        %v2250 = vmul.f32 %v2178, %v2198
        %v2251 = vmul.f32 %v2179, %v2198
        %v2252 = vmul.f32 %v2180, %v2198
        %v2253 = vmul.f32 %v2181, %v2198
        %v2254 = vmul.f32 %v2182, %v2198
        %v2255 = vmul.f32 %v2183, %v2198
        %v2256 = vmul.f32 %v2184, %v2198
        %v2257 = vmul.f32 %v2185, %v2198
        %v2258 = vmul.f32 %v2186, %v2198
        %v2259 = vmul.f32 %v2187, %v2198
        %v2260 = vmul.f32 %v2188, %v2198
        %v2261 = vmul.f32 %v2189, %v2198
        %v2262 = vmul.f32 %v2190, %v2198
        %v2263 = vadd.f32 %v2059, %v2199
        %v2264 = vadd.f32 %v2060, %v2200
        %v2265 = vadd.f32 %v2061, %v2201
        %v2266 = vadd.f32 %v2062, %v2202
        %v2267 = vadd.f32 %v2063, %v2203
        %v2268 = vadd.f32 %v2064, %v2204
        %v2269 = vadd.f32 %v2065, %v2205
        %v2270 = vadd.f32 %v2066, %v2206
        %v2271 = vadd.f32 %v2067, %v2207
        %v2272 = vadd.f32 %v2068, %v2208
        %v2273 = vadd.f32 %v2069, %v2209
        %v2274 = vadd.f32 %v2070, %v2210
        %v2275 = vadd.f32 %v2071, %v2211
        %v2276 = vadd.f32 %v2072, %v2212
        %v2277 = vadd.f32 %v2073, %v2213
        %v2278 = vadd.f32 %v2074, %v2214
        %v2279 = vadd.f32 %v2075, %v2215
        %v2280 = vadd.f32 %v2076, %v2216
        %v2281 = vadd.f32 %v2077, %v2217
        %v2282 = vadd.f32 %v2078, %v2218
        %v2283 = vadd.f32 %v2079, %v2219
        %v2284 = vadd.f32 %v2080, %v2220
        %v2285 = vadd.f32 %v2081, %v2221
        %v2286 = vadd.f32 %v2082, %v2222
        %v2287 = vadd.f32 %v2083, %v2223
        %v2288 = vadd.f32 %v2084, %v2224
        %v2289 = vadd.f32 %v2085, %v2225
        %v2290 = vadd.f32 %v2086, %v2226
        %v2291 = vadd.f32 %v2087, %v2227
        %v2292 = vadd.f32 %v2088, %v2228
        %v2293 = vadd.f32 %v2089, %v2229
        %v2294 = vadd.f32 %v2090, %v2230
        %v2295 = vadd.f32 %v2091, %v2231
        %v2296 = vadd.f32 %v2092, %v2232
        %v2297 = vadd.f32 %v2093, %v2233
        %v2298 = vadd.f32 %v2094, %v2234
        %v2299 = vadd.f32 %v2095, %v2235
        %v2300 = vadd.f32 %v2096, %v2236
        %v2301 = vadd.f32 %v2097, %v2237
        %v2302 = vadd.f32 %v2098, %v2238
        %v2303 = vadd.f32 %v2099, %v2239
        %v2304 = vadd.f32 %v2100, %v2240
        %v2305 = vadd.f32 %v2101, %v2241
        %v2306 = vadd.f32 %v2102, %v2242
        %v2307 = vadd.f32 %v2103, %v2243
        %v2308 = vadd.f32 %v2104, %v2244
        %v2309 = vadd.f32 %v2105, %v2245
        %v2310 = vadd.f32 %v2106, %v2246
        %v2311 = vadd.f32 %v2107, %v2247
        %v2312 = vadd.f32 %v2108, %v2248
        %v2313 = vadd.f32 %v2109, %v2249
        %v2314 = vadd.f32 %v2110, %v2250
        %v2315 = vadd.f32 %v2111, %v2251
        %v2316 = vadd.f32 %v2112, %v2252
        %v2317 = vadd.f32 %v2113, %v2253
        %v2318 = vadd.f32 %v2114, %v2254
        %v2319 = vadd.f32 %v2115, %v2255
        %v2320 = vadd.f32 %v2116, %v2256
        %v2321 = vadd.f32 %v2117, %v2257
        %v2322 = vadd.f32 %v2118, %v2258
        %v2323 = vadd.f32 %v2119, %v2259
        %v2324 = vadd.f32 %v2120, %v2260
        %v2325 = vadd.f32 %v2121, %v2261
        %v2326 = vadd.f32 %v2122, %v2262
        %v2327 = vlaneseq
        %v2328 = vshrl.u32 %v2327, 7
        %v2329 = vsub.s32 4, %v2328
        %v2330 = vrot.slane %v1653, %v2329
        %v2331 = vmul.f32 %v2125, %v2330
        %v2332 = vmul.f32 %v2126, %v2330
        %v2333 = vmul.f32 %v2127, %v2330
        %v2334 = vmul.f32 %v2128, %v2330
        %v2335 = vmul.f32 %v2129, %v2330
        %v2336 = vmul.f32 %v2130, %v2330
        %v2337 = vmul.f32 %v2131, %v2330
        %v2338 = vmul.f32 %v2132, %v2330
        %v2339 = vmul.f32 %v2133, %v2330
        %v2340 = vmul.f32 %v2134, %v2330
        %v2341 = vmul.f32 %v2135, %v2330
        %v2342 = vmul.f32 %v2136, %v2330
        %v2343 = vmul.f32 %v2137, %v2330
        %v2344 = vmul.f32 %v2138, %v2330
        %v2345 = vmul.f32 %v2139, %v2330
        %v2346 = vmul.f32 %v2140, %v2330
        %v2347 = vmul.f32 %v2141, %v2330
        %v2348 = vmul.f32 %v2142, %v2330
        %v2349 = vmul.f32 %v2143, %v2330
        %v2350 = vmul.f32 %v2144, %v2330
        %v2351 = vmul.f32 %v2145, %v2330
        %v2352 = vmul.f32 %v2146, %v2330
        %v2353 = vmul.f32 %v2147, %v2330
        %v2354 = vmul.f32 %v2148, %v2330
        %v2355 = vmul.f32 %v2149, %v2330
        %v2356 = vmul.f32 %v2150, %v2330
        %v2357 = vmul.f32 %v2151, %v2330
        %v2358 = vmul.f32 %v2152, %v2330
        %v2359 = vmul.f32 %v2153, %v2330
        %v2360 = vmul.f32 %v2154, %v2330
        %v2361 = vmul.f32 %v2155, %v2330
        %v2362 = vmul.f32 %v2156, %v2330
        %v2363 = vmul.f32 %v2161, %v2330
        %v2364 = vmul.f32 %v2162, %v2330
        %v2365 = vmul.f32 %v2163, %v2330
        %v2366 = vmul.f32 %v2164, %v2330
        %v2367 = vmul.f32 %v2165, %v2330
        %v2368 = vmul.f32 %v2166, %v2330
        %v2369 = vmul.f32 %v2167, %v2330
        %v2370 = vmul.f32 %v2168, %v2330
        %v2371 = vmul.f32 %v2169, %v2330
        %v2372 = vmul.f32 %v2170, %v2330
        %v2373 = vmul.f32 %v2171, %v2330
        %v2374 = vmul.f32 %v2172, %v2330
        %v2375 = vmul.f32 %v2173, %v2330
        %v2376 = vmul.f32 %v2174, %v2330
        %v2377 = vmul.f32 %v2175, %v2330
        %v2378 = vmul.f32 %v2176, %v2330
        %v2379 = vmul.f32 %v2177, %v2330
        %v2380 = vmul.f32 %v2178, %v2330
        %v2381 = vmul.f32 %v2179, %v2330
        %v2382 = vmul.f32 %v2180, %v2330
        %v2383 = vmul.f32 %v2181, %v2330
        %v2384 = vmul.f32 %v2182, %v2330
        %v2385 = vmul.f32 %v2183, %v2330
        %v2386 = vmul.f32 %v2184, %v2330
        %v2387 = vmul.f32 %v2185, %v2330
        %v2388 = vmul.f32 %v2186, %v2330
        %v2389 = vmul.f32 %v2187, %v2330
        %v2390 = vmul.f32 %v2188, %v2330
        %v2391 = vmul.f32 %v2189, %v2330
        %v2392 = vmul.f32 %v2190, %v2330
        %v2393 = vmul.f32 %v2191, %v2330
        %v2394 = vmul.f32 %v2192, %v2330
        %v2395 = vadd.f32 %v2263, %v2331
        %v2396 = vadd.f32 %v2264, %v2332
        %v2397 = vadd.f32 %v2265, %v2333
        %v2398 = vadd.f32 %v2266, %v2334
        %v2399 = vadd.f32 %v2267, %v2335
        %v2400 = vadd.f32 %v2268, %v2336
        %v2401 = vadd.f32 %v2269, %v2337
        %v2402 = vadd.f32 %v2270, %v2338
        %v2403 = vadd.f32 %v2271, %v2339
        %v2404 = vadd.f32 %v2272, %v2340
        %v2405 = vadd.f32 %v2273, %v2341
        %v2406 = vadd.f32 %v2274, %v2342
        %v2407 = vadd.f32 %v2275, %v2343
        %v2408 = vadd.f32 %v2276, %v2344
        %v2409 = vadd.f32 %v2277, %v2345
        %v2410 = vadd.f32 %v2278, %v2346
        %v2411 = vadd.f32 %v2279, %v2347
        %v2412 = vadd.f32 %v2280, %v2348
        %v2413 = vadd.f32 %v2281, %v2349
        %v2414 = vadd.f32 %v2282, %v2350
        %v2415 = vadd.f32 %v2283, %v2351
        %v2416 = vadd.f32 %v2284, %v2352
        %v2417 = vadd.f32 %v2285, %v2353
        %v2418 = vadd.f32 %v2286, %v2354
        %v2419 = vadd.f32 %v2287, %v2355
        %v2420 = vadd.f32 %v2288, %v2356
        %v2421 = vadd.f32 %v2289, %v2357
        %v2422 = vadd.f32 %v2290, %v2358
        %v2423 = vadd.f32 %v2291, %v2359
        %v2424 = vadd.f32 %v2292, %v2360
        %v2425 = vadd.f32 %v2293, %v2361
        %v2426 = vadd.f32 %v2294, %v2362
        %v2427 = vadd.f32 %v2295, %v2363
        %v2428 = vadd.f32 %v2296, %v2364
        %v2429 = vadd.f32 %v2297, %v2365
        %v2430 = vadd.f32 %v2298, %v2366
        %v2431 = vadd.f32 %v2299, %v2367
        %v2432 = vadd.f32 %v2300, %v2368
        %v2433 = vadd.f32 %v2301, %v2369
        %v2434 = vadd.f32 %v2302, %v2370
        %v2435 = vadd.f32 %v2303, %v2371
        %v2436 = vadd.f32 %v2304, %v2372
        %v2437 = vadd.f32 %v2305, %v2373
        %v2438 = vadd.f32 %v2306, %v2374
        %v2439 = vadd.f32 %v2307, %v2375
        %v2440 = vadd.f32 %v2308, %v2376
        %v2441 = vadd.f32 %v2309, %v2377
        %v2442 = vadd.f32 %v2310, %v2378
        %v2443 = vadd.f32 %v2311, %v2379
        %v2444 = vadd.f32 %v2312, %v2380
        %v2445 = vadd.f32 %v2313, %v2381
        %v2446 = vadd.f32 %v2314, %v2382
        %v2447 = vadd.f32 %v2315, %v2383
        %v2448 = vadd.f32 %v2316, %v2384
        %v2449 = vadd.f32 %v2317, %v2385
        %v2450 = vadd.f32 %v2318, %v2386
        %v2451 = vadd.f32 %v2319, %v2387
        %v2452 = vadd.f32 %v2320, %v2388
        %v2453 = vadd.f32 %v2321, %v2389
        %v2454 = vadd.f32 %v2322, %v2390
        %v2455 = vadd.f32 %v2323, %v2391
        %v2456 = vadd.f32 %v2324, %v2392
        %v2457 = vadd.f32 %v2325, %v2393
        %v2458 = vadd.f32 %v2326, %v2394
        %v2459 = vlaneseq
        %v2460 = vshrl.u32 %v2459, 7
        %v2461 = vsub.s32 7, %v2460
        %v2462 = vrot.slane %v1653, %v2461
        %v2463 = vmul.f32 %v2127, %v2462
        %v2464 = vmul.f32 %v2128, %v2462
        %v2465 = vmul.f32 %v2129, %v2462
        %v2466 = vmul.f32 %v2130, %v2462
        %v2467 = vmul.f32 %v2131, %v2462
        %v2468 = vmul.f32 %v2132, %v2462
        %v2469 = vmul.f32 %v2133, %v2462
        %v2470 = vmul.f32 %v2134, %v2462
        %v2471 = vmul.f32 %v2135, %v2462
        %v2472 = vmul.f32 %v2136, %v2462
        %v2473 = vmul.f32 %v2137, %v2462
        %v2474 = vmul.f32 %v2138, %v2462
        %v2475 = vmul.f32 %v2139, %v2462
        %v2476 = vmul.f32 %v2140, %v2462
        %v2477 = vmul.f32 %v2141, %v2462
        %v2478 = vmul.f32 %v2142, %v2462
        %v2479 = vmul.f32 %v2143, %v2462
        %v2480 = vmul.f32 %v2144, %v2462
        %v2481 = vmul.f32 %v2145, %v2462
        %v2482 = vmul.f32 %v2146, %v2462
        %v2483 = vmul.f32 %v2147, %v2462
        %v2484 = vmul.f32 %v2148, %v2462
        %v2485 = vmul.f32 %v2149, %v2462
        %v2486 = vmul.f32 %v2150, %v2462
        %v2487 = vmul.f32 %v2151, %v2462
        %v2488 = vmul.f32 %v2152, %v2462
        %v2489 = vmul.f32 %v2153, %v2462
        %v2490 = vmul.f32 %v2154, %v2462
        %v2491 = vmul.f32 %v2155, %v2462
        %v2492 = vmul.f32 %v2156, %v2462
        %v2493 = vmul.f32 %v2157, %v2462
        %v2494 = vmul.f32 %v2158, %v2462
        %v2495 = vmul.f32 %v2163, %v2462
        %v2496 = vmul.f32 %v2164, %v2462
        %v2497 = vmul.f32 %v2165, %v2462
        %v2498 = vmul.f32 %v2166, %v2462
        %v2499 = vmul.f32 %v2167, %v2462
        %v2500 = vmul.f32 %v2168, %v2462
        %v2501 = vmul.f32 %v2169, %v2462
        %v2502 = vmul.f32 %v2170, %v2462
        %v2503 = vmul.f32 %v2171, %v2462
        %v2504 = vmul.f32 %v2172, %v2462
        %v2505 = vmul.f32 %v2173, %v2462
        %v2506 = vmul.f32 %v2174, %v2462
        %v2507 = vmul.f32 %v2175, %v2462
        %v2508 = vmul.f32 %v2176, %v2462
        %v2509 = vmul.f32 %v2177, %v2462
        %v2510 = vmul.f32 %v2178, %v2462
        %v2511 = vmul.f32 %v2179, %v2462
        %v2512 = vmul.f32 %v2180, %v2462
        %v2513 = vmul.f32 %v2181, %v2462
        %v2514 = vmul.f32 %v2182, %v2462
        %v2515 = vmul.f32 %v2183, %v2462
        %v2516 = vmul.f32 %v2184, %v2462
        %v2517 = vmul.f32 %v2185, %v2462
        %v2518 = vmul.f32 %v2186, %v2462
        %v2519 = vmul.f32 %v2187, %v2462
        %v2520 = vmul.f32 %v2188, %v2462
        %v2521 = vmul.f32 %v2189, %v2462
        %v2522 = vmul.f32 %v2190, %v2462
        %v2523 = vmul.f32 %v2191, %v2462
        %v2524 = vmul.f32 %v2192, %v2462
        %v2525 = vmul.f32 %v2193, %v2462
        %v2526 = vmul.f32 %v2194, %v2462
        %v2527 = vadd.f32 %v2395, %v2463
        %v2528 = vadd.f32 %v2396, %v2464
        %v2529 = vadd.f32 %v2397, %v2465
        %v2530 = vadd.f32 %v2398, %v2466
        %v2531 = vadd.f32 %v2399, %v2467
        %v2532 = vadd.f32 %v2400, %v2468
        %v2533 = vadd.f32 %v2401, %v2469
        %v2534 = vadd.f32 %v2402, %v2470
        %v2535 = vadd.f32 %v2403, %v2471
        %v2536 = vadd.f32 %v2404, %v2472
        %v2537 = vadd.f32 %v2405, %v2473
        %v2538 = vadd.f32 %v2406, %v2474
        %v2539 = vadd.f32 %v2407, %v2475
        %v2540 = vadd.f32 %v2408, %v2476
        %v2541 = vadd.f32 %v2409, %v2477
        %v2542 = vadd.f32 %v2410, %v2478
        %v2543 = vadd.f32 %v2411, %v2479
        %v2544 = vadd.f32 %v2412, %v2480
        %v2545 = vadd.f32 %v2413, %v2481
        %v2546 = vadd.f32 %v2414, %v2482
        %v2547 = vadd.f32 %v2415, %v2483
        %v2548 = vadd.f32 %v2416, %v2484
        %v2549 = vadd.f32 %v2417, %v2485
        %v2550 = vadd.f32 %v2418, %v2486
        %v2551 = vadd.f32 %v2419, %v2487
        %v2552 = vadd.f32 %v2420, %v2488
        %v2553 = vadd.f32 %v2421, %v2489
        %v2554 = vadd.f32 %v2422, %v2490
        %v2555 = vadd.f32 %v2423, %v2491
        %v2556 = vadd.f32 %v2424, %v2492
        %v2557 = vadd.f32 %v2425, %v2493
        %v2558 = vadd.f32 %v2426, %v2494
        %v2559 = vadd.f32 %v2427, %v2495
        %v2560 = vadd.f32 %v2428, %v2496
        %v2561 = vadd.f32 %v2429, %v2497
        %v2562 = vadd.f32 %v2430, %v2498
        %v2563 = vadd.f32 %v2431, %v2499
        %v2564 = vadd.f32 %v2432, %v2500
        %v2565 = vadd.f32 %v2433, %v2501
        %v2566 = vadd.f32 %v2434, %v2502
        %v2567 = vadd.f32 %v2435, %v2503
        %v2568 = vadd.f32 %v2436, %v2504
        %v2569 = vadd.f32 %v2437, %v2505
        %v2570 = vadd.f32 %v2438, %v2506
        %v2571 = vadd.f32 %v2439, %v2507
        %v2572 = vadd.f32 %v2440, %v2508
        %v2573 = vadd.f32 %v2441, %v2509
        %v2574 = vadd.f32 %v2442, %v2510
        %v2575 = vadd.f32 %v2443, %v2511
        %v2576 = vadd.f32 %v2444, %v2512
        %v2577 = vadd.f32 %v2445, %v2513
        %v2578 = vadd.f32 %v2446, %v2514
        %v2579 = vadd.f32 %v2447, %v2515
        %v2580 = vadd.f32 %v2448, %v2516
        %v2581 = vadd.f32 %v2449, %v2517
        %v2582 = vadd.f32 %v2450, %v2518
        %v2583 = vadd.f32 %v2451, %v2519
        %v2584 = vadd.f32 %v2452, %v2520
        %v2585 = vadd.f32 %v2453, %v2521
        %v2586 = vadd.f32 %v2454, %v2522
        %v2587 = vadd.f32 %v2455, %v2523
        %v2588 = vadd.f32 %v2456, %v2524
        %v2589 = vadd.f32 %v2457, %v2525
        %v2590 = vadd.f32 %v2458, %v2526
        %v2591 = vld [vmem:[#allocation2 + $0x2] sm:$0xff]
        %v2592 = vld [vmem:[#allocation2 + $0xa] sm:$0xff]
        %v2593 = vld [vmem:[#allocation2 + $0x1a] sm:$0xff]
        %v2594 = vld [vmem:[#allocation2 + $0x22] sm:$0xff]
        %v2595 = vld [vmem:[#allocation2 + $0x32] sm:$0xff]
        %v2596 = vld [vmem:[#allocation2 + $0x3a] sm:$0xff]
        %v2597 = vld [vmem:[#allocation2 + $0x4a] sm:$0xff]
        %v2598 = vld [vmem:[#allocation2 + $0x52] sm:$0xff]
        %v2599 = vld [vmem:[#allocation2 + $0x62] sm:$0xff]
        %v2600 = vld [vmem:[#allocation2 + $0x6a] sm:$0xff]
        %v2601 = vld [vmem:[#allocation2 + $0x7a] sm:$0xff]
        %v2602 = vld [vmem:[#allocation2 + $0x82] sm:$0xff]
        %v2603 = vld [vmem:[#allocation2 + $0x92] sm:$0xff]
        %v2604 = vld [vmem:[#allocation2 + $0x9a] sm:$0xff]
        %v2605 = vld [vmem:[#allocation2 + $0xaa] sm:$0xff]
        %v2606 = vld [vmem:[#allocation2 + $0xb2] sm:$0xff]
        %v2607 = vld [vmem:[#allocation2 + $0xc2] sm:$0xff]
        %v2608 = vld [vmem:[#allocation2 + $0xca] sm:$0xff]
        %v2609 = vld [vmem:[#allocation2 + $0xda] sm:$0xff]
        %v2610 = vld [vmem:[#allocation2 + $0xe2] sm:$0xff]
        %v2611 = vld [vmem:[#allocation2 + $0xf2] sm:$0xff]
        %v2612 = vld [vmem:[#allocation2 + $0xfa] sm:$0xff]
        %v2613 = vld [vmem:[#allocation2 + $0x10a] sm:$0xff]
        %v2614 = vld [vmem:[#allocation2 + $0x112] sm:$0xff]
        %v2615 = vld [vmem:[#allocation2 + $0x122] sm:$0xff]
        %v2616 = vld [vmem:[#allocation2 + $0x12a] sm:$0xff]
        %v2617 = vld [vmem:[#allocation2 + $0x13a] sm:$0xff]
        %v2618 = vld [vmem:[#allocation2 + $0x142] sm:$0xff]
        %v2619 = vld [vmem:[#allocation2 + $0x152] sm:$0xff]
        %v2620 = vld [vmem:[#allocation2 + $0x15a] sm:$0xff]
        %v2621 = vld [vmem:[#allocation2 + $0x16a] sm:$0xff]
        %v2622 = vld [vmem:[#allocation2 + $0x172] sm:$0xff]
        %v2623 = vld [vmem:[#allocation2 + $0x182] sm:$0xff]
        %v2624 = vld [vmem:[#allocation2 + $0x18a] sm:$0xff]
        %v2625 = vld [vmem:[#allocation2 + $0x19a] sm:$0xff]
        %v2626 = vld [vmem:[#allocation2 + $0x1a2] sm:$0xff]
        %v2627 = vld [vmem:[#allocation2 + $0x1b2] sm:$0xff]
        %v2628 = vld [vmem:[#allocation2 + $0x1ba] sm:$0xff]
        %v2629 = vld [vmem:[#allocation2 + $0x1ca] sm:$0xff]
        %v2630 = vld [vmem:[#allocation2 + $0x1d2] sm:$0xff]
        %v2631 = vld [vmem:[#allocation2 + $0x1e2] sm:$0xff]
        %v2632 = vld [vmem:[#allocation2 + $0x1ea] sm:$0xff]
        %v2633 = vld [vmem:[#allocation2 + $0x1fa] sm:$0xff]
        %v2634 = vld [vmem:[#allocation2 + $0x202] sm:$0xff]
        %v2635 = vld [vmem:[#allocation2 + $0x212] sm:$0xff]
        %v2636 = vld [vmem:[#allocation2 + $0x21a] sm:$0xff]
        %v2637 = vld [vmem:[#allocation2 + $0x22a] sm:$0xff]
        %v2638 = vld [vmem:[#allocation2 + $0x232] sm:$0xff]
        %v2639 = vld [vmem:[#allocation2 + $0x242] sm:$0xff]
        %v2640 = vld [vmem:[#allocation2 + $0x24a] sm:$0xff]
        %v2641 = vld [vmem:[#allocation2 + $0x25a] sm:$0xff]
        %v2642 = vld [vmem:[#allocation2 + $0x262] sm:$0xff]
        %v2643 = vld [vmem:[#allocation2 + $0x272] sm:$0xff]
        %v2644 = vld [vmem:[#allocation2 + $0x27a] sm:$0xff]
        %v2645 = vld [vmem:[#allocation2 + $0x28a] sm:$0xff]
        %v2646 = vld [vmem:[#allocation2 + $0x292] sm:$0xff]
        %v2647 = vld [vmem:[#allocation2 + $0x2a2] sm:$0xff]
        %v2648 = vld [vmem:[#allocation2 + $0x2aa] sm:$0xff]
        %v2649 = vld [vmem:[#allocation2 + $0x2ba] sm:$0xff]
        %v2650 = vld [vmem:[#allocation2 + $0x2c2] sm:$0xff]
        %v2651 = vld [vmem:[#allocation2 + $0x2d2] sm:$0xff]
        %v2652 = vld [vmem:[#allocation2 + $0x2da] sm:$0xff]
        %v2653 = vld [vmem:[#allocation2 + $0x2ea] sm:$0xff]
        %v2654 = vld [vmem:[#allocation2 + $0x2f2] sm:$0xff]
        %v2655 = vld [vmem:[#allocation2 + $0x302] sm:$0xff]
        %v2656 = vld [vmem:[#allocation2 + $0x30a] sm:$0xff]
        %v2657 = vld [vmem:[#allocation2 + $0x31a] sm:$0xff]
        %v2658 = vld [vmem:[#allocation2 + $0x322] sm:$0xff]
        %v2659 = vld [vmem:[#allocation2 + $0x332] sm:$0xff]
        %v2660 = vld [vmem:[#allocation2 + $0x33a] sm:$0xff]
        %v2661 = vld [vmem:[#allocation2 + $0x34a] sm:$0xff]
        %v2662 = vld [vmem:[#allocation2 + $0x352] sm:$0xff]
        %v2663 = vlaneseq
        %v2664 = vshrl.u32 %v2663, 7
        %v2665 = vsub.s32 2, %v2664
        %v2666 = vrot.slane %v1653, %v2665
        %v2667 = vmul.f32 %v2591, %v2666
        %v2668 = vmul.f32 %v2592, %v2666
        %v2669 = vmul.f32 %v2593, %v2666
        %v2670 = vmul.f32 %v2594, %v2666
        %v2671 = vmul.f32 %v2595, %v2666
        %v2672 = vmul.f32 %v2596, %v2666
        %v2673 = vmul.f32 %v2597, %v2666
        %v2674 = vmul.f32 %v2598, %v2666
        %v2675 = vmul.f32 %v2599, %v2666
        %v2676 = vmul.f32 %v2600, %v2666
        %v2677 = vmul.f32 %v2601, %v2666
        %v2678 = vmul.f32 %v2602, %v2666
        %v2679 = vmul.f32 %v2603, %v2666
        %v2680 = vmul.f32 %v2604, %v2666
        %v2681 = vmul.f32 %v2605, %v2666
        %v2682 = vmul.f32 %v2606, %v2666
        %v2683 = vmul.f32 %v2607, %v2666
        %v2684 = vmul.f32 %v2608, %v2666
        %v2685 = vmul.f32 %v2609, %v2666
        %v2686 = vmul.f32 %v2610, %v2666
        %v2687 = vmul.f32 %v2611, %v2666
        %v2688 = vmul.f32 %v2612, %v2666
        %v2689 = vmul.f32 %v2613, %v2666
        %v2690 = vmul.f32 %v2614, %v2666
        %v2691 = vmul.f32 %v2615, %v2666
        %v2692 = vmul.f32 %v2616, %v2666
        %v2693 = vmul.f32 %v2617, %v2666
        %v2694 = vmul.f32 %v2618, %v2666
        %v2695 = vmul.f32 %v2619, %v2666
        %v2696 = vmul.f32 %v2620, %v2666
        %v2697 = vmul.f32 %v2621, %v2666
        %v2698 = vmul.f32 %v2622, %v2666
        %v2699 = vmul.f32 %v2627, %v2666
        %v2700 = vmul.f32 %v2628, %v2666
        %v2701 = vmul.f32 %v2629, %v2666
        %v2702 = vmul.f32 %v2630, %v2666
        %v2703 = vmul.f32 %v2631, %v2666
        %v2704 = vmul.f32 %v2632, %v2666
        %v2705 = vmul.f32 %v2633, %v2666
        %v2706 = vmul.f32 %v2634, %v2666
        %v2707 = vmul.f32 %v2635, %v2666
        %v2708 = vmul.f32 %v2636, %v2666
        %v2709 = vmul.f32 %v2637, %v2666
        %v2710 = vmul.f32 %v2638, %v2666
        %v2711 = vmul.f32 %v2639, %v2666
        %v2712 = vmul.f32 %v2640, %v2666
        %v2713 = vmul.f32 %v2641, %v2666
        %v2714 = vmul.f32 %v2642, %v2666
        %v2715 = vmul.f32 %v2643, %v2666
        %v2716 = vmul.f32 %v2644, %v2666
        %v2717 = vmul.f32 %v2645, %v2666
        %v2718 = vmul.f32 %v2646, %v2666
        %v2719 = vmul.f32 %v2647, %v2666
        %v2720 = vmul.f32 %v2648, %v2666
        %v2721 = vmul.f32 %v2649, %v2666
        %v2722 = vmul.f32 %v2650, %v2666
        %v2723 = vmul.f32 %v2651, %v2666
        %v2724 = vmul.f32 %v2652, %v2666
        %v2725 = vmul.f32 %v2653, %v2666
        %v2726 = vmul.f32 %v2654, %v2666
        %v2727 = vmul.f32 %v2655, %v2666
        %v2728 = vmul.f32 %v2656, %v2666
        %v2729 = vmul.f32 %v2657, %v2666
        %v2730 = vmul.f32 %v2658, %v2666
        %v2731 = vadd.f32 %v2527, %v2667
        %v2732 = vadd.f32 %v2528, %v2668
        %v2733 = vadd.f32 %v2529, %v2669
        %v2734 = vadd.f32 %v2530, %v2670
        %v2735 = vadd.f32 %v2531, %v2671
        %v2736 = vadd.f32 %v2532, %v2672
        %v2737 = vadd.f32 %v2533, %v2673
        %v2738 = vadd.f32 %v2534, %v2674
        %v2739 = vadd.f32 %v2535, %v2675
        %v2740 = vadd.f32 %v2536, %v2676
        %v2741 = vadd.f32 %v2537, %v2677
        %v2742 = vadd.f32 %v2538, %v2678
        %v2743 = vadd.f32 %v2539, %v2679
        %v2744 = vadd.f32 %v2540, %v2680
        %v2745 = vadd.f32 %v2541, %v2681
        %v2746 = vadd.f32 %v2542, %v2682
        %v2747 = vadd.f32 %v2543, %v2683
        %v2748 = vadd.f32 %v2544, %v2684
        %v2749 = vadd.f32 %v2545, %v2685
        %v2750 = vadd.f32 %v2546, %v2686
        %v2751 = vadd.f32 %v2547, %v2687
        %v2752 = vadd.f32 %v2548, %v2688
        %v2753 = vadd.f32 %v2549, %v2689
        %v2754 = vadd.f32 %v2550, %v2690
        %v2755 = vadd.f32 %v2551, %v2691
        %v2756 = vadd.f32 %v2552, %v2692
        %v2757 = vadd.f32 %v2553, %v2693
        %v2758 = vadd.f32 %v2554, %v2694
        %v2759 = vadd.f32 %v2555, %v2695
        %v2760 = vadd.f32 %v2556, %v2696
        %v2761 = vadd.f32 %v2557, %v2697
        %v2762 = vadd.f32 %v2558, %v2698
        %v2763 = vadd.f32 %v2559, %v2699
        %v2764 = vadd.f32 %v2560, %v2700
        %v2765 = vadd.f32 %v2561, %v2701
        %v2766 = vadd.f32 %v2562, %v2702
        %v2767 = vadd.f32 %v2563, %v2703
        %v2768 = vadd.f32 %v2564, %v2704
        %v2769 = vadd.f32 %v2565, %v2705
        %v2770 = vadd.f32 %v2566, %v2706
        %v2771 = vadd.f32 %v2567, %v2707
        %v2772 = vadd.f32 %v2568, %v2708
        %v2773 = vadd.f32 %v2569, %v2709
        %v2774 = vadd.f32 %v2570, %v2710
        %v2775 = vadd.f32 %v2571, %v2711
        %v2776 = vadd.f32 %v2572, %v2712
        %v2777 = vadd.f32 %v2573, %v2713
        %v2778 = vadd.f32 %v2574, %v2714
        %v2779 = vadd.f32 %v2575, %v2715
        %v2780 = vadd.f32 %v2576, %v2716
        %v2781 = vadd.f32 %v2577, %v2717
        %v2782 = vadd.f32 %v2578, %v2718
        %v2783 = vadd.f32 %v2579, %v2719
        %v2784 = vadd.f32 %v2580, %v2720
        %v2785 = vadd.f32 %v2581, %v2721
        %v2786 = vadd.f32 %v2582, %v2722
        %v2787 = vadd.f32 %v2583, %v2723
        %v2788 = vadd.f32 %v2584, %v2724
        %v2789 = vadd.f32 %v2585, %v2725
        %v2790 = vadd.f32 %v2586, %v2726
        %v2791 = vadd.f32 %v2587, %v2727
        %v2792 = vadd.f32 %v2588, %v2728
        %v2793 = vadd.f32 %v2589, %v2729
        %v2794 = vadd.f32 %v2590, %v2730
        %v2795 = vlaneseq
        %v2796 = vshrl.u32 %v2795, 7
        %v2797 = vsub.s32 5, %v2796
        %v2798 = vrot.slane %v1653, %v2797
        %v2799 = vmul.f32 %v2593, %v2798
        %v2800 = vmul.f32 %v2594, %v2798
        %v2801 = vmul.f32 %v2595, %v2798
        %v2802 = vmul.f32 %v2596, %v2798
        %v2803 = vmul.f32 %v2597, %v2798
        %v2804 = vmul.f32 %v2598, %v2798
        %v2805 = vmul.f32 %v2599, %v2798
        %v2806 = vmul.f32 %v2600, %v2798
        %v2807 = vmul.f32 %v2601, %v2798
        %v2808 = vmul.f32 %v2602, %v2798
        %v2809 = vmul.f32 %v2603, %v2798
        %v2810 = vmul.f32 %v2604, %v2798
        %v2811 = vmul.f32 %v2605, %v2798
        %v2812 = vmul.f32 %v2606, %v2798
        %v2813 = vmul.f32 %v2607, %v2798
        %v2814 = vmul.f32 %v2608, %v2798
        %v2815 = vmul.f32 %v2609, %v2798
        %v2816 = vmul.f32 %v2610, %v2798
        %v2817 = vmul.f32 %v2611, %v2798
        %v2818 = vmul.f32 %v2612, %v2798
        %v2819 = vmul.f32 %v2613, %v2798
        %v2820 = vmul.f32 %v2614, %v2798
        %v2821 = vmul.f32 %v2615, %v2798
        %v2822 = vmul.f32 %v2616, %v2798
        %v2823 = vmul.f32 %v2617, %v2798
        %v2824 = vmul.f32 %v2618, %v2798
        %v2825 = vmul.f32 %v2619, %v2798
        %v2826 = vmul.f32 %v2620, %v2798
        %v2827 = vmul.f32 %v2621, %v2798
        %v2828 = vmul.f32 %v2622, %v2798
        %v2829 = vmul.f32 %v2623, %v2798
        %v2830 = vmul.f32 %v2624, %v2798
        %v2831 = vmul.f32 %v2629, %v2798
        %v2832 = vmul.f32 %v2630, %v2798
        %v2833 = vmul.f32 %v2631, %v2798
        %v2834 = vmul.f32 %v2632, %v2798
        %v2835 = vmul.f32 %v2633, %v2798
        %v2836 = vmul.f32 %v2634, %v2798
        %v2837 = vmul.f32 %v2635, %v2798
        %v2838 = vmul.f32 %v2636, %v2798
        %v2839 = vmul.f32 %v2637, %v2798
        %v2840 = vmul.f32 %v2638, %v2798
        %v2841 = vmul.f32 %v2639, %v2798
        %v2842 = vmul.f32 %v2640, %v2798
        %v2843 = vmul.f32 %v2641, %v2798
        %v2844 = vmul.f32 %v2642, %v2798
        %v2845 = vmul.f32 %v2643, %v2798
        %v2846 = vmul.f32 %v2644, %v2798
        %v2847 = vmul.f32 %v2645, %v2798
        %v2848 = vmul.f32 %v2646, %v2798
        %v2849 = vmul.f32 %v2647, %v2798
        %v2850 = vmul.f32 %v2648, %v2798
        %v2851 = vmul.f32 %v2649, %v2798
        %v2852 = vmul.f32 %v2650, %v2798
        %v2853 = vmul.f32 %v2651, %v2798
        %v2854 = vmul.f32 %v2652, %v2798
        %v2855 = vmul.f32 %v2653, %v2798
        %v2856 = vmul.f32 %v2654, %v2798
        %v2857 = vmul.f32 %v2655, %v2798
        %v2858 = vmul.f32 %v2656, %v2798
        %v2859 = vmul.f32 %v2657, %v2798
        %v2860 = vmul.f32 %v2658, %v2798
        %v2861 = vmul.f32 %v2659, %v2798
        %v2862 = vmul.f32 %v2660, %v2798
        %v2863 = vadd.f32 %v2731, %v2799
        %v2864 = vadd.f32 %v2732, %v2800
        %v2865 = vadd.f32 %v2733, %v2801
        %v2866 = vadd.f32 %v2734, %v2802
        %v2867 = vadd.f32 %v2735, %v2803
        %v2868 = vadd.f32 %v2736, %v2804
        %v2869 = vadd.f32 %v2737, %v2805
        %v2870 = vadd.f32 %v2738, %v2806
        %v2871 = vadd.f32 %v2739, %v2807
        %v2872 = vadd.f32 %v2740, %v2808
        %v2873 = vadd.f32 %v2741, %v2809
        %v2874 = vadd.f32 %v2742, %v2810
        %v2875 = vadd.f32 %v2743, %v2811
        %v2876 = vadd.f32 %v2744, %v2812
        %v2877 = vadd.f32 %v2745, %v2813
        %v2878 = vadd.f32 %v2746, %v2814
        %v2879 = vadd.f32 %v2747, %v2815
        %v2880 = vadd.f32 %v2748, %v2816
        %v2881 = vadd.f32 %v2749, %v2817
        %v2882 = vadd.f32 %v2750, %v2818
        %v2883 = vadd.f32 %v2751, %v2819
        %v2884 = vadd.f32 %v2752, %v2820
        %v2885 = vadd.f32 %v2753, %v2821
        %v2886 = vadd.f32 %v2754, %v2822
        %v2887 = vadd.f32 %v2755, %v2823
        %v2888 = vadd.f32 %v2756, %v2824
        %v2889 = vadd.f32 %v2757, %v2825
        %v2890 = vadd.f32 %v2758, %v2826
        %v2891 = vadd.f32 %v2759, %v2827
        %v2892 = vadd.f32 %v2760, %v2828
        %v2893 = vadd.f32 %v2761, %v2829
        %v2894 = vadd.f32 %v2762, %v2830
        %v2895 = vadd.f32 %v2763, %v2831
        %v2896 = vadd.f32 %v2764, %v2832
        %v2897 = vadd.f32 %v2765, %v2833
        %v2898 = vadd.f32 %v2766, %v2834
        %v2899 = vadd.f32 %v2767, %v2835
        %v2900 = vadd.f32 %v2768, %v2836
        %v2901 = vadd.f32 %v2769, %v2837
        %v2902 = vadd.f32 %v2770, %v2838
        %v2903 = vadd.f32 %v2771, %v2839
        %v2904 = vadd.f32 %v2772, %v2840
        %v2905 = vadd.f32 %v2773, %v2841
        %v2906 = vadd.f32 %v2774, %v2842
        %v2907 = vadd.f32 %v2775, %v2843
        %v2908 = vadd.f32 %v2776, %v2844
        %v2909 = vadd.f32 %v2777, %v2845
        %v2910 = vadd.f32 %v2778, %v2846
        %v2911 = vadd.f32 %v2779, %v2847
        %v2912 = vadd.f32 %v2780, %v2848
        %v2913 = vadd.f32 %v2781, %v2849
        %v2914 = vadd.f32 %v2782, %v2850
        %v2915 = vadd.f32 %v2783, %v2851
        %v2916 = vadd.f32 %v2784, %v2852
        %v2917 = vadd.f32 %v2785, %v2853
        %v2918 = vadd.f32 %v2786, %v2854
        %v2919 = vadd.f32 %v2787, %v2855
        %v2920 = vadd.f32 %v2788, %v2856
        %v2921 = vadd.f32 %v2789, %v2857
        %v2922 = vadd.f32 %v2790, %v2858
        %v2923 = vadd.f32 %v2791, %v2859
        %v2924 = vadd.f32 %v2792, %v2860
        %v2925 = vadd.f32 %v2793, %v2861
        %v2926 = vadd.f32 %v2794, %v2862
        %v2927 = vlaneseq
        %v2928 = vshrl.u32 %v2927, 7
        %v2929 = vsub.s32 0, %v2928
        %v2930 = vrot.slane %v1654, %v2929
        %v2931 = vmul.f32 %v2595, %v2930
        %v2932 = vmul.f32 %v2596, %v2930
        %v2933 = vmul.f32 %v2597, %v2930
        %v2934 = vmul.f32 %v2598, %v2930
        %v2935 = vmul.f32 %v2599, %v2930
        %v2936 = vmul.f32 %v2600, %v2930
        %v2937 = vmul.f32 %v2601, %v2930
        %v2938 = vmul.f32 %v2602, %v2930
        %v2939 = vmul.f32 %v2603, %v2930
        %v2940 = vmul.f32 %v2604, %v2930
        %v2941 = vmul.f32 %v2605, %v2930
        %v2942 = vmul.f32 %v2606, %v2930
        %v2943 = vmul.f32 %v2607, %v2930
        %v2944 = vmul.f32 %v2608, %v2930
        %v2945 = vmul.f32 %v2609, %v2930
        %v2946 = vmul.f32 %v2610, %v2930
        %v2947 = vmul.f32 %v2611, %v2930
        %v2948 = vmul.f32 %v2612, %v2930
        %v2949 = vmul.f32 %v2613, %v2930
        %v2950 = vmul.f32 %v2614, %v2930
        %v2951 = vmul.f32 %v2615, %v2930
        %v2952 = vmul.f32 %v2616, %v2930
        %v2953 = vmul.f32 %v2617, %v2930
        %v2954 = vmul.f32 %v2618, %v2930
        %v2955 = vmul.f32 %v2619, %v2930
        %v2956 = vmul.f32 %v2620, %v2930
        %v2957 = vmul.f32 %v2621, %v2930
        %v2958 = vmul.f32 %v2622, %v2930
        %v2959 = vmul.f32 %v2623, %v2930
        %v2960 = vmul.f32 %v2624, %v2930
        %v2961 = vmul.f32 %v2625, %v2930
        %v2962 = vmul.f32 %v2626, %v2930
        %v2963 = vmul.f32 %v2631, %v2930
        %v2964 = vmul.f32 %v2632, %v2930
        %v2965 = vmul.f32 %v2633, %v2930
        %v2966 = vmul.f32 %v2634, %v2930
        %v2967 = vmul.f32 %v2635, %v2930
        %v2968 = vmul.f32 %v2636, %v2930
        %v2969 = vmul.f32 %v2637, %v2930
        %v2970 = vmul.f32 %v2638, %v2930
        %v2971 = vmul.f32 %v2639, %v2930
        %v2972 = vmul.f32 %v2640, %v2930
        %v2973 = vmul.f32 %v2641, %v2930
        %v2974 = vmul.f32 %v2642, %v2930
        %v2975 = vmul.f32 %v2643, %v2930
        %v2976 = vmul.f32 %v2644, %v2930
        %v2977 = vmul.f32 %v2645, %v2930
        %v2978 = vmul.f32 %v2646, %v2930
        %v2979 = vmul.f32 %v2647, %v2930
        %v2980 = vmul.f32 %v2648, %v2930
        %v2981 = vmul.f32 %v2649, %v2930
        %v2982 = vmul.f32 %v2650, %v2930
        %v2983 = vmul.f32 %v2651, %v2930
        %v2984 = vmul.f32 %v2652, %v2930
        %v2985 = vmul.f32 %v2653, %v2930
        %v2986 = vmul.f32 %v2654, %v2930
        %v2987 = vmul.f32 %v2655, %v2930
        %v2988 = vmul.f32 %v2656, %v2930
        %v2989 = vmul.f32 %v2657, %v2930
        %v2990 = vmul.f32 %v2658, %v2930
        %v2991 = vmul.f32 %v2659, %v2930
        %v2992 = vmul.f32 %v2660, %v2930
        %v2993 = vmul.f32 %v2661, %v2930
        %v2994 = vmul.f32 %v2662, %v2930
        %v2995 = vadd.f32 %v2863, %v2931
        %v2996 = vadd.f32 %v2864, %v2932
        %v2997 = vadd.f32 %v2865, %v2933
        %v2998 = vadd.f32 %v2866, %v2934
        %v2999 = vadd.f32 %v2867, %v2935
        %v3000 = vadd.f32 %v2868, %v2936
        %v3001 = vadd.f32 %v2869, %v2937
        %v3002 = vadd.f32 %v2870, %v2938
        %v3003 = vadd.f32 %v2871, %v2939
        %v3004 = vadd.f32 %v2872, %v2940
        %v3005 = vadd.f32 %v2873, %v2941
        %v3006 = vadd.f32 %v2874, %v2942
        %v3007 = vadd.f32 %v2875, %v2943
        %v3008 = vadd.f32 %v2876, %v2944
        %v3009 = vadd.f32 %v2877, %v2945
        %v3010 = vadd.f32 %v2878, %v2946
        %v3011 = vadd.f32 %v2879, %v2947
        %v3012 = vadd.f32 %v2880, %v2948
        %v3013 = vadd.f32 %v2881, %v2949
        %v3014 = vadd.f32 %v2882, %v2950
        %v3015 = vadd.f32 %v2883, %v2951
        %v3016 = vadd.f32 %v2884, %v2952
        %v3017 = vadd.f32 %v2885, %v2953
        %v3018 = vadd.f32 %v2886, %v2954
        %v3019 = vadd.f32 %v2887, %v2955
        %v3020 = vadd.f32 %v2888, %v2956
        %v3021 = vadd.f32 %v2889, %v2957
        %v3022 = vadd.f32 %v2890, %v2958
        %v3023 = vadd.f32 %v2891, %v2959
        %v3024 = vadd.f32 %v2892, %v2960
        %v3025 = vadd.f32 %v2893, %v2961
        %v3026 = vadd.f32 %v2894, %v2962
        %v3027 = vadd.f32 %v2895, %v2963
        %v3028 = vadd.f32 %v2896, %v2964
        %v3029 = vadd.f32 %v2897, %v2965
        %v3030 = vadd.f32 %v2898, %v2966
        %v3031 = vadd.f32 %v2899, %v2967
        %v3032 = vadd.f32 %v2900, %v2968
        %v3033 = vadd.f32 %v2901, %v2969
        %v3034 = vadd.f32 %v2902, %v2970
        %v3035 = vadd.f32 %v2903, %v2971
        %v3036 = vadd.f32 %v2904, %v2972
        %v3037 = vadd.f32 %v2905, %v2973
        %v3038 = vadd.f32 %v2906, %v2974
        %v3039 = vadd.f32 %v2907, %v2975
        %v3040 = vadd.f32 %v2908, %v2976
        %v3041 = vadd.f32 %v2909, %v2977
        %v3042 = vadd.f32 %v2910, %v2978
        %v3043 = vadd.f32 %v2911, %v2979
        %v3044 = vadd.f32 %v2912, %v2980
        %v3045 = vadd.f32 %v2913, %v2981
        %v3046 = vadd.f32 %v2914, %v2982
        %v3047 = vadd.f32 %v2915, %v2983
        %v3048 = vadd.f32 %v2916, %v2984
        %v3049 = vadd.f32 %v2917, %v2985
        %v3050 = vadd.f32 %v2918, %v2986
        %v3051 = vadd.f32 %v2919, %v2987
        %v3052 = vadd.f32 %v2920, %v2988
        %v3053 = vadd.f32 %v2921, %v2989
        %v3054 = vadd.f32 %v2922, %v2990
        %v3055 = vadd.f32 %v2923, %v2991
        %v3056 = vadd.f32 %v2924, %v2992
        %v3057 = vadd.f32 %v2925, %v2993
        %v3058 = vadd.f32 %v2926, %v2994
        %v3059 = vld [vmem:[%s4] sm:$0x1]
        %v3061 = vlaneseq
        %v3062 = vshrl.u32 %v3061, 7
        %v3063 = vsub.s32 0, %v3062
        %v3064 = vrot.slane %v3059, %v3063
        %v3066 = vadd.f32 %v2995, %v3064
        %v3067 = vadd.f32 %v2996, %v3064
        %v3068 = vadd.f32 %v2997, %v3064
        %v3069 = vadd.f32 %v2998, %v3064
        %v3070 = vadd.f32 %v2999, %v3064
        %v3071 = vadd.f32 %v3000, %v3064
        %v3072 = vadd.f32 %v3001, %v3064
        %v3073 = vadd.f32 %v3002, %v3064
        %v3074 = vadd.f32 %v3003, %v3064
        %v3075 = vadd.f32 %v3004, %v3064
        %v3076 = vadd.f32 %v3005, %v3064
        %v3077 = vadd.f32 %v3006, %v3064
        %v3078 = vadd.f32 %v3007, %v3064
        %v3079 = vadd.f32 %v3008, %v3064
        %v3080 = vadd.f32 %v3009, %v3064
        %v3081 = vadd.f32 %v3010, %v3064
        %v3082 = vadd.f32 %v3011, %v3064
        %v3083 = vadd.f32 %v3012, %v3064
        %v3084 = vadd.f32 %v3013, %v3064
        %v3085 = vadd.f32 %v3014, %v3064
        %v3086 = vadd.f32 %v3015, %v3064
        %v3087 = vadd.f32 %v3016, %v3064
        %v3088 = vadd.f32 %v3017, %v3064
        %v3089 = vadd.f32 %v3018, %v3064
        %v3090 = vadd.f32 %v3019, %v3064
        %v3091 = vadd.f32 %v3020, %v3064
        %v3092 = vadd.f32 %v3021, %v3064
        %v3093 = vadd.f32 %v3022, %v3064
        %v3094 = vadd.f32 %v3023, %v3064
        %v3095 = vadd.f32 %v3024, %v3064
        %v3096 = vadd.f32 %v3025, %v3064
        %v3097 = vadd.f32 %v3026, %v3064
        %v3098 = vadd.f32 %v3027, %v3064
        %v3099 = vadd.f32 %v3028, %v3064
        %v3100 = vadd.f32 %v3029, %v3064
        %v3101 = vadd.f32 %v3030, %v3064
        %v3102 = vadd.f32 %v3031, %v3064
        %v3103 = vadd.f32 %v3032, %v3064
        %v3104 = vadd.f32 %v3033, %v3064
        %v3105 = vadd.f32 %v3034, %v3064
        %v3106 = vadd.f32 %v3035, %v3064
        %v3107 = vadd.f32 %v3036, %v3064
        %v3108 = vadd.f32 %v3037, %v3064
        %v3109 = vadd.f32 %v3038, %v3064
        %v3110 = vadd.f32 %v3039, %v3064
        %v3111 = vadd.f32 %v3040, %v3064
        %v3112 = vadd.f32 %v3041, %v3064
        %v3113 = vadd.f32 %v3042, %v3064
        %v3114 = vadd.f32 %v3043, %v3064
        %v3115 = vadd.f32 %v3044, %v3064
        %v3116 = vadd.f32 %v3045, %v3064
        %v3117 = vadd.f32 %v3046, %v3064
        %v3118 = vadd.f32 %v3047, %v3064
        %v3119 = vadd.f32 %v3048, %v3064
        %v3120 = vadd.f32 %v3049, %v3064
        %v3121 = vadd.f32 %v3050, %v3064
        %v3122 = vadd.f32 %v3051, %v3064
        %v3123 = vadd.f32 %v3052, %v3064
        %v3124 = vadd.f32 %v3053, %v3064
        %v3125 = vadd.f32 %v3054, %v3064
        %v3126 = vadd.f32 %v3055, %v3064
        %v3127 = vadd.f32 %v3056, %v3064
        %v3128 = vadd.f32 %v3057, %v3064
        %v3129 = vadd.f32 %v3058, %v3064
        %v3130 = vxor.u32 %v3066, 2147483648
        %v3131 = vxor.u32 %v3067, 2147483648
        %v3132 = vxor.u32 %v3068, 2147483648
        %v3133 = vxor.u32 %v3069, 2147483648
        %v3134 = vxor.u32 %v3070, 2147483648
        %v3135 = vxor.u32 %v3071, 2147483648
        %v3136 = vxor.u32 %v3072, 2147483648
        %v3137 = vxor.u32 %v3073, 2147483648
        %v3138 = vxor.u32 %v3074, 2147483648
        %v3139 = vxor.u32 %v3075, 2147483648
        %v3140 = vxor.u32 %v3076, 2147483648
        %v3141 = vxor.u32 %v3077, 2147483648
        %v3142 = vxor.u32 %v3078, 2147483648
        %v3143 = vxor.u32 %v3079, 2147483648
        %v3144 = vxor.u32 %v3080, 2147483648
        %v3145 = vxor.u32 %v3081, 2147483648
        %v3146 = vxor.u32 %v3082, 2147483648
        %v3147 = vxor.u32 %v3083, 2147483648
        %v3148 = vxor.u32 %v3084, 2147483648
        %v3149 = vxor.u32 %v3085, 2147483648
        %v3150 = vxor.u32 %v3086, 2147483648
        %v3151 = vxor.u32 %v3087, 2147483648
        %v3152 = vxor.u32 %v3088, 2147483648
        %v3153 = vxor.u32 %v3089, 2147483648
        %v3154 = vxor.u32 %v3090, 2147483648
        %v3155 = vxor.u32 %v3091, 2147483648
        %v3156 = vxor.u32 %v3092, 2147483648
        %v3157 = vxor.u32 %v3093, 2147483648
        %v3158 = vxor.u32 %v3094, 2147483648
        %v3159 = vxor.u32 %v3095, 2147483648
        %v3160 = vxor.u32 %v3096, 2147483648
        %v3161 = vxor.u32 %v3097, 2147483648
        %v3162 = vxor.u32 %v3098, 2147483648
        %v3163 = vxor.u32 %v3099, 2147483648
        %v3164 = vxor.u32 %v3100, 2147483648
        %v3165 = vxor.u32 %v3101, 2147483648
        %v3166 = vxor.u32 %v3102, 2147483648
        %v3167 = vxor.u32 %v3103, 2147483648
        %v3168 = vxor.u32 %v3104, 2147483648
        %v3169 = vxor.u32 %v3105, 2147483648
        %v3170 = vxor.u32 %v3106, 2147483648
        %v3171 = vxor.u32 %v3107, 2147483648
        %v3172 = vxor.u32 %v3108, 2147483648
        %v3173 = vxor.u32 %v3109, 2147483648
        %v3174 = vxor.u32 %v3110, 2147483648
        %v3175 = vxor.u32 %v3111, 2147483648
        %v3176 = vxor.u32 %v3112, 2147483648
        %v3177 = vxor.u32 %v3113, 2147483648
        %v3178 = vxor.u32 %v3114, 2147483648
        %v3179 = vxor.u32 %v3115, 2147483648
        %v3180 = vxor.u32 %v3116, 2147483648
        %v3181 = vxor.u32 %v3117, 2147483648
        %v3182 = vxor.u32 %v3118, 2147483648
        %v3183 = vxor.u32 %v3119, 2147483648
        %v3184 = vxor.u32 %v3120, 2147483648
        %v3185 = vxor.u32 %v3121, 2147483648
        %v3186 = vxor.u32 %v3122, 2147483648
        %v3187 = vxor.u32 %v3123, 2147483648
        %v3188 = vxor.u32 %v3124, 2147483648
        %v3189 = vxor.u32 %v3125, 2147483648
        %v3190 = vxor.u32 %v3126, 2147483648
        %v3191 = vxor.u32 %v3127, 2147483648
        %v3192 = vxor.u32 %v3128, 2147483648
        %v3193 = vxor.u32 %v3129, 2147483648
        %v3194 = vmul.f32 %v3130, 1.442695
        %v3195 = vpow.pop %v3194
        %v3196 = vmul.f32 %v3131, 1.442695
        %v3197 = vpow.pop %v3196
        %v3198 = vmul.f32 %v3132, 1.442695
        %v3199 = vpow.pop %v3198
        %v3200 = vmul.f32 %v3133, 1.442695
        %v3201 = vpow.pop %v3200
        %v3202 = vmul.f32 %v3134, 1.442695
        %v3203 = vpow.pop %v3202
        %v3204 = vmul.f32 %v3135, 1.442695
        %v3205 = vpow.pop %v3204
        %v3206 = vmul.f32 %v3136, 1.442695
        %v3207 = vpow.pop %v3206
        %v3208 = vmul.f32 %v3137, 1.442695
        %v3209 = vpow.pop %v3208
        %v3210 = vmul.f32 %v3138, 1.442695
        %v3211 = vpow.pop %v3210
        %v3212 = vmul.f32 %v3139, 1.442695
        %v3213 = vpow.pop %v3212
        %v3214 = vmul.f32 %v3140, 1.442695
        %v3215 = vpow.pop %v3214
        %v3216 = vmul.f32 %v3141, 1.442695
        %v3217 = vpow.pop %v3216
        %v3218 = vmul.f32 %v3142, 1.442695
        %v3219 = vpow.pop %v3218
        %v3220 = vmul.f32 %v3143, 1.442695
        %v3221 = vpow.pop %v3220
        %v3222 = vmul.f32 %v3144, 1.442695
        %v3223 = vpow.pop %v3222
        %v3224 = vmul.f32 %v3145, 1.442695
        %v3225 = vpow.pop %v3224
        %v3226 = vmul.f32 %v3146, 1.442695
        %v3227 = vpow.pop %v3226
        %v3228 = vmul.f32 %v3147, 1.442695
        %v3229 = vpow.pop %v3228
        %v3230 = vmul.f32 %v3148, 1.442695
        %v3231 = vpow.pop %v3230
        %v3232 = vmul.f32 %v3149, 1.442695
        %v3233 = vpow.pop %v3232
        %v3234 = vmul.f32 %v3150, 1.442695
        %v3235 = vpow.pop %v3234
        %v3236 = vmul.f32 %v3151, 1.442695
        %v3237 = vpow.pop %v3236
        %v3238 = vmul.f32 %v3152, 1.442695
        %v3239 = vpow.pop %v3238
        %v3240 = vmul.f32 %v3153, 1.442695
        %v3241 = vpow.pop %v3240
        %v3242 = vmul.f32 %v3154, 1.442695
        %v3243 = vpow.pop %v3242
        %v3244 = vmul.f32 %v3155, 1.442695
        %v3245 = vpow.pop %v3244
        %v3246 = vmul.f32 %v3156, 1.442695
        %v3247 = vpow.pop %v3246
        %v3248 = vmul.f32 %v3157, 1.442695
        %v3249 = vpow.pop %v3248
        %v3250 = vmul.f32 %v3158, 1.442695
        %v3251 = vpow.pop %v3250
        %v3252 = vmul.f32 %v3159, 1.442695
        %v3253 = vpow.pop %v3252
        %v3254 = vmul.f32 %v3160, 1.442695
        %v3255 = vpow.pop %v3254
        %v3256 = vmul.f32 %v3161, 1.442695
        %v3257 = vpow.pop %v3256
        %v3258 = vmul.f32 %v3162, 1.442695
        %v3259 = vpow.pop %v3258
        %v3260 = vmul.f32 %v3163, 1.442695
        %v3261 = vpow.pop %v3260
        %v3262 = vmul.f32 %v3164, 1.442695
        %v3263 = vpow.pop %v3262
        %v3264 = vmul.f32 %v3165, 1.442695
        %v3265 = vpow.pop %v3264
        %v3266 = vmul.f32 %v3166, 1.442695
        %v3267 = vpow.pop %v3266
        %v3268 = vmul.f32 %v3167, 1.442695
        %v3269 = vpow.pop %v3268
        %v3270 = vmul.f32 %v3168, 1.442695
        %v3271 = vpow.pop %v3270
        %v3272 = vmul.f32 %v3169, 1.442695
        %v3273 = vpow.pop %v3272
        %v3274 = vmul.f32 %v3170, 1.442695
        %v3275 = vpow.pop %v3274
        %v3276 = vmul.f32 %v3171, 1.442695
        %v3277 = vpow.pop %v3276
        %v3278 = vmul.f32 %v3172, 1.442695
        %v3279 = vpow.pop %v3278
        %v3280 = vmul.f32 %v3173, 1.442695
        %v3281 = vpow.pop %v3280
        %v3282 = vmul.f32 %v3174, 1.442695
        %v3283 = vpow.pop %v3282
        %v3284 = vmul.f32 %v3175, 1.442695
        %v3285 = vpow.pop %v3284
        %v3286 = vmul.f32 %v3176, 1.442695
        %v3287 = vpow.pop %v3286
        %v3288 = vmul.f32 %v3177, 1.442695
        %v3289 = vpow.pop %v3288
        %v3290 = vmul.f32 %v3178, 1.442695
        %v3291 = vpow.pop %v3290
        %v3292 = vmul.f32 %v3179, 1.442695
        %v3293 = vpow.pop %v3292
        %v3294 = vmul.f32 %v3180, 1.442695
        %v3295 = vpow.pop %v3294
        %v3296 = vmul.f32 %v3181, 1.442695
        %v3297 = vpow.pop %v3296
        %v3298 = vmul.f32 %v3182, 1.442695
        %v3299 = vpow.pop %v3298
        %v3300 = vmul.f32 %v3183, 1.442695
        %v3301 = vpow.pop %v3300
        %v3302 = vmul.f32 %v3184, 1.442695
        %v3303 = vpow.pop %v3302
        %v3304 = vmul.f32 %v3185, 1.442695
        %v3305 = vpow.pop %v3304
        %v3306 = vmul.f32 %v3186, 1.442695
        %v3307 = vpow.pop %v3306
        %v3308 = vmul.f32 %v3187, 1.442695
        %v3309 = vpow.pop %v3308
        %v3310 = vmul.f32 %v3188, 1.442695
        %v3311 = vpow.pop %v3310
        %v3312 = vmul.f32 %v3189, 1.442695
        %v3313 = vpow.pop %v3312
        %v3314 = vmul.f32 %v3190, 1.442695
        %v3315 = vpow.pop %v3314
        %v3316 = vmul.f32 %v3191, 1.442695
        %v3317 = vpow.pop %v3316
        %v3318 = vmul.f32 %v3192, 1.442695
        %v3319 = vpow.pop %v3318
        %v3320 = vmul.f32 %v3193, 1.442695
        %v3321 = vpow.pop %v3320
        %v3322 = vadd.f32 %v3195, 1.0
        %v3323 = vadd.f32 %v3197, 1.0
        %v3324 = vadd.f32 %v3199, 1.0
        %v3325 = vadd.f32 %v3201, 1.0
        %v3326 = vadd.f32 %v3203, 1.0
        %v3327 = vadd.f32 %v3205, 1.0
        %v3328 = vadd.f32 %v3207, 1.0
        %v3329 = vadd.f32 %v3209, 1.0
        %v3330 = vadd.f32 %v3211, 1.0
        %v3331 = vadd.f32 %v3213, 1.0
        %v3332 = vadd.f32 %v3215, 1.0
        %v3333 = vadd.f32 %v3217, 1.0
        %v3334 = vadd.f32 %v3219, 1.0
        %v3335 = vadd.f32 %v3221, 1.0
        %v3336 = vadd.f32 %v3223, 1.0
        %v3337 = vadd.f32 %v3225, 1.0
        %v3338 = vadd.f32 %v3227, 1.0
        %v3339 = vadd.f32 %v3229, 1.0
        %v3340 = vadd.f32 %v3231, 1.0
        %v3341 = vadd.f32 %v3233, 1.0
        %v3342 = vadd.f32 %v3235, 1.0
        %v3343 = vadd.f32 %v3237, 1.0
        %v3344 = vadd.f32 %v3239, 1.0
        %v3345 = vadd.f32 %v3241, 1.0
        %v3346 = vadd.f32 %v3243, 1.0
        %v3347 = vadd.f32 %v3245, 1.0
        %v3348 = vadd.f32 %v3247, 1.0
        %v3349 = vadd.f32 %v3249, 1.0
        %v3350 = vadd.f32 %v3251, 1.0
        %v3351 = vadd.f32 %v3253, 1.0
        %v3352 = vadd.f32 %v3255, 1.0
        %v3353 = vadd.f32 %v3257, 1.0
        %v3354 = vadd.f32 %v3259, 1.0
        %v3355 = vadd.f32 %v3261, 1.0
        %v3356 = vadd.f32 %v3263, 1.0
        %v3357 = vadd.f32 %v3265, 1.0
        %v3358 = vadd.f32 %v3267, 1.0
        %v3359 = vadd.f32 %v3269, 1.0
        %v3360 = vadd.f32 %v3271, 1.0
        %v3361 = vadd.f32 %v3273, 1.0
        %v3362 = vadd.f32 %v3275, 1.0
        %v3363 = vadd.f32 %v3277, 1.0
        %v3364 = vadd.f32 %v3279, 1.0
        %v3365 = vadd.f32 %v3281, 1.0
        %v3366 = vadd.f32 %v3283, 1.0
        %v3367 = vadd.f32 %v3285, 1.0
        %v3368 = vadd.f32 %v3287, 1.0
        %v3369 = vadd.f32 %v3289, 1.0
        %v3370 = vadd.f32 %v3291, 1.0
        %v3371 = vadd.f32 %v3293, 1.0
        %v3372 = vadd.f32 %v3295, 1.0
        %v3373 = vadd.f32 %v3297, 1.0
        %v3374 = vadd.f32 %v3299, 1.0
        %v3375 = vadd.f32 %v3301, 1.0
        %v3376 = vadd.f32 %v3303, 1.0
        %v3377 = vadd.f32 %v3305, 1.0
        %v3378 = vadd.f32 %v3307, 1.0
        %v3379 = vadd.f32 %v3309, 1.0
        %v3380 = vadd.f32 %v3311, 1.0
        %v3381 = vadd.f32 %v3313, 1.0
        %v3382 = vadd.f32 %v3315, 1.0
        %v3383 = vadd.f32 %v3317, 1.0
        %v3384 = vadd.f32 %v3319, 1.0
        %v3385 = vadd.f32 %v3321, 1.0
        %v3386 = vrcp.pop %v3322
        %v3387 = vmul.f32 1.0, %v3386
        %v3388 = vrcp.pop %v3323
        %v3389 = vmul.f32 1.0, %v3388
        %v3390 = vrcp.pop %v3324
        %v3391 = vmul.f32 1.0, %v3390
        %v3392 = vrcp.pop %v3325
        %v3393 = vmul.f32 1.0, %v3392
        %v3394 = vrcp.pop %v3326
        %v3395 = vmul.f32 1.0, %v3394
        %v3396 = vrcp.pop %v3327
        %v3397 = vmul.f32 1.0, %v3396
        %v3398 = vrcp.pop %v3328
        %v3399 = vmul.f32 1.0, %v3398
        %v3400 = vrcp.pop %v3329
        %v3401 = vmul.f32 1.0, %v3400
        %v3402 = vrcp.pop %v3330
        %v3403 = vmul.f32 1.0, %v3402
        %v3404 = vrcp.pop %v3331
        %v3405 = vmul.f32 1.0, %v3404
        %v3406 = vrcp.pop %v3332
        %v3407 = vmul.f32 1.0, %v3406
        %v3408 = vrcp.pop %v3333
        %v3409 = vmul.f32 1.0, %v3408
        %v3410 = vrcp.pop %v3334
        %v3411 = vmul.f32 1.0, %v3410
        %v3412 = vrcp.pop %v3335
        %v3413 = vmul.f32 1.0, %v3412
        %v3414 = vrcp.pop %v3336
        %v3415 = vmul.f32 1.0, %v3414
        %v3416 = vrcp.pop %v3337
        %v3417 = vmul.f32 1.0, %v3416
        %v3418 = vrcp.pop %v3338
        %v3419 = vmul.f32 1.0, %v3418
        %v3420 = vrcp.pop %v3339
        %v3421 = vmul.f32 1.0, %v3420
        %v3422 = vrcp.pop %v3340
        %v3423 = vmul.f32 1.0, %v3422
        %v3424 = vrcp.pop %v3341
        %v3425 = vmul.f32 1.0, %v3424
        %v3426 = vrcp.pop %v3342
        %v3427 = vmul.f32 1.0, %v3426
        %v3428 = vrcp.pop %v3343
        %v3429 = vmul.f32 1.0, %v3428
        %v3430 = vrcp.pop %v3344
        %v3431 = vmul.f32 1.0, %v3430
        %v3432 = vrcp.pop %v3345
        %v3433 = vmul.f32 1.0, %v3432
        %v3434 = vrcp.pop %v3346
        %v3435 = vmul.f32 1.0, %v3434
        %v3436 = vrcp.pop %v3347
        %v3437 = vmul.f32 1.0, %v3436
        %v3438 = vrcp.pop %v3348
        %v3439 = vmul.f32 1.0, %v3438
        %v3440 = vrcp.pop %v3349
        %v3441 = vmul.f32 1.0, %v3440
        %v3442 = vrcp.pop %v3350
        %v3443 = vmul.f32 1.0, %v3442
        %v3444 = vrcp.pop %v3351
        %v3445 = vmul.f32 1.0, %v3444
        %v3446 = vrcp.pop %v3352
        %v3447 = vmul.f32 1.0, %v3446
        %v3448 = vrcp.pop %v3353
        %v3449 = vmul.f32 1.0, %v3448
        %v3450 = vrcp.pop %v3354
        %v3451 = vmul.f32 1.0, %v3450
        %v3452 = vrcp.pop %v3355
        %v3453 = vmul.f32 1.0, %v3452
        %v3454 = vrcp.pop %v3356
        %v3455 = vmul.f32 1.0, %v3454
        %v3456 = vrcp.pop %v3357
        %v3457 = vmul.f32 1.0, %v3456
        %v3458 = vrcp.pop %v3358
        %v3459 = vmul.f32 1.0, %v3458
        %v3460 = vrcp.pop %v3359
        %v3461 = vmul.f32 1.0, %v3460
        %v3462 = vrcp.pop %v3360
        %v3463 = vmul.f32 1.0, %v3462
        %v3464 = vrcp.pop %v3361
        %v3465 = vmul.f32 1.0, %v3464
        %v3466 = vrcp.pop %v3362
        %v3467 = vmul.f32 1.0, %v3466
        %v3468 = vrcp.pop %v3363
        %v3469 = vmul.f32 1.0, %v3468
        %v3470 = vrcp.pop %v3364
        %v3471 = vmul.f32 1.0, %v3470
        %v3472 = vrcp.pop %v3365
        %v3473 = vmul.f32 1.0, %v3472
        %v3474 = vrcp.pop %v3366
        %v3475 = vmul.f32 1.0, %v3474
        %v3476 = vrcp.pop %v3367
        %v3477 = vmul.f32 1.0, %v3476
        %v3478 = vrcp.pop %v3368
        %v3479 = vmul.f32 1.0, %v3478
        %v3480 = vrcp.pop %v3369
        %v3481 = vmul.f32 1.0, %v3480
        %v3482 = vrcp.pop %v3370
        %v3483 = vmul.f32 1.0, %v3482
        %v3484 = vrcp.pop %v3371
        %v3485 = vmul.f32 1.0, %v3484
        %v3486 = vrcp.pop %v3372
        %v3487 = vmul.f32 1.0, %v3486
        %v3488 = vrcp.pop %v3373
        %v3489 = vmul.f32 1.0, %v3488
        %v3490 = vrcp.pop %v3374
        %v3491 = vmul.f32 1.0, %v3490
        %v3492 = vrcp.pop %v3375
        %v3493 = vmul.f32 1.0, %v3492
        %v3494 = vrcp.pop %v3376
        %v3495 = vmul.f32 1.0, %v3494
        %v3496 = vrcp.pop %v3377
        %v3497 = vmul.f32 1.0, %v3496
        %v3498 = vrcp.pop %v3378
        %v3499 = vmul.f32 1.0, %v3498
        %v3500 = vrcp.pop %v3379
        %v3501 = vmul.f32 1.0, %v3500
        %v3502 = vrcp.pop %v3380
        %v3503 = vmul.f32 1.0, %v3502
        %v3504 = vrcp.pop %v3381
        %v3505 = vmul.f32 1.0, %v3504
        %v3506 = vrcp.pop %v3382
        %v3507 = vmul.f32 1.0, %v3506
        %v3508 = vrcp.pop %v3383
        %v3509 = vmul.f32 1.0, %v3508
        %v3510 = vrcp.pop %v3384
        %v3511 = vmul.f32 1.0, %v3510
        %v3512 = vrcp.pop %v3385
        %v3513 = vmul.f32 1.0, %v3512
        %v3514 = vmul.f32 %v3066, %v3387
        %v3515 = vmul.f32 %v3067, %v3389
        %v3516 = vmul.f32 %v3068, %v3391
        %v3517 = vmul.f32 %v3069, %v3393
        %v3518 = vmul.f32 %v3070, %v3395
        %v3519 = vmul.f32 %v3071, %v3397
        %v3520 = vmul.f32 %v3072, %v3399
        %v3521 = vmul.f32 %v3073, %v3401
        %v3522 = vmul.f32 %v3074, %v3403
        %v3523 = vmul.f32 %v3075, %v3405
        %v3524 = vmul.f32 %v3076, %v3407
        %v3525 = vmul.f32 %v3077, %v3409
        %v3526 = vmul.f32 %v3078, %v3411
        %v3527 = vmul.f32 %v3079, %v3413
        %v3528 = vmul.f32 %v3080, %v3415
        %v3529 = vmul.f32 %v3081, %v3417
        %v3530 = vmul.f32 %v3082, %v3419
        %v3531 = vmul.f32 %v3083, %v3421
        %v3532 = vmul.f32 %v3084, %v3423
        %v3533 = vmul.f32 %v3085, %v3425
        %v3534 = vmul.f32 %v3086, %v3427
        %v3535 = vmul.f32 %v3087, %v3429
        %v3536 = vmul.f32 %v3088, %v3431
        %v3537 = vmul.f32 %v3089, %v3433
        %v3538 = vmul.f32 %v3090, %v3435
        %v3539 = vmul.f32 %v3091, %v3437
        %v3540 = vmul.f32 %v3092, %v3439
        %v3541 = vmul.f32 %v3093, %v3441
        %v3542 = vmul.f32 %v3094, %v3443
        %v3543 = vmul.f32 %v3095, %v3445
        %v3544 = vmul.f32 %v3096, %v3447
        %v3545 = vmul.f32 %v3097, %v3449
        %v3546 = vmul.f32 %v3098, %v3451
        %v3547 = vmul.f32 %v3099, %v3453
        %v3548 = vmul.f32 %v3100, %v3455
        %v3549 = vmul.f32 %v3101, %v3457
        %v3550 = vmul.f32 %v3102, %v3459
        %v3551 = vmul.f32 %v3103, %v3461
        %v3552 = vmul.f32 %v3104, %v3463
        %v3553 = vmul.f32 %v3105, %v3465
        %v3554 = vmul.f32 %v3106, %v3467
        %v3555 = vmul.f32 %v3107, %v3469
        %v3556 = vmul.f32 %v3108, %v3471
        %v3557 = vmul.f32 %v3109, %v3473
        %v3558 = vmul.f32 %v3110, %v3475
        %v3559 = vmul.f32 %v3111, %v3477
        %v3560 = vmul.f32 %v3112, %v3479
        %v3561 = vmul.f32 %v3113, %v3481
        %v3562 = vmul.f32 %v3114, %v3483
        %v3563 = vmul.f32 %v3115, %v3485
        %v3564 = vmul.f32 %v3116, %v3487
        %v3565 = vmul.f32 %v3117, %v3489
        %v3566 = vmul.f32 %v3118, %v3491
        %v3567 = vmul.f32 %v3119, %v3493
        %v3568 = vmul.f32 %v3120, %v3495
        %v3569 = vmul.f32 %v3121, %v3497
        %v3570 = vmul.f32 %v3122, %v3499
        %v3571 = vmul.f32 %v3123, %v3501
        %v3572 = vmul.f32 %v3124, %v3503
        %v3573 = vmul.f32 %v3125, %v3505
        %v3574 = vmul.f32 %v3126, %v3507
        %v3575 = vmul.f32 %v3127, %v3509
        %v3576 = vmul.f32 %v3128, %v3511
        %v3577 = vmul.f32 %v3129, %v3513
        %v3578 = vpack.c.bf16 %v3515, %v3514
        %v3579 = vpack.c.bf16 %v3517, %v3516
        %v3580 = vpack.c.bf16 %v3519, %v3518
        %v3581 = vpack.c.bf16 %v3521, %v3520
        %v3582 = vpack.c.bf16 %v3523, %v3522
        %v3583 = vpack.c.bf16 %v3525, %v3524
        %v3584 = vpack.c.bf16 %v3527, %v3526
        %v3585 = vpack.c.bf16 %v3529, %v3528
        %v3586 = vpack.c.bf16 %v3531, %v3530
        %v3587 = vpack.c.bf16 %v3533, %v3532
        %v3588 = vpack.c.bf16 %v3535, %v3534
        %v3589 = vpack.c.bf16 %v3537, %v3536
        %v3590 = vpack.c.bf16 %v3539, %v3538
        %v3591 = vpack.c.bf16 %v3541, %v3540
        %v3592 = vpack.c.bf16 %v3543, %v3542
        %v3593 = vpack.c.bf16 %v3545, %v3544
        %v3594 = vpack.c.bf16 %v3547, %v3546
        %v3595 = vpack.c.bf16 %v3549, %v3548
        %v3596 = vpack.c.bf16 %v3551, %v3550
        %v3597 = vpack.c.bf16 %v3553, %v3552
        %v3598 = vpack.c.bf16 %v3555, %v3554
        %v3599 = vpack.c.bf16 %v3557, %v3556
        %v3600 = vpack.c.bf16 %v3559, %v3558
        %v3601 = vpack.c.bf16 %v3561, %v3560
        %v3602 = vpack.c.bf16 %v3563, %v3562
        %v3603 = vpack.c.bf16 %v3565, %v3564
        %v3604 = vpack.c.bf16 %v3567, %v3566
        %v3605 = vpack.c.bf16 %v3569, %v3568
        %v3606 = vpack.c.bf16 %v3571, %v3570
        %v3607 = vpack.c.bf16 %v3573, %v3572
        %v3608 = vpack.c.bf16 %v3575, %v3574
        %v3609 = vpack.c.bf16 %v3577, %v3576
        %v3610 = vld [vmem:[%s5] sm:$0xf]
        %v3611 = vld [vmem:[%s5 + $0x4] sm:$0xf]
        %v3612 = vld [vmem:[%s6] sm:$0x1]
        %v3614 = vlaneseq
        %v3615 = vshrl.u32 %v3614, 7
        %v3616 = vsub.s32 0, %v3615
        %v3617 = vrot.slane %v3612, %v3616
        %v3621 = vunpack.c.l.b16 %v3610
        %v3622 = vunpack.c.l.b16 %v3611
        %v3623 = vpack.c.b16 %v3622, %v3621
        %v3626 = vsel %vm1478, %v3578, 0
        %v3629 = vsel %vm1478, %v3579, 0
        %v3632 = vsel %vm1478, %v3580, 0
        %v3635 = vsel %vm1478, %v3581, 0
        %v3638 = vsel %vm1478, %v3582, 0
        %v3641 = vsel %vm1478, %v3583, 0
        %v3644 = vsel %vm1478, %v3584, 0
        %v3647 = vsel %vm1478, %v3585, 0
        %v3650 = vsel %vm1478, %v3586, 0
        %v3653 = vsel %vm1478, %v3587, 0
        %v3656 = vsel %vm1478, %v3588, 0
        %v3659 = vsel %vm1478, %v3589, 0
        %v3662 = vsel %vm1478, %v3590, 0
        %v3665 = vsel %vm1478, %v3591, 0
        %v3668 = vsel %vm1478, %v3592, 0
        %v3671 = vsel %vm1478, %v3593, 0
        %v3674 = vsel %vm1478, %v3594, 0
        %v3677 = vsel %vm1478, %v3595, 0
        %v3680 = vsel %vm1478, %v3596, 0
        %v3683 = vsel %vm1478, %v3597, 0
        %v3686 = vsel %vm1478, %v3598, 0
        %v3689 = vsel %vm1478, %v3599, 0
        %v3692 = vsel %vm1478, %v3600, 0
        %v3695 = vsel %vm1478, %v3601, 0
        %v3698 = vsel %vm1478, %v3602, 0
        %v3701 = vsel %vm1478, %v3603, 0
        %v3704 = vsel %vm1478, %v3604, 0
        %v3707 = vsel %vm1478, %v3605, 0
        %v3710 = vsel %vm1478, %v3606, 0
        %v3713 = vsel %vm1478, %v3607, 0
        %v3716 = vsel %vm1478, %v3608, 0
        %v3719 = vsel %vm1478, %v3609, 0
        %3721 = vmatprep.subr.bf16.mxu0 0
        %3722 = vmatpush1.bf16.msra.mxu0 %v3623
        %3723 = vmatprep.subr.bf16.mxu0 0
        %3724 = vmatpush1.bf16.msra.mxu0 0
        %3725 = vmatprep.subr.bf16.mxu0 0
        %3726 = vmatpush1.bf16.msra.mxu0 0
        %3727 = vmatprep.subr.bf16.mxu0 0
        %3728 = vmatpush1.bf16.msra.mxu0 0
        %3729 = vmatprep.subr.bf16.mxu0 0
        %3730 = vmatpush1.bf16.msra.mxu0 0
        %3731 = vmatprep.subr.bf16.mxu0 0
        %3732 = vmatpush1.bf16.msra.mxu0 0
        %3733 = vmatprep.subr.bf16.mxu0 0
        %3734 = vmatpush1.bf16.msra.mxu0 0
        %3735 = vmatprep.subr.bf16.mxu0 0
        %3736 = vmatpush1.bf16.msra.mxu0 0
        %3737 = vmatprep.subr.bf16.mxu0 0
        %3738 = vmatpush1.bf16.msra.mxu0 0
        %3739 = vmatprep.subr.bf16.mxu0 0
        %3740 = vmatpush1.bf16.msra.mxu0 0
        %3741 = vmatprep.subr.bf16.mxu0 0
        %3742 = vmatpush1.bf16.msra.mxu0 0
        %3743 = vmatprep.subr.bf16.mxu0 0
        %3744 = vmatpush1.bf16.msra.mxu0 0
        %3745 = vmatprep.subr.bf16.mxu0 0
        %3746 = vmatpush1.bf16.msra.mxu0 0
        %3747 = vmatprep.subr.bf16.mxu0 0
        %3748 = vmatpush1.bf16.msra.mxu0 0
        %3749 = vmatprep.subr.bf16.mxu0 0
        %3750 = vmatpush1.bf16.msra.mxu0 0
        %3751 = vmatprep.subr.bf16.mxu0 0
        %3752 = vmatpush1.bf16.msra.mxu0 0
        %3753 = vmatprep.mubr.bf16.mxu0 0
        %3754 = vmatmul.mubr.bf16.gmra.mrb[0].mxu0 %v3626
        %v3755 = vpop.f32.mrb[0].mxu0
        %v3756 = vadd.f32 %v3617, %v3755
        %v3757 = vpop.f32.mrb[0].mxu0
        %v3758 = vpop.f32.mrb[0].mxu0
        %v3759 = vadd.f32 %v3617, %v3758
        %v3760 = vpop.f32.mrb[0].mxu0
        %3761 = vmatprep.mubr.bf16.mxu0 0
        %3762 = vmatmul.mubr.bf16.gmra.mrb[0].mxu0 %v3629
        %v3763 = vpop.f32.mrb[0].mxu0
        %v3764 = vadd.f32 %v3617, %v3763
        %v3765 = vpop.f32.mrb[0].mxu0
        %v3766 = vpop.f32.mrb[0].mxu0
        %v3767 = vadd.f32 %v3617, %v3766
        %v3768 = vpop.f32.mrb[0].mxu0
        %3769 = vmatprep.mubr.bf16.mxu0 0
        %3770 = vmatmul.mubr.bf16.gmra.mrb[0].mxu0 %v3632
        %v3771 = vpop.f32.mrb[0].mxu0
        %v3772 = vadd.f32 %v3617, %v3771
        %v3773 = vpop.f32.mrb[0].mxu0
        %v3774 = vpop.f32.mrb[0].mxu0
        %v3775 = vadd.f32 %v3617, %v3774
        %v3776 = vpop.f32.mrb[0].mxu0
        %3777 = vmatprep.mubr.bf16.mxu0 0
        %3778 = vmatmul.mubr.bf16.gmra.mrb[0].mxu0 %v3635
        %v3779 = vpop.f32.mrb[0].mxu0
        %v3780 = vadd.f32 %v3617, %v3779
        %v3781 = vpop.f32.mrb[0].mxu0
        %v3782 = vpop.f32.mrb[0].mxu0
        %v3783 = vadd.f32 %v3617, %v3782
        %v3784 = vpop.f32.mrb[0].mxu0
        %3785 = vmatprep.mubr.bf16.mxu0 0
        %3786 = vmatmul.mubr.bf16.gmra.mrb[0].mxu0 %v3638
        %v3787 = vpop.f32.mrb[0].mxu0
        %v3788 = vadd.f32 %v3617, %v3787
        %v3789 = vpop.f32.mrb[0].mxu0
        %v3790 = vpop.f32.mrb[0].mxu0
        %v3791 = vadd.f32 %v3617, %v3790
        %v3792 = vpop.f32.mrb[0].mxu0
        %3793 = vmatprep.mubr.bf16.mxu0 0
        %3794 = vmatmul.mubr.bf16.gmra.mrb[0].mxu0 %v3641
        %v3795 = vpop.f32.mrb[0].mxu0
        %v3796 = vadd.f32 %v3617, %v3795
        %v3797 = vpop.f32.mrb[0].mxu0
        %v3798 = vpop.f32.mrb[0].mxu0
        %v3799 = vadd.f32 %v3617, %v3798
        %v3800 = vpop.f32.mrb[0].mxu0
        %3801 = vmatprep.mubr.bf16.mxu0 0
        %3802 = vmatmul.mubr.bf16.gmra.mrb[0].mxu0 %v3644
        %v3803 = vpop.f32.mrb[0].mxu0
        %v3804 = vadd.f32 %v3617, %v3803
        %v3805 = vpop.f32.mrb[0].mxu0
        %v3806 = vpop.f32.mrb[0].mxu0
        %v3807 = vadd.f32 %v3617, %v3806
        %v3808 = vpop.f32.mrb[0].mxu0
        %3809 = vmatprep.mubr.bf16.mxu0 0
        %3810 = vmatmul.mubr.bf16.gmra.mrb[0].mxu0 %v3647
        %v3811 = vpop.f32.mrb[0].mxu0
        %v3812 = vadd.f32 %v3617, %v3811
        %v3813 = vpop.f32.mrb[0].mxu0
        %v3814 = vpop.f32.mrb[0].mxu0
        %v3815 = vadd.f32 %v3617, %v3814
        %v3816 = vpop.f32.mrb[0].mxu0
        %3817 = vmatprep.mubr.bf16.mxu0 0
        %3818 = vmatmul.mubr.bf16.gmra.mrb[0].mxu0 %v3650
        %v3819 = vpop.f32.mrb[0].mxu0
        %v3820 = vadd.f32 %v3617, %v3819
        %v3821 = vpop.f32.mrb[0].mxu0
        %v3822 = vpop.f32.mrb[0].mxu0
        %v3823 = vadd.f32 %v3617, %v3822
        %v3824 = vpop.f32.mrb[0].mxu0
        %3825 = vmatprep.mubr.bf16.mxu0 0
        %3826 = vmatmul.mubr.bf16.gmra.mrb[0].mxu0 %v3653
        %v3827 = vpop.f32.mrb[0].mxu0
        %v3828 = vadd.f32 %v3617, %v3827
        %v3829 = vpop.f32.mrb[0].mxu0
        %v3830 = vpop.f32.mrb[0].mxu0
        %v3831 = vadd.f32 %v3617, %v3830
        %v3832 = vpop.f32.mrb[0].mxu0
        %3833 = vmatprep.mubr.bf16.mxu0 0
        %3834 = vmatmul.mubr.bf16.gmra.mrb[0].mxu0 %v3656
        %v3835 = vpop.f32.mrb[0].mxu0
        %v3836 = vadd.f32 %v3617, %v3835
        %v3837 = vpop.f32.mrb[0].mxu0
        %v3838 = vpop.f32.mrb[0].mxu0
        %v3839 = vadd.f32 %v3617, %v3838
        %v3840 = vpop.f32.mrb[0].mxu0
        %3841 = vmatprep.mubr.bf16.mxu0 0
        %3842 = vmatmul.mubr.bf16.gmra.mrb[0].mxu0 %v3659
        %v3843 = vpop.f32.mrb[0].mxu0
        %v3844 = vadd.f32 %v3617, %v3843
        %v3845 = vpop.f32.mrb[0].mxu0
        %v3846 = vpop.f32.mrb[0].mxu0
        %v3847 = vadd.f32 %v3617, %v3846
        %v3848 = vpop.f32.mrb[0].mxu0
        %3849 = vmatprep.mubr.bf16.mxu0 0
        %3850 = vmatmul.mubr.bf16.gmra.mrb[0].mxu0 %v3662
        %v3851 = vpop.f32.mrb[0].mxu0
        %v3852 = vadd.f32 %v3617, %v3851
        %v3853 = vpop.f32.mrb[0].mxu0
        %v3854 = vpop.f32.mrb[0].mxu0
        %v3855 = vadd.f32 %v3617, %v3854
        %v3856 = vpop.f32.mrb[0].mxu0
        %3857 = vmatprep.mubr.bf16.mxu0 0
        %3858 = vmatmul.mubr.bf16.gmra.mrb[0].mxu0 %v3665
        %v3859 = vpop.f32.mrb[0].mxu0
        %v3860 = vadd.f32 %v3617, %v3859
        %v3861 = vpop.f32.mrb[0].mxu0
        %v3862 = vpop.f32.mrb[0].mxu0
        %v3863 = vadd.f32 %v3617, %v3862
        %v3864 = vpop.f32.mrb[0].mxu0
        %3865 = vmatprep.mubr.bf16.mxu0 0
        %3866 = vmatmul.mubr.bf16.gmra.mrb[0].mxu0 %v3668
        %v3867 = vpop.f32.mrb[0].mxu0
        %v3868 = vadd.f32 %v3617, %v3867
        %v3869 = vpop.f32.mrb[0].mxu0
        %v3870 = vpop.f32.mrb[0].mxu0
        %v3871 = vadd.f32 %v3617, %v3870
        %v3872 = vpop.f32.mrb[0].mxu0
        %3873 = vmatprep.mubr.bf16.mxu0 0
        %3874 = vmatmul.mubr.bf16.gmra.mrb[0].mxu0 %v3671
        %v3875 = vpop.f32.mrb[0].mxu0
        %v3876 = vadd.f32 %v3617, %v3875
        %v3877 = vpop.f32.mrb[0].mxu0
        %v3878 = vpop.f32.mrb[0].mxu0
        %v3879 = vadd.f32 %v3617, %v3878
        %v3880 = vpop.f32.mrb[0].mxu0
        %3881 = vmatprep.mubr.bf16.mxu0 0
        %3882 = vmatmul.mubr.bf16.gmra.mrb[0].mxu0 %v3674
        %v3883 = vpop.f32.mrb[0].mxu0
        %v3884 = vadd.f32 %v3617, %v3883
        %v3885 = vpop.f32.mrb[0].mxu0
        %v3886 = vpop.f32.mrb[0].mxu0
        %v3887 = vadd.f32 %v3617, %v3886
        %v3888 = vpop.f32.mrb[0].mxu0
        %3889 = vmatprep.mubr.bf16.mxu0 0
        %3890 = vmatmul.mubr.bf16.gmra.mrb[0].mxu0 %v3677
        %v3891 = vpop.f32.mrb[0].mxu0
        %v3892 = vadd.f32 %v3617, %v3891
        %v3893 = vpop.f32.mrb[0].mxu0
        %v3894 = vpop.f32.mrb[0].mxu0
        %v3895 = vadd.f32 %v3617, %v3894
        %v3896 = vpop.f32.mrb[0].mxu0
        %3897 = vmatprep.mubr.bf16.mxu0 0
        %3898 = vmatmul.mubr.bf16.gmra.mrb[0].mxu0 %v3680
        %v3899 = vpop.f32.mrb[0].mxu0
        %v3900 = vadd.f32 %v3617, %v3899
        %v3901 = vpop.f32.mrb[0].mxu0
        %v3902 = vpop.f32.mrb[0].mxu0
        %v3903 = vadd.f32 %v3617, %v3902
        %v3904 = vpop.f32.mrb[0].mxu0
        %3905 = vmatprep.mubr.bf16.mxu0 0
        %3906 = vmatmul.mubr.bf16.gmra.mrb[0].mxu0 %v3683
        %v3907 = vpop.f32.mrb[0].mxu0
        %v3908 = vadd.f32 %v3617, %v3907
        %v3909 = vpop.f32.mrb[0].mxu0
        %v3910 = vpop.f32.mrb[0].mxu0
        %v3911 = vadd.f32 %v3617, %v3910
        %v3912 = vpop.f32.mrb[0].mxu0
        %3913 = vmatprep.mubr.bf16.mxu0 0
        %3914 = vmatmul.mubr.bf16.gmra.mrb[0].mxu0 %v3686
        %v3915 = vpop.f32.mrb[0].mxu0
        %v3916 = vadd.f32 %v3617, %v3915
        %v3917 = vpop.f32.mrb[0].mxu0
        %v3918 = vpop.f32.mrb[0].mxu0
        %v3919 = vadd.f32 %v3617, %v3918
        %v3920 = vpop.f32.mrb[0].mxu0
        %3921 = vmatprep.mubr.bf16.mxu0 0
        %3922 = vmatmul.mubr.bf16.gmra.mrb[0].mxu0 %v3689
        %v3923 = vpop.f32.mrb[0].mxu0
        %v3924 = vadd.f32 %v3617, %v3923
        %v3925 = vpop.f32.mrb[0].mxu0
        %v3926 = vpop.f32.mrb[0].mxu0
        %v3927 = vadd.f32 %v3617, %v3926
        %v3928 = vpop.f32.mrb[0].mxu0
        %3929 = vmatprep.mubr.bf16.mxu0 0
        %3930 = vmatmul.mubr.bf16.gmra.mrb[0].mxu0 %v3692
        %v3931 = vpop.f32.mrb[0].mxu0
        %v3932 = vadd.f32 %v3617, %v3931
        %v3933 = vpop.f32.mrb[0].mxu0
        %v3934 = vpop.f32.mrb[0].mxu0
        %v3935 = vadd.f32 %v3617, %v3934
        %v3936 = vpop.f32.mrb[0].mxu0
        %3937 = vmatprep.mubr.bf16.mxu0 0
        %3938 = vmatmul.mubr.bf16.gmra.mrb[0].mxu0 %v3695
        %v3939 = vpop.f32.mrb[0].mxu0
        %v3940 = vadd.f32 %v3617, %v3939
        %v3941 = vpop.f32.mrb[0].mxu0
        %v3942 = vpop.f32.mrb[0].mxu0
        %v3943 = vadd.f32 %v3617, %v3942
        %v3944 = vpop.f32.mrb[0].mxu0
        %3945 = vmatprep.mubr.bf16.mxu0 0
        %3946 = vmatmul.mubr.bf16.gmra.mrb[0].mxu0 %v3698
        %v3947 = vpop.f32.mrb[0].mxu0
        %v3948 = vadd.f32 %v3617, %v3947
        %v3949 = vpop.f32.mrb[0].mxu0
        %v3950 = vpop.f32.mrb[0].mxu0
        %v3951 = vadd.f32 %v3617, %v3950
        %v3952 = vpop.f32.mrb[0].mxu0
        %3953 = vmatprep.mubr.bf16.mxu0 0
        %3954 = vmatmul.mubr.bf16.gmra.mrb[0].mxu0 %v3701
        %v3955 = vpop.f32.mrb[0].mxu0
        %v3956 = vadd.f32 %v3617, %v3955
        %v3957 = vpop.f32.mrb[0].mxu0
        %v3958 = vpop.f32.mrb[0].mxu0
        %v3959 = vadd.f32 %v3617, %v3958
        %v3960 = vpop.f32.mrb[0].mxu0
        %3961 = vmatprep.mubr.bf16.mxu0 0
        %3962 = vmatmul.mubr.bf16.gmra.mrb[0].mxu0 %v3704
        %v3963 = vpop.f32.mrb[0].mxu0
        %v3964 = vadd.f32 %v3617, %v3963
        %v3965 = vpop.f32.mrb[0].mxu0
        %v3966 = vpop.f32.mrb[0].mxu0
        %v3967 = vadd.f32 %v3617, %v3966
        %v3968 = vpop.f32.mrb[0].mxu0
        %3969 = vmatprep.mubr.bf16.mxu0 0
        %3970 = vmatmul.mubr.bf16.gmra.mrb[0].mxu0 %v3707
        %v3971 = vpop.f32.mrb[0].mxu0
        %v3972 = vadd.f32 %v3617, %v3971
        %v3973 = vpop.f32.mrb[0].mxu0
        %v3974 = vpop.f32.mrb[0].mxu0
        %v3975 = vadd.f32 %v3617, %v3974
        %v3976 = vpop.f32.mrb[0].mxu0
        %3977 = vmatprep.mubr.bf16.mxu0 0
        %3978 = vmatmul.mubr.bf16.gmra.mrb[0].mxu0 %v3710
        %v3979 = vpop.f32.mrb[0].mxu0
        %v3980 = vadd.f32 %v3617, %v3979
        %v3981 = vpop.f32.mrb[0].mxu0
        %v3982 = vpop.f32.mrb[0].mxu0
        %v3983 = vadd.f32 %v3617, %v3982
        %v3984 = vpop.f32.mrb[0].mxu0
        %3985 = vmatprep.mubr.bf16.mxu0 0
        %3986 = vmatmul.mubr.bf16.gmra.mrb[0].mxu0 %v3713
        %v3987 = vpop.f32.mrb[0].mxu0
        %v3988 = vadd.f32 %v3617, %v3987
        %v3989 = vpop.f32.mrb[0].mxu0
        %v3990 = vpop.f32.mrb[0].mxu0
        %v3991 = vadd.f32 %v3617, %v3990
        %v3992 = vpop.f32.mrb[0].mxu0
        %3993 = vmatprep.mubr.bf16.mxu0 0
        %3994 = vmatmul.mubr.bf16.gmra.mrb[0].mxu0 %v3716
        %v3995 = vpop.f32.mrb[0].mxu0
        %v3996 = vadd.f32 %v3617, %v3995
        %v3997 = vpop.f32.mrb[0].mxu0
        %v3998 = vpop.f32.mrb[0].mxu0
        %v3999 = vadd.f32 %v3617, %v3998
        %v4000 = vpop.f32.mrb[0].mxu0
        %4001 = vmatprep.mubr.bf16.mxu0 0
        %4002 = vmatmul.mubr.bf16.gmra.mrb[0].mxu0 %v3719
        %v4003 = vpop.f32.mrb[0].mxu0
        %v4004 = vadd.f32 %v3617, %v4003
        %v4005 = vpop.f32.mrb[0].mxu0
        %v4006 = vpop.f32.mrb[0].mxu0
        %v4007 = vadd.f32 %v3617, %v4006
        %v4008 = vpop.f32.mrb[0].mxu0
        %4009 = vdwg.mxu0
        %v4010 = vxor.u32 %v3756, 2147483648
        %v4011 = vxor.u32 %v3759, 2147483648
        %v4012 = vxor.u32 %v3764, 2147483648
        %v4013 = vxor.u32 %v3767, 2147483648
        %v4014 = vxor.u32 %v3772, 2147483648
        %v4015 = vxor.u32 %v3775, 2147483648
        %v4016 = vxor.u32 %v3780, 2147483648
        %v4017 = vxor.u32 %v3783, 2147483648
        %v4018 = vxor.u32 %v3788, 2147483648
        %v4019 = vxor.u32 %v3791, 2147483648
        %v4020 = vxor.u32 %v3796, 2147483648
        %v4021 = vxor.u32 %v3799, 2147483648
        %v4022 = vxor.u32 %v3804, 2147483648
        %v4023 = vxor.u32 %v3807, 2147483648
        %v4024 = vxor.u32 %v3812, 2147483648
        %v4025 = vxor.u32 %v3815, 2147483648
        %v4026 = vxor.u32 %v3820, 2147483648
        %v4027 = vxor.u32 %v3823, 2147483648
        %v4028 = vxor.u32 %v3828, 2147483648
        %v4029 = vxor.u32 %v3831, 2147483648
        %v4030 = vxor.u32 %v3836, 2147483648
        %v4031 = vxor.u32 %v3839, 2147483648
        %v4032 = vxor.u32 %v3844, 2147483648
        %v4033 = vxor.u32 %v3847, 2147483648
        %v4034 = vxor.u32 %v3852, 2147483648
        %v4035 = vxor.u32 %v3855, 2147483648
        %v4036 = vxor.u32 %v3860, 2147483648
        %v4037 = vxor.u32 %v3863, 2147483648
        %v4038 = vxor.u32 %v3868, 2147483648
        %v4039 = vxor.u32 %v3871, 2147483648
        %v4040 = vxor.u32 %v3876, 2147483648
        %v4041 = vxor.u32 %v3879, 2147483648
        %v4042 = vxor.u32 %v3884, 2147483648
        %v4043 = vxor.u32 %v3887, 2147483648
        %v4044 = vxor.u32 %v3892, 2147483648
        %v4045 = vxor.u32 %v3895, 2147483648
        %v4046 = vxor.u32 %v3900, 2147483648
        %v4047 = vxor.u32 %v3903, 2147483648
        %v4048 = vxor.u32 %v3908, 2147483648
        %v4049 = vxor.u32 %v3911, 2147483648
        %v4050 = vxor.u32 %v3916, 2147483648
        %v4051 = vxor.u32 %v3919, 2147483648
        %v4052 = vxor.u32 %v3924, 2147483648
        %v4053 = vxor.u32 %v3927, 2147483648
        %v4054 = vxor.u32 %v3932, 2147483648
        %v4055 = vxor.u32 %v3935, 2147483648
        %v4056 = vxor.u32 %v3940, 2147483648
        %v4057 = vxor.u32 %v3943, 2147483648
        %v4058 = vxor.u32 %v3948, 2147483648
        %v4059 = vxor.u32 %v3951, 2147483648
        %v4060 = vxor.u32 %v3956, 2147483648
        %v4061 = vxor.u32 %v3959, 2147483648
        %v4062 = vxor.u32 %v3964, 2147483648
        %v4063 = vxor.u32 %v3967, 2147483648
        %v4064 = vxor.u32 %v3972, 2147483648
        %v4065 = vxor.u32 %v3975, 2147483648
        %v4066 = vxor.u32 %v3980, 2147483648
        %v4067 = vxor.u32 %v3983, 2147483648
        %v4068 = vxor.u32 %v3988, 2147483648
        %v4069 = vxor.u32 %v3991, 2147483648
        %v4070 = vxor.u32 %v3996, 2147483648
        %v4071 = vxor.u32 %v3999, 2147483648
        %v4072 = vxor.u32 %v4004, 2147483648
        %v4073 = vxor.u32 %v4007, 2147483648
        %v4074 = vmul.f32 %v4010, 1.442695
        %v4075 = vpow.pop %v4074
        %v4076 = vmul.f32 %v4011, 1.442695
        %v4077 = vpow.pop %v4076
        %v4078 = vmul.f32 %v4012, 1.442695
        %v4079 = vpow.pop %v4078
        %v4080 = vmul.f32 %v4013, 1.442695
        %v4081 = vpow.pop %v4080
        %v4082 = vmul.f32 %v4014, 1.442695
        %v4083 = vpow.pop %v4082
        %v4084 = vmul.f32 %v4015, 1.442695
        %v4085 = vpow.pop %v4084
        %v4086 = vmul.f32 %v4016, 1.442695
        %v4087 = vpow.pop %v4086
        %v4088 = vmul.f32 %v4017, 1.442695
        %v4089 = vpow.pop %v4088
        %v4090 = vmul.f32 %v4018, 1.442695
        %v4091 = vpow.pop %v4090
        %v4092 = vmul.f32 %v4019, 1.442695
        %v4093 = vpow.pop %v4092
        %v4094 = vmul.f32 %v4020, 1.442695
        %v4095 = vpow.pop %v4094
        %v4096 = vmul.f32 %v4021, 1.442695
        %v4097 = vpow.pop %v4096
        %v4098 = vmul.f32 %v4022, 1.442695
        %v4099 = vpow.pop %v4098
        %v4100 = vmul.f32 %v4023, 1.442695
        %v4101 = vpow.pop %v4100
        %v4102 = vmul.f32 %v4024, 1.442695
        %v4103 = vpow.pop %v4102
        %v4104 = vmul.f32 %v4025, 1.442695
        %v4105 = vpow.pop %v4104
        %v4106 = vmul.f32 %v4026, 1.442695
        %v4107 = vpow.pop %v4106
        %v4108 = vmul.f32 %v4027, 1.442695
        %v4109 = vpow.pop %v4108
        %v4110 = vmul.f32 %v4028, 1.442695
        %v4111 = vpow.pop %v4110
        %v4112 = vmul.f32 %v4029, 1.442695
        %v4113 = vpow.pop %v4112
        %v4114 = vmul.f32 %v4030, 1.442695
        %v4115 = vpow.pop %v4114
        %v4116 = vmul.f32 %v4031, 1.442695
        %v4117 = vpow.pop %v4116
        %v4118 = vmul.f32 %v4032, 1.442695
        %v4119 = vpow.pop %v4118
        %v4120 = vmul.f32 %v4033, 1.442695
        %v4121 = vpow.pop %v4120
        %v4122 = vmul.f32 %v4034, 1.442695
        %v4123 = vpow.pop %v4122
        %v4124 = vmul.f32 %v4035, 1.442695
        %v4125 = vpow.pop %v4124
        %v4126 = vmul.f32 %v4036, 1.442695
        %v4127 = vpow.pop %v4126
        %v4128 = vmul.f32 %v4037, 1.442695
        %v4129 = vpow.pop %v4128
        %v4130 = vmul.f32 %v4038, 1.442695
        %v4131 = vpow.pop %v4130
        %v4132 = vmul.f32 %v4039, 1.442695
        %v4133 = vpow.pop %v4132
        %v4134 = vmul.f32 %v4040, 1.442695
        %v4135 = vpow.pop %v4134
        %v4136 = vmul.f32 %v4041, 1.442695
        %v4137 = vpow.pop %v4136
        %v4138 = vmul.f32 %v4042, 1.442695
        %v4139 = vpow.pop %v4138
        %v4140 = vmul.f32 %v4043, 1.442695
        %v4141 = vpow.pop %v4140
        %v4142 = vmul.f32 %v4044, 1.442695
        %v4143 = vpow.pop %v4142
        %v4144 = vmul.f32 %v4045, 1.442695
        %v4145 = vpow.pop %v4144
        %v4146 = vmul.f32 %v4046, 1.442695
        %v4147 = vpow.pop %v4146
        %v4148 = vmul.f32 %v4047, 1.442695
        %v4149 = vpow.pop %v4148
        %v4150 = vmul.f32 %v4048, 1.442695
        %v4151 = vpow.pop %v4150
        %v4152 = vmul.f32 %v4049, 1.442695
        %v4153 = vpow.pop %v4152
        %v4154 = vmul.f32 %v4050, 1.442695
        %v4155 = vpow.pop %v4154
        %v4156 = vmul.f32 %v4051, 1.442695
        %v4157 = vpow.pop %v4156
        %v4158 = vmul.f32 %v4052, 1.442695
        %v4159 = vpow.pop %v4158
        %v4160 = vmul.f32 %v4053, 1.442695
        %v4161 = vpow.pop %v4160
        %v4162 = vmul.f32 %v4054, 1.442695
        %v4163 = vpow.pop %v4162
        %v4164 = vmul.f32 %v4055, 1.442695
        %v4165 = vpow.pop %v4164
        %v4166 = vmul.f32 %v4056, 1.442695
        %v4167 = vpow.pop %v4166
        %v4168 = vmul.f32 %v4057, 1.442695
        %v4169 = vpow.pop %v4168
        %v4170 = vmul.f32 %v4058, 1.442695
        %v4171 = vpow.pop %v4170
        %v4172 = vmul.f32 %v4059, 1.442695
        %v4173 = vpow.pop %v4172
        %v4174 = vmul.f32 %v4060, 1.442695
        %v4175 = vpow.pop %v4174
        %v4176 = vmul.f32 %v4061, 1.442695
        %v4177 = vpow.pop %v4176
        %v4178 = vmul.f32 %v4062, 1.442695
        %v4179 = vpow.pop %v4178
        %v4180 = vmul.f32 %v4063, 1.442695
        %v4181 = vpow.pop %v4180
        %v4182 = vmul.f32 %v4064, 1.442695
        %v4183 = vpow.pop %v4182
        %v4184 = vmul.f32 %v4065, 1.442695
        %v4185 = vpow.pop %v4184
        %v4186 = vmul.f32 %v4066, 1.442695
        %v4187 = vpow.pop %v4186
        %v4188 = vmul.f32 %v4067, 1.442695
        %v4189 = vpow.pop %v4188
        %v4190 = vmul.f32 %v4068, 1.442695
        %v4191 = vpow.pop %v4190
        %v4192 = vmul.f32 %v4069, 1.442695
        %v4193 = vpow.pop %v4192
        %v4194 = vmul.f32 %v4070, 1.442695
        %v4195 = vpow.pop %v4194
        %v4196 = vmul.f32 %v4071, 1.442695
        %v4197 = vpow.pop %v4196
        %v4198 = vmul.f32 %v4072, 1.442695
        %v4199 = vpow.pop %v4198
        %v4200 = vmul.f32 %v4073, 1.442695
        %v4201 = vpow.pop %v4200
        %v4202 = vadd.f32 %v4075, 1.0
        %v4203 = vadd.f32 %v4077, 1.0
        %v4204 = vadd.f32 %v4079, 1.0
        %v4205 = vadd.f32 %v4081, 1.0
        %v4206 = vadd.f32 %v4083, 1.0
        %v4207 = vadd.f32 %v4085, 1.0
        %v4208 = vadd.f32 %v4087, 1.0
        %v4209 = vadd.f32 %v4089, 1.0
        %v4210 = vadd.f32 %v4091, 1.0
        %v4211 = vadd.f32 %v4093, 1.0
        %v4212 = vadd.f32 %v4095, 1.0
        %v4213 = vadd.f32 %v4097, 1.0
        %v4214 = vadd.f32 %v4099, 1.0
        %v4215 = vadd.f32 %v4101, 1.0
        %v4216 = vadd.f32 %v4103, 1.0
        %v4217 = vadd.f32 %v4105, 1.0
        %v4218 = vadd.f32 %v4107, 1.0
        %v4219 = vadd.f32 %v4109, 1.0
        %v4220 = vadd.f32 %v4111, 1.0
        %v4221 = vadd.f32 %v4113, 1.0
        %v4222 = vadd.f32 %v4115, 1.0
        %v4223 = vadd.f32 %v4117, 1.0
        %v4224 = vadd.f32 %v4119, 1.0
        %v4225 = vadd.f32 %v4121, 1.0
        %v4226 = vadd.f32 %v4123, 1.0
        %v4227 = vadd.f32 %v4125, 1.0
        %v4228 = vadd.f32 %v4127, 1.0
        %v4229 = vadd.f32 %v4129, 1.0
        %v4230 = vadd.f32 %v4131, 1.0
        %v4231 = vadd.f32 %v4133, 1.0
        %v4232 = vadd.f32 %v4135, 1.0
        %v4233 = vadd.f32 %v4137, 1.0
        %v4234 = vadd.f32 %v4139, 1.0
        %v4235 = vadd.f32 %v4141, 1.0
        %v4236 = vadd.f32 %v4143, 1.0
        %v4237 = vadd.f32 %v4145, 1.0
        %v4238 = vadd.f32 %v4147, 1.0
        %v4239 = vadd.f32 %v4149, 1.0
        %v4240 = vadd.f32 %v4151, 1.0
        %v4241 = vadd.f32 %v4153, 1.0
        %v4242 = vadd.f32 %v4155, 1.0
        %v4243 = vadd.f32 %v4157, 1.0
        %v4244 = vadd.f32 %v4159, 1.0
        %v4245 = vadd.f32 %v4161, 1.0
        %v4246 = vadd.f32 %v4163, 1.0
        %v4247 = vadd.f32 %v4165, 1.0
        %v4248 = vadd.f32 %v4167, 1.0
        %v4249 = vadd.f32 %v4169, 1.0
        %v4250 = vadd.f32 %v4171, 1.0
        %v4251 = vadd.f32 %v4173, 1.0
        %v4252 = vadd.f32 %v4175, 1.0
        %v4253 = vadd.f32 %v4177, 1.0
        %v4254 = vadd.f32 %v4179, 1.0
        %v4255 = vadd.f32 %v4181, 1.0
        %v4256 = vadd.f32 %v4183, 1.0
        %v4257 = vadd.f32 %v4185, 1.0
        %v4258 = vadd.f32 %v4187, 1.0
        %v4259 = vadd.f32 %v4189, 1.0
        %v4260 = vadd.f32 %v4191, 1.0
        %v4261 = vadd.f32 %v4193, 1.0
        %v4262 = vadd.f32 %v4195, 1.0
        %v4263 = vadd.f32 %v4197, 1.0
        %v4264 = vadd.f32 %v4199, 1.0
        %v4265 = vadd.f32 %v4201, 1.0
        %v4266 = vrcp.pop %v4202
        %v4267 = vmul.f32 1.0, %v4266
        %v4268 = vrcp.pop %v4203
        %v4269 = vmul.f32 1.0, %v4268
        %v4270 = vrcp.pop %v4204
        %v4271 = vmul.f32 1.0, %v4270
        %v4272 = vrcp.pop %v4205
        %v4273 = vmul.f32 1.0, %v4272
        %v4274 = vrcp.pop %v4206
        %v4275 = vmul.f32 1.0, %v4274
        %v4276 = vrcp.pop %v4207
        %v4277 = vmul.f32 1.0, %v4276
        %v4278 = vrcp.pop %v4208
        %v4279 = vmul.f32 1.0, %v4278
        %v4280 = vrcp.pop %v4209
        %v4281 = vmul.f32 1.0, %v4280
        %v4282 = vrcp.pop %v4210
        %v4283 = vmul.f32 1.0, %v4282
        %v4284 = vrcp.pop %v4211
        %v4285 = vmul.f32 1.0, %v4284
        %v4286 = vrcp.pop %v4212
        %v4287 = vmul.f32 1.0, %v4286
        %v4288 = vrcp.pop %v4213
        %v4289 = vmul.f32 1.0, %v4288
        %v4290 = vrcp.pop %v4214
        %v4291 = vmul.f32 1.0, %v4290
        %v4292 = vrcp.pop %v4215
        %v4293 = vmul.f32 1.0, %v4292
        %v4294 = vrcp.pop %v4216
        %v4295 = vmul.f32 1.0, %v4294
        %v4296 = vrcp.pop %v4217
        %v4297 = vmul.f32 1.0, %v4296
        %v4298 = vrcp.pop %v4218
        %v4299 = vmul.f32 1.0, %v4298
        %v4300 = vrcp.pop %v4219
        %v4301 = vmul.f32 1.0, %v4300
        %v4302 = vrcp.pop %v4220
        %v4303 = vmul.f32 1.0, %v4302
        %v4304 = vrcp.pop %v4221
        %v4305 = vmul.f32 1.0, %v4304
        %v4306 = vrcp.pop %v4222
        %v4307 = vmul.f32 1.0, %v4306
        %v4308 = vrcp.pop %v4223
        %v4309 = vmul.f32 1.0, %v4308
        %v4310 = vrcp.pop %v4224
        %v4311 = vmul.f32 1.0, %v4310
        %v4312 = vrcp.pop %v4225
        %v4313 = vmul.f32 1.0, %v4312
        %v4314 = vrcp.pop %v4226
        %v4315 = vmul.f32 1.0, %v4314
        %v4316 = vrcp.pop %v4227
        %v4317 = vmul.f32 1.0, %v4316
        %v4318 = vrcp.pop %v4228
        %v4319 = vmul.f32 1.0, %v4318
        %v4320 = vrcp.pop %v4229
        %v4321 = vmul.f32 1.0, %v4320
        %v4322 = vrcp.pop %v4230
        %v4323 = vmul.f32 1.0, %v4322
        %v4324 = vrcp.pop %v4231
        %v4325 = vmul.f32 1.0, %v4324
        %v4326 = vrcp.pop %v4232
        %v4327 = vmul.f32 1.0, %v4326
        %v4328 = vrcp.pop %v4233
        %v4329 = vmul.f32 1.0, %v4328
        %v4330 = vrcp.pop %v4234
        %v4331 = vmul.f32 1.0, %v4330
        %v4332 = vrcp.pop %v4235
        %v4333 = vmul.f32 1.0, %v4332
        %v4334 = vrcp.pop %v4236
        %v4335 = vmul.f32 1.0, %v4334
        %v4336 = vrcp.pop %v4237
        %v4337 = vmul.f32 1.0, %v4336
        %v4338 = vrcp.pop %v4238
        %v4339 = vmul.f32 1.0, %v4338
        %v4340 = vrcp.pop %v4239
        %v4341 = vmul.f32 1.0, %v4340
        %v4342 = vrcp.pop %v4240
        %v4343 = vmul.f32 1.0, %v4342
        %v4344 = vrcp.pop %v4241
        %v4345 = vmul.f32 1.0, %v4344
        %v4346 = vrcp.pop %v4242
        %v4347 = vmul.f32 1.0, %v4346
        %v4348 = vrcp.pop %v4243
        %v4349 = vmul.f32 1.0, %v4348
        %v4350 = vrcp.pop %v4244
        %v4351 = vmul.f32 1.0, %v4350
        %v4352 = vrcp.pop %v4245
        %v4353 = vmul.f32 1.0, %v4352
        %v4354 = vrcp.pop %v4246
        %v4355 = vmul.f32 1.0, %v4354
        %v4356 = vrcp.pop %v4247
        %v4357 = vmul.f32 1.0, %v4356
        %v4358 = vrcp.pop %v4248
        %v4359 = vmul.f32 1.0, %v4358
        %v4360 = vrcp.pop %v4249
        %v4361 = vmul.f32 1.0, %v4360
        %v4362 = vrcp.pop %v4250
        %v4363 = vmul.f32 1.0, %v4362
        %v4364 = vrcp.pop %v4251
        %v4365 = vmul.f32 1.0, %v4364
        %v4366 = vrcp.pop %v4252
        %v4367 = vmul.f32 1.0, %v4366
        %v4368 = vrcp.pop %v4253
        %v4369 = vmul.f32 1.0, %v4368
        %v4370 = vrcp.pop %v4254
        %v4371 = vmul.f32 1.0, %v4370
        %v4372 = vrcp.pop %v4255
        %v4373 = vmul.f32 1.0, %v4372
        %v4374 = vrcp.pop %v4256
        %v4375 = vmul.f32 1.0, %v4374
        %v4376 = vrcp.pop %v4257
        %v4377 = vmul.f32 1.0, %v4376
        %v4378 = vrcp.pop %v4258
        %v4379 = vmul.f32 1.0, %v4378
        %v4380 = vrcp.pop %v4259
        %v4381 = vmul.f32 1.0, %v4380
        %v4382 = vrcp.pop %v4260
        %v4383 = vmul.f32 1.0, %v4382
        %v4384 = vrcp.pop %v4261
        %v4385 = vmul.f32 1.0, %v4384
        %v4386 = vrcp.pop %v4262
        %v4387 = vmul.f32 1.0, %v4386
        %v4388 = vrcp.pop %v4263
        %v4389 = vmul.f32 1.0, %v4388
        %v4390 = vrcp.pop %v4264
        %v4391 = vmul.f32 1.0, %v4390
        %v4392 = vrcp.pop %v4265
        %v4393 = vmul.f32 1.0, %v4392
        %v4394 = vmul.f32 %v3756, %v4267
        %v4395 = vmul.f32 %v3759, %v4269
        %v4396 = vmul.f32 %v3764, %v4271
        %v4397 = vmul.f32 %v3767, %v4273
        %v4398 = vmul.f32 %v3772, %v4275
        %v4399 = vmul.f32 %v3775, %v4277
        %v4400 = vmul.f32 %v3780, %v4279
        %v4401 = vmul.f32 %v3783, %v4281
        %v4402 = vmul.f32 %v3788, %v4283
        %v4403 = vmul.f32 %v3791, %v4285
        %v4404 = vmul.f32 %v3796, %v4287
        %v4405 = vmul.f32 %v3799, %v4289
        %v4406 = vmul.f32 %v3804, %v4291
        %v4407 = vmul.f32 %v3807, %v4293
        %v4408 = vmul.f32 %v3812, %v4295
        %v4409 = vmul.f32 %v3815, %v4297
        %v4410 = vmul.f32 %v3820, %v4299
        %v4411 = vmul.f32 %v3823, %v4301
        %v4412 = vmul.f32 %v3828, %v4303
        %v4413 = vmul.f32 %v3831, %v4305
        %v4414 = vmul.f32 %v3836, %v4307
        %v4415 = vmul.f32 %v3839, %v4309
        %v4416 = vmul.f32 %v3844, %v4311
        %v4417 = vmul.f32 %v3847, %v4313
        %v4418 = vmul.f32 %v3852, %v4315
        %v4419 = vmul.f32 %v3855, %v4317
        %v4420 = vmul.f32 %v3860, %v4319
        %v4421 = vmul.f32 %v3863, %v4321
        %v4422 = vmul.f32 %v3868, %v4323
        %v4423 = vmul.f32 %v3871, %v4325
        %v4424 = vmul.f32 %v3876, %v4327
        %v4425 = vmul.f32 %v3879, %v4329
        %v4426 = vmul.f32 %v3884, %v4331
        %v4427 = vmul.f32 %v3887, %v4333
        %v4428 = vmul.f32 %v3892, %v4335
        %v4429 = vmul.f32 %v3895, %v4337
        %v4430 = vmul.f32 %v3900, %v4339
        %v4431 = vmul.f32 %v3903, %v4341
        %v4432 = vmul.f32 %v3908, %v4343
        %v4433 = vmul.f32 %v3911, %v4345
        %v4434 = vmul.f32 %v3916, %v4347
        %v4435 = vmul.f32 %v3919, %v4349
        %v4436 = vmul.f32 %v3924, %v4351
        %v4437 = vmul.f32 %v3927, %v4353
        %v4438 = vmul.f32 %v3932, %v4355
        %v4439 = vmul.f32 %v3935, %v4357
        %v4440 = vmul.f32 %v3940, %v4359
        %v4441 = vmul.f32 %v3943, %v4361
        %v4442 = vmul.f32 %v3948, %v4363
        %v4443 = vmul.f32 %v3951, %v4365
        %v4444 = vmul.f32 %v3956, %v4367
        %v4445 = vmul.f32 %v3959, %v4369
        %v4446 = vmul.f32 %v3964, %v4371
        %v4447 = vmul.f32 %v3967, %v4373
        %v4448 = vmul.f32 %v3972, %v4375
        %v4449 = vmul.f32 %v3975, %v4377
        %v4450 = vmul.f32 %v3980, %v4379
        %v4451 = vmul.f32 %v3983, %v4381
        %v4452 = vmul.f32 %v3988, %v4383
        %v4453 = vmul.f32 %v3991, %v4385
        %v4454 = vmul.f32 %v3996, %v4387
        %v4455 = vmul.f32 %v3999, %v4389
        %v4456 = vmul.f32 %v4004, %v4391
        %v4457 = vmul.f32 %v4007, %v4393
        %v4458 = vpack.c.bf16 %v4395, %v4394
        %v4459 = vpack.c.bf16 %v4397, %v4396
        %v4460 = vpack.c.bf16 %v4399, %v4398
        %v4461 = vpack.c.bf16 %v4401, %v4400
        %v4462 = vpack.c.bf16 %v4403, %v4402
        %v4463 = vpack.c.bf16 %v4405, %v4404
        %v4464 = vpack.c.bf16 %v4407, %v4406
        %v4465 = vpack.c.bf16 %v4409, %v4408
        %v4466 = vpack.c.bf16 %v4411, %v4410
        %v4467 = vpack.c.bf16 %v4413, %v4412
        %v4468 = vpack.c.bf16 %v4415, %v4414
        %v4469 = vpack.c.bf16 %v4417, %v4416
        %v4470 = vpack.c.bf16 %v4419, %v4418
        %v4471 = vpack.c.bf16 %v4421, %v4420
        %v4472 = vpack.c.bf16 %v4423, %v4422
        %v4473 = vpack.c.bf16 %v4425, %v4424
        %v4474 = vpack.c.bf16 %v4427, %v4426
        %v4475 = vpack.c.bf16 %v4429, %v4428
        %v4476 = vpack.c.bf16 %v4431, %v4430
        %v4477 = vpack.c.bf16 %v4433, %v4432
        %v4478 = vpack.c.bf16 %v4435, %v4434
        %v4479 = vpack.c.bf16 %v4437, %v4436
        %v4480 = vpack.c.bf16 %v4439, %v4438
        %v4481 = vpack.c.bf16 %v4441, %v4440
        %v4482 = vpack.c.bf16 %v4443, %v4442
        %v4483 = vpack.c.bf16 %v4445, %v4444
        %v4484 = vpack.c.bf16 %v4447, %v4446
        %v4485 = vpack.c.bf16 %v4449, %v4448
        %v4486 = vpack.c.bf16 %v4451, %v4450
        %v4487 = vpack.c.bf16 %v4453, %v4452
        %v4488 = vpack.c.bf16 %v4455, %v4454
        %v4489 = vpack.c.bf16 %v4457, %v4456
        %v4490 = vld [vmem:[%s7] sm:$0xf]
        %v4491 = vld [vmem:[%s7 + $0x4] sm:$0xf]
        %v4492 = vld [vmem:[%s7 + $0x8] sm:$0xf]
        %v4493 = vld [vmem:[%s7 + $0xc] sm:$0xf]
        %v4494 = vld [vmem:[%s8] sm:$0x1]
        %v4496 = vlaneseq
        %v4497 = vshrl.u32 %v4496, 7
        %v4498 = vsub.s32 0, %v4497
        %v4499 = vrot.slane %v4494, %v4498
        %v4505 = vunpack.c.l.b16 %v4490
        %v4506 = vunpack.c.l.b16 %v4491
        %v4507 = vunpack.c.l.b16 %v4492
        %v4508 = vunpack.c.l.b16 %v4493
        %v4509 = vpack.c.b16 %v4506, %v4505
        %v4510 = vpack.c.b16 %v4508, %v4507
        %vm4513 = vcmask 261120
        %v4515 = vsel %vm4513, %v4458, 0
        %v4518 = vsel %vm4513, %v4459, 0
        %v4521 = vsel %vm4513, %v4460, 0
        %v4524 = vsel %vm4513, %v4461, 0
        %v4527 = vsel %vm4513, %v4462, 0
        %v4530 = vsel %vm4513, %v4463, 0
        %v4533 = vsel %vm4513, %v4464, 0
        %v4536 = vsel %vm4513, %v4465, 0
        %v4539 = vsel %vm4513, %v4466, 0
        %v4542 = vsel %vm4513, %v4467, 0
        %v4545 = vsel %vm4513, %v4468, 0
        %v4548 = vsel %vm4513, %v4469, 0
        %v4551 = vsel %vm4513, %v4470, 0
        %v4554 = vsel %vm4513, %v4471, 0
        %v4557 = vsel %vm4513, %v4472, 0
        %v4560 = vsel %vm4513, %v4473, 0
        %v4563 = vsel %vm4513, %v4474, 0
        %v4566 = vsel %vm4513, %v4475, 0
        %v4569 = vsel %vm4513, %v4476, 0
        %v4572 = vsel %vm4513, %v4477, 0
        %v4575 = vsel %vm4513, %v4478, 0
        %v4578 = vsel %vm4513, %v4479, 0
        %v4581 = vsel %vm4513, %v4480, 0
        %v4584 = vsel %vm4513, %v4481, 0
        %v4587 = vsel %vm4513, %v4482, 0
        %v4590 = vsel %vm4513, %v4483, 0
        %v4593 = vsel %vm4513, %v4484, 0
        %v4596 = vsel %vm4513, %v4485, 0
        %v4599 = vsel %vm4513, %v4486, 0
        %v4602 = vsel %vm4513, %v4487, 0
        %v4605 = vsel %vm4513, %v4488, 0
        %v4608 = vsel %vm4513, %v4489, 0
        %4610 = vmatprep.subr.bf16.mxu0 0
        %4611 = vmatpush1.bf16.msra.mxu0 %v4509
        %4612 = vmatprep.subr.bf16.mxu0 0
        %4613 = vmatpush1.bf16.msra.mxu0 %v4510
        %4614 = vmatprep.subr.bf16.mxu0 0
        %4615 = vmatpush1.bf16.msra.mxu0 0
        %4616 = vmatprep.subr.bf16.mxu0 0
        %4617 = vmatpush1.bf16.msra.mxu0 0
        %4618 = vmatprep.subr.bf16.mxu0 0
        %4619 = vmatpush1.bf16.msra.mxu0 0
        %4620 = vmatprep.subr.bf16.mxu0 0
        %4621 = vmatpush1.bf16.msra.mxu0 0
        %4622 = vmatprep.subr.bf16.mxu0 0
        %4623 = vmatpush1.bf16.msra.mxu0 0
        %4624 = vmatprep.subr.bf16.mxu0 0
        %4625 = vmatpush1.bf16.msra.mxu0 0
        %4626 = vmatprep.subr.bf16.mxu0 0
        %4627 = vmatpush1.bf16.msra.mxu0 0
        %4628 = vmatprep.subr.bf16.mxu0 0
        %4629 = vmatpush1.bf16.msra.mxu0 0
        %4630 = vmatprep.subr.bf16.mxu0 0
        %4631 = vmatpush1.bf16.msra.mxu0 0
        %4632 = vmatprep.subr.bf16.mxu0 0
        %4633 = vmatpush1.bf16.msra.mxu0 0
        %4634 = vmatprep.subr.bf16.mxu0 0
        %4635 = vmatpush1.bf16.msra.mxu0 0
        %4636 = vmatprep.subr.bf16.mxu0 0
        %4637 = vmatpush1.bf16.msra.mxu0 0
        %4638 = vmatprep.subr.bf16.mxu0 0
        %4639 = vmatpush1.bf16.msra.mxu0 0
        %4640 = vmatprep.subr.bf16.mxu0 0
        %4641 = vmatpush1.bf16.msra.mxu0 0
        %4642 = vmatprep.mubr.bf16.mxu0 0
        %4643 = vmatmul.mubr.bf16.gmra.mrb[0].mxu0 %v4515
        %v4644 = vpop.f32.mrb[0].mxu0
        %v4645 = vadd.f32 %v4499, %v4644
        %v4646 = vpop.f32.mrb[0].mxu0
        %v4647 = vpop.f32.mrb[0].mxu0
        %v4648 = vadd.f32 %v4499, %v4647
        %v4649 = vpop.f32.mrb[0].mxu0
        %4650 = vmatprep.mubr.bf16.mxu0 0
        %4651 = vmatmul.mubr.bf16.gmra.mrb[0].mxu0 %v4518
        %v4652 = vpop.f32.mrb[0].mxu0
        %v4653 = vadd.f32 %v4499, %v4652
        %v4654 = vpop.f32.mrb[0].mxu0
        %v4655 = vpop.f32.mrb[0].mxu0
        %v4656 = vadd.f32 %v4499, %v4655
        %v4657 = vpop.f32.mrb[0].mxu0
        %4658 = vmatprep.mubr.bf16.mxu0 0
        %4659 = vmatmul.mubr.bf16.gmra.mrb[0].mxu0 %v4521
        %v4660 = vpop.f32.mrb[0].mxu0
        %v4661 = vadd.f32 %v4499, %v4660
        %v4662 = vpop.f32.mrb[0].mxu0
        %v4663 = vpop.f32.mrb[0].mxu0
        %v4664 = vadd.f32 %v4499, %v4663
        %v4665 = vpop.f32.mrb[0].mxu0
        %4666 = vmatprep.mubr.bf16.mxu0 0
        %4667 = vmatmul.mubr.bf16.gmra.mrb[0].mxu0 %v4524
        %v4668 = vpop.f32.mrb[0].mxu0
        %v4669 = vadd.f32 %v4499, %v4668
        %v4670 = vpop.f32.mrb[0].mxu0
        %v4671 = vpop.f32.mrb[0].mxu0
        %v4672 = vadd.f32 %v4499, %v4671
        %v4673 = vpop.f32.mrb[0].mxu0
        %4674 = vmatprep.mubr.bf16.mxu0 0
        %4675 = vmatmul.mubr.bf16.gmra.mrb[0].mxu0 %v4527
        %v4676 = vpop.f32.mrb[0].mxu0
        %v4677 = vadd.f32 %v4499, %v4676
        %v4678 = vpop.f32.mrb[0].mxu0
        %v4679 = vpop.f32.mrb[0].mxu0
        %v4680 = vadd.f32 %v4499, %v4679
        %v4681 = vpop.f32.mrb[0].mxu0
        %4682 = vmatprep.mubr.bf16.mxu0 0
        %4683 = vmatmul.mubr.bf16.gmra.mrb[0].mxu0 %v4530
        %v4684 = vpop.f32.mrb[0].mxu0
        %v4685 = vadd.f32 %v4499, %v4684
        %v4686 = vpop.f32.mrb[0].mxu0
        %v4687 = vpop.f32.mrb[0].mxu0
        %v4688 = vadd.f32 %v4499, %v4687
        %v4689 = vpop.f32.mrb[0].mxu0
        %4690 = vmatprep.mubr.bf16.mxu0 0
        %4691 = vmatmul.mubr.bf16.gmra.mrb[0].mxu0 %v4533
        %v4692 = vpop.f32.mrb[0].mxu0
        %v4693 = vadd.f32 %v4499, %v4692
        %v4694 = vpop.f32.mrb[0].mxu0
        %v4695 = vpop.f32.mrb[0].mxu0
        %v4696 = vadd.f32 %v4499, %v4695
        %v4697 = vpop.f32.mrb[0].mxu0
        %4698 = vmatprep.mubr.bf16.mxu0 0
        %4699 = vmatmul.mubr.bf16.gmra.mrb[0].mxu0 %v4536
        %v4700 = vpop.f32.mrb[0].mxu0
        %v4701 = vadd.f32 %v4499, %v4700
        %v4702 = vpop.f32.mrb[0].mxu0
        %v4703 = vpop.f32.mrb[0].mxu0
        %v4704 = vadd.f32 %v4499, %v4703
        %v4705 = vpop.f32.mrb[0].mxu0
        %4706 = vmatprep.mubr.bf16.mxu0 0
        %4707 = vmatmul.mubr.bf16.gmra.mrb[0].mxu0 %v4539
        %v4708 = vpop.f32.mrb[0].mxu0
        %v4709 = vadd.f32 %v4499, %v4708
        %v4710 = vpop.f32.mrb[0].mxu0
        %v4711 = vpop.f32.mrb[0].mxu0
        %v4712 = vadd.f32 %v4499, %v4711
        %v4713 = vpop.f32.mrb[0].mxu0
        %4714 = vmatprep.mubr.bf16.mxu0 0
        %4715 = vmatmul.mubr.bf16.gmra.mrb[0].mxu0 %v4542
        %v4716 = vpop.f32.mrb[0].mxu0
        %v4717 = vadd.f32 %v4499, %v4716
        %v4718 = vpop.f32.mrb[0].mxu0
        %v4719 = vpop.f32.mrb[0].mxu0
        %v4720 = vadd.f32 %v4499, %v4719
        %v4721 = vpop.f32.mrb[0].mxu0
        %4722 = vmatprep.mubr.bf16.mxu0 0
        %4723 = vmatmul.mubr.bf16.gmra.mrb[0].mxu0 %v4545
        %v4724 = vpop.f32.mrb[0].mxu0
        %v4725 = vadd.f32 %v4499, %v4724
        %v4726 = vpop.f32.mrb[0].mxu0
        %v4727 = vpop.f32.mrb[0].mxu0
        %v4728 = vadd.f32 %v4499, %v4727
        %v4729 = vpop.f32.mrb[0].mxu0
        %4730 = vmatprep.mubr.bf16.mxu0 0
        %4731 = vmatmul.mubr.bf16.gmra.mrb[0].mxu0 %v4548
        %v4732 = vpop.f32.mrb[0].mxu0
        %v4733 = vadd.f32 %v4499, %v4732
        %v4734 = vpop.f32.mrb[0].mxu0
        %v4735 = vpop.f32.mrb[0].mxu0
        %v4736 = vadd.f32 %v4499, %v4735
        %v4737 = vpop.f32.mrb[0].mxu0
        %4738 = vmatprep.mubr.bf16.mxu0 0
        %4739 = vmatmul.mubr.bf16.gmra.mrb[0].mxu0 %v4551
        %v4740 = vpop.f32.mrb[0].mxu0
        %v4741 = vadd.f32 %v4499, %v4740
        %v4742 = vpop.f32.mrb[0].mxu0
        %v4743 = vpop.f32.mrb[0].mxu0
        %v4744 = vadd.f32 %v4499, %v4743
        %v4745 = vpop.f32.mrb[0].mxu0
        %4746 = vmatprep.mubr.bf16.mxu0 0
        %4747 = vmatmul.mubr.bf16.gmra.mrb[0].mxu0 %v4554
        %v4748 = vpop.f32.mrb[0].mxu0
        %v4749 = vadd.f32 %v4499, %v4748
        %v4750 = vpop.f32.mrb[0].mxu0
        %v4751 = vpop.f32.mrb[0].mxu0
        %v4752 = vadd.f32 %v4499, %v4751
        %v4753 = vpop.f32.mrb[0].mxu0
        %4754 = vmatprep.mubr.bf16.mxu0 0
        %4755 = vmatmul.mubr.bf16.gmra.mrb[0].mxu0 %v4557
        %v4756 = vpop.f32.mrb[0].mxu0
        %v4757 = vadd.f32 %v4499, %v4756
        %v4758 = vpop.f32.mrb[0].mxu0
        %v4759 = vpop.f32.mrb[0].mxu0
        %v4760 = vadd.f32 %v4499, %v4759
        %v4761 = vpop.f32.mrb[0].mxu0
        %4762 = vmatprep.mubr.bf16.mxu0 0
        %4763 = vmatmul.mubr.bf16.gmra.mrb[0].mxu0 %v4560
        %v4764 = vpop.f32.mrb[0].mxu0
        %v4765 = vadd.f32 %v4499, %v4764
        %v4766 = vpop.f32.mrb[0].mxu0
        %v4767 = vpop.f32.mrb[0].mxu0
        %v4768 = vadd.f32 %v4499, %v4767
        %v4769 = vpop.f32.mrb[0].mxu0
        %4770 = vmatprep.mubr.bf16.mxu0 0
        %4771 = vmatmul.mubr.bf16.gmra.mrb[0].mxu0 %v4563
        %v4772 = vpop.f32.mrb[0].mxu0
        %v4773 = vadd.f32 %v4499, %v4772
        %v4774 = vpop.f32.mrb[0].mxu0
        %v4775 = vpop.f32.mrb[0].mxu0
        %v4776 = vadd.f32 %v4499, %v4775
        %v4777 = vpop.f32.mrb[0].mxu0
        %4778 = vmatprep.mubr.bf16.mxu0 0
        %4779 = vmatmul.mubr.bf16.gmra.mrb[0].mxu0 %v4566
        %v4780 = vpop.f32.mrb[0].mxu0
        %v4781 = vadd.f32 %v4499, %v4780
        %v4782 = vpop.f32.mrb[0].mxu0
        %v4783 = vpop.f32.mrb[0].mxu0
        %v4784 = vadd.f32 %v4499, %v4783
        %v4785 = vpop.f32.mrb[0].mxu0
        %4786 = vmatprep.mubr.bf16.mxu0 0
        %4787 = vmatmul.mubr.bf16.gmra.mrb[0].mxu0 %v4569
        %v4788 = vpop.f32.mrb[0].mxu0
        %v4789 = vadd.f32 %v4499, %v4788
        %v4790 = vpop.f32.mrb[0].mxu0
        %v4791 = vpop.f32.mrb[0].mxu0
        %v4792 = vadd.f32 %v4499, %v4791
        %v4793 = vpop.f32.mrb[0].mxu0
        %4794 = vmatprep.mubr.bf16.mxu0 0
        %4795 = vmatmul.mubr.bf16.gmra.mrb[0].mxu0 %v4572
        %v4796 = vpop.f32.mrb[0].mxu0
        %v4797 = vadd.f32 %v4499, %v4796
        %v4798 = vpop.f32.mrb[0].mxu0
        %v4799 = vpop.f32.mrb[0].mxu0
        %v4800 = vadd.f32 %v4499, %v4799
        %v4801 = vpop.f32.mrb[0].mxu0
        %4802 = vmatprep.mubr.bf16.mxu0 0
        %4803 = vmatmul.mubr.bf16.gmra.mrb[0].mxu0 %v4575
        %v4804 = vpop.f32.mrb[0].mxu0
        %v4805 = vadd.f32 %v4499, %v4804
        %v4806 = vpop.f32.mrb[0].mxu0
        %v4807 = vpop.f32.mrb[0].mxu0
        %v4808 = vadd.f32 %v4499, %v4807
        %v4809 = vpop.f32.mrb[0].mxu0
        %4810 = vmatprep.mubr.bf16.mxu0 0
        %4811 = vmatmul.mubr.bf16.gmra.mrb[0].mxu0 %v4578
        %v4812 = vpop.f32.mrb[0].mxu0
        %v4813 = vadd.f32 %v4499, %v4812
        %v4814 = vpop.f32.mrb[0].mxu0
        %v4815 = vpop.f32.mrb[0].mxu0
        %v4816 = vadd.f32 %v4499, %v4815
        %v4817 = vpop.f32.mrb[0].mxu0
        %4818 = vmatprep.mubr.bf16.mxu0 0
        %4819 = vmatmul.mubr.bf16.gmra.mrb[0].mxu0 %v4581
        %v4820 = vpop.f32.mrb[0].mxu0
        %v4821 = vadd.f32 %v4499, %v4820
        %v4822 = vpop.f32.mrb[0].mxu0
        %v4823 = vpop.f32.mrb[0].mxu0
        %v4824 = vadd.f32 %v4499, %v4823
        %v4825 = vpop.f32.mrb[0].mxu0
        %4826 = vmatprep.mubr.bf16.mxu0 0
        %4827 = vmatmul.mubr.bf16.gmra.mrb[0].mxu0 %v4584
        %v4828 = vpop.f32.mrb[0].mxu0
        %v4829 = vadd.f32 %v4499, %v4828
        %v4830 = vpop.f32.mrb[0].mxu0
        %v4831 = vpop.f32.mrb[0].mxu0
        %v4832 = vadd.f32 %v4499, %v4831
        %v4833 = vpop.f32.mrb[0].mxu0
        %4834 = vmatprep.mubr.bf16.mxu0 0
        %4835 = vmatmul.mubr.bf16.gmra.mrb[0].mxu0 %v4587
        %v4836 = vpop.f32.mrb[0].mxu0
        %v4837 = vadd.f32 %v4499, %v4836
        %v4838 = vpop.f32.mrb[0].mxu0
        %v4839 = vpop.f32.mrb[0].mxu0
        %v4840 = vadd.f32 %v4499, %v4839
        %v4841 = vpop.f32.mrb[0].mxu0
        %4842 = vmatprep.mubr.bf16.mxu0 0
        %4843 = vmatmul.mubr.bf16.gmra.mrb[0].mxu0 %v4590
        %v4844 = vpop.f32.mrb[0].mxu0
        %v4845 = vadd.f32 %v4499, %v4844
        %v4846 = vpop.f32.mrb[0].mxu0
        %v4847 = vpop.f32.mrb[0].mxu0
        %v4848 = vadd.f32 %v4499, %v4847
        %v4849 = vpop.f32.mrb[0].mxu0
        %4850 = vmatprep.mubr.bf16.mxu0 0
        %4851 = vmatmul.mubr.bf16.gmra.mrb[0].mxu0 %v4593
        %v4852 = vpop.f32.mrb[0].mxu0
        %v4853 = vadd.f32 %v4499, %v4852
        %v4854 = vpop.f32.mrb[0].mxu0
        %v4855 = vpop.f32.mrb[0].mxu0
        %v4856 = vadd.f32 %v4499, %v4855
        %v4857 = vpop.f32.mrb[0].mxu0
        %4858 = vmatprep.mubr.bf16.mxu0 0
        %4859 = vmatmul.mubr.bf16.gmra.mrb[0].mxu0 %v4596
        %v4860 = vpop.f32.mrb[0].mxu0
        %v4861 = vadd.f32 %v4499, %v4860
        %v4862 = vpop.f32.mrb[0].mxu0
        %v4863 = vpop.f32.mrb[0].mxu0
        %v4864 = vadd.f32 %v4499, %v4863
        %v4865 = vpop.f32.mrb[0].mxu0
        %4866 = vmatprep.mubr.bf16.mxu0 0
        %4867 = vmatmul.mubr.bf16.gmra.mrb[0].mxu0 %v4599
        %v4868 = vpop.f32.mrb[0].mxu0
        %v4869 = vadd.f32 %v4499, %v4868
        %v4870 = vpop.f32.mrb[0].mxu0
        %v4871 = vpop.f32.mrb[0].mxu0
        %v4872 = vadd.f32 %v4499, %v4871
        %v4873 = vpop.f32.mrb[0].mxu0
        %4874 = vmatprep.mubr.bf16.mxu0 0
        %4875 = vmatmul.mubr.bf16.gmra.mrb[0].mxu0 %v4602
        %v4876 = vpop.f32.mrb[0].mxu0
        %v4877 = vadd.f32 %v4499, %v4876
        %v4878 = vpop.f32.mrb[0].mxu0
        %v4879 = vpop.f32.mrb[0].mxu0
        %v4880 = vadd.f32 %v4499, %v4879
        %v4881 = vpop.f32.mrb[0].mxu0
        %4882 = vmatprep.mubr.bf16.mxu0 0
        %4883 = vmatmul.mubr.bf16.gmra.mrb[0].mxu0 %v4605
        %v4884 = vpop.f32.mrb[0].mxu0
        %v4885 = vadd.f32 %v4499, %v4884
        %v4886 = vpop.f32.mrb[0].mxu0
        %v4887 = vpop.f32.mrb[0].mxu0
        %v4888 = vadd.f32 %v4499, %v4887
        %v4889 = vpop.f32.mrb[0].mxu0
        %4890 = vmatprep.mubr.bf16.mxu0 0
        %4891 = vmatmul.mubr.bf16.gmra.mrb[0].mxu0 %v4608
        %v4892 = vpop.f32.mrb[0].mxu0
        %v4893 = vadd.f32 %v4499, %v4892
        %v4894 = vpop.f32.mrb[0].mxu0
        %v4895 = vpop.f32.mrb[0].mxu0
        %v4896 = vadd.f32 %v4499, %v4895
        %v4897 = vpop.f32.mrb[0].mxu0
        %4898 = vdwg.mxu0
        %v4899 = vxor.u32 %v4645, 2147483648
        %v4900 = vxor.u32 %v4648, 2147483648
        %v4901 = vxor.u32 %v4653, 2147483648
        %v4902 = vxor.u32 %v4656, 2147483648
        %v4903 = vxor.u32 %v4661, 2147483648
        %v4904 = vxor.u32 %v4664, 2147483648
        %v4905 = vxor.u32 %v4669, 2147483648
        %v4906 = vxor.u32 %v4672, 2147483648
        %v4907 = vxor.u32 %v4677, 2147483648
        %v4908 = vxor.u32 %v4680, 2147483648
        %v4909 = vxor.u32 %v4685, 2147483648
        %v4910 = vxor.u32 %v4688, 2147483648
        %v4911 = vxor.u32 %v4693, 2147483648
        %v4912 = vxor.u32 %v4696, 2147483648
        %v4913 = vxor.u32 %v4701, 2147483648
        %v4914 = vxor.u32 %v4704, 2147483648
        %v4915 = vxor.u32 %v4709, 2147483648
        %v4916 = vxor.u32 %v4712, 2147483648
        %v4917 = vxor.u32 %v4717, 2147483648
        %v4918 = vxor.u32 %v4720, 2147483648
        %v4919 = vxor.u32 %v4725, 2147483648
        %v4920 = vxor.u32 %v4728, 2147483648
        %v4921 = vxor.u32 %v4733, 2147483648
        %v4922 = vxor.u32 %v4736, 2147483648
        %v4923 = vxor.u32 %v4741, 2147483648
        %v4924 = vxor.u32 %v4744, 2147483648
        %v4925 = vxor.u32 %v4749, 2147483648
        %v4926 = vxor.u32 %v4752, 2147483648
        %v4927 = vxor.u32 %v4757, 2147483648
        %v4928 = vxor.u32 %v4760, 2147483648
        %v4929 = vxor.u32 %v4765, 2147483648
        %v4930 = vxor.u32 %v4768, 2147483648
        %v4931 = vxor.u32 %v4773, 2147483648
        %v4932 = vxor.u32 %v4776, 2147483648
        %v4933 = vxor.u32 %v4781, 2147483648
        %v4934 = vxor.u32 %v4784, 2147483648
        %v4935 = vxor.u32 %v4789, 2147483648
        %v4936 = vxor.u32 %v4792, 2147483648
        %v4937 = vxor.u32 %v4797, 2147483648
        %v4938 = vxor.u32 %v4800, 2147483648
        %v4939 = vxor.u32 %v4805, 2147483648
        %v4940 = vxor.u32 %v4808, 2147483648
        %v4941 = vxor.u32 %v4813, 2147483648
        %v4942 = vxor.u32 %v4816, 2147483648
        %v4943 = vxor.u32 %v4821, 2147483648
        %v4944 = vxor.u32 %v4824, 2147483648
        %v4945 = vxor.u32 %v4829, 2147483648
        %v4946 = vxor.u32 %v4832, 2147483648
        %v4947 = vxor.u32 %v4837, 2147483648
        %v4948 = vxor.u32 %v4840, 2147483648
        %v4949 = vxor.u32 %v4845, 2147483648
        %v4950 = vxor.u32 %v4848, 2147483648
        %v4951 = vxor.u32 %v4853, 2147483648
        %v4952 = vxor.u32 %v4856, 2147483648
        %v4953 = vxor.u32 %v4861, 2147483648
        %v4954 = vxor.u32 %v4864, 2147483648
        %v4955 = vxor.u32 %v4869, 2147483648
        %v4956 = vxor.u32 %v4872, 2147483648
        %v4957 = vxor.u32 %v4877, 2147483648
        %v4958 = vxor.u32 %v4880, 2147483648
        %v4959 = vxor.u32 %v4885, 2147483648
        %v4960 = vxor.u32 %v4888, 2147483648
        %v4961 = vxor.u32 %v4893, 2147483648
        %v4962 = vxor.u32 %v4896, 2147483648
        %v4963 = vmul.f32 %v4899, 1.442695
        %v4964 = vpow.pop %v4963
        %v4965 = vmul.f32 %v4900, 1.442695
        %v4966 = vpow.pop %v4965
        %v4967 = vmul.f32 %v4901, 1.442695
        %v4968 = vpow.pop %v4967
        %v4969 = vmul.f32 %v4902, 1.442695
        %v4970 = vpow.pop %v4969
        %v4971 = vmul.f32 %v4903, 1.442695
        %v4972 = vpow.pop %v4971
        %v4973 = vmul.f32 %v4904, 1.442695
        %v4974 = vpow.pop %v4973
        %v4975 = vmul.f32 %v4905, 1.442695
        %v4976 = vpow.pop %v4975
        %v4977 = vmul.f32 %v4906, 1.442695
        %v4978 = vpow.pop %v4977
        %v4979 = vmul.f32 %v4907, 1.442695
        %v4980 = vpow.pop %v4979
        %v4981 = vmul.f32 %v4908, 1.442695
        %v4982 = vpow.pop %v4981
        %v4983 = vmul.f32 %v4909, 1.442695
        %v4984 = vpow.pop %v4983
        %v4985 = vmul.f32 %v4910, 1.442695
        %v4986 = vpow.pop %v4985
        %v4987 = vmul.f32 %v4911, 1.442695
        %v4988 = vpow.pop %v4987
        %v4989 = vmul.f32 %v4912, 1.442695
        %v4990 = vpow.pop %v4989
        %v4991 = vmul.f32 %v4913, 1.442695
        %v4992 = vpow.pop %v4991
        %v4993 = vmul.f32 %v4914, 1.442695
        %v4994 = vpow.pop %v4993
        %v4995 = vmul.f32 %v4915, 1.442695
        %v4996 = vpow.pop %v4995
        %v4997 = vmul.f32 %v4916, 1.442695
        %v4998 = vpow.pop %v4997
        %v4999 = vmul.f32 %v4917, 1.442695
        %v5000 = vpow.pop %v4999
        %v5001 = vmul.f32 %v4918, 1.442695
        %v5002 = vpow.pop %v5001
        %v5003 = vmul.f32 %v4919, 1.442695
        %v5004 = vpow.pop %v5003
        %v5005 = vmul.f32 %v4920, 1.442695
        %v5006 = vpow.pop %v5005
        %v5007 = vmul.f32 %v4921, 1.442695
        %v5008 = vpow.pop %v5007
        %v5009 = vmul.f32 %v4922, 1.442695
        %v5010 = vpow.pop %v5009
        %v5011 = vmul.f32 %v4923, 1.442695
        %v5012 = vpow.pop %v5011
        %v5013 = vmul.f32 %v4924, 1.442695
        %v5014 = vpow.pop %v5013
        %v5015 = vmul.f32 %v4925, 1.442695
        %v5016 = vpow.pop %v5015
        %v5017 = vmul.f32 %v4926, 1.442695
        %v5018 = vpow.pop %v5017
        %v5019 = vmul.f32 %v4927, 1.442695
        %v5020 = vpow.pop %v5019
        %v5021 = vmul.f32 %v4928, 1.442695
        %v5022 = vpow.pop %v5021
        %v5023 = vmul.f32 %v4929, 1.442695
        %v5024 = vpow.pop %v5023
        %v5025 = vmul.f32 %v4930, 1.442695
        %v5026 = vpow.pop %v5025
        %v5027 = vmul.f32 %v4931, 1.442695
        %v5028 = vpow.pop %v5027
        %v5029 = vmul.f32 %v4932, 1.442695
        %v5030 = vpow.pop %v5029
        %v5031 = vmul.f32 %v4933, 1.442695
        %v5032 = vpow.pop %v5031
        %v5033 = vmul.f32 %v4934, 1.442695
        %v5034 = vpow.pop %v5033
        %v5035 = vmul.f32 %v4935, 1.442695
        %v5036 = vpow.pop %v5035
        %v5037 = vmul.f32 %v4936, 1.442695
        %v5038 = vpow.pop %v5037
        %v5039 = vmul.f32 %v4937, 1.442695
        %v5040 = vpow.pop %v5039
        %v5041 = vmul.f32 %v4938, 1.442695
        %v5042 = vpow.pop %v5041
        %v5043 = vmul.f32 %v4939, 1.442695
        %v5044 = vpow.pop %v5043
        %v5045 = vmul.f32 %v4940, 1.442695
        %v5046 = vpow.pop %v5045
        %v5047 = vmul.f32 %v4941, 1.442695
        %v5048 = vpow.pop %v5047
        %v5049 = vmul.f32 %v4942, 1.442695
        %v5050 = vpow.pop %v5049
        %v5051 = vmul.f32 %v4943, 1.442695
        %v5052 = vpow.pop %v5051
        %v5053 = vmul.f32 %v4944, 1.442695
        %v5054 = vpow.pop %v5053
        %v5055 = vmul.f32 %v4945, 1.442695
        %v5056 = vpow.pop %v5055
        %v5057 = vmul.f32 %v4946, 1.442695
        %v5058 = vpow.pop %v5057
        %v5059 = vmul.f32 %v4947, 1.442695
        %v5060 = vpow.pop %v5059
        %v5061 = vmul.f32 %v4948, 1.442695
        %v5062 = vpow.pop %v5061
        %v5063 = vmul.f32 %v4949, 1.442695
        %v5064 = vpow.pop %v5063
        %v5065 = vmul.f32 %v4950, 1.442695
        %v5066 = vpow.pop %v5065
        %v5067 = vmul.f32 %v4951, 1.442695
        %v5068 = vpow.pop %v5067
        %v5069 = vmul.f32 %v4952, 1.442695
        %v5070 = vpow.pop %v5069
        %v5071 = vmul.f32 %v4953, 1.442695
        %v5072 = vpow.pop %v5071
        %v5073 = vmul.f32 %v4954, 1.442695
        %v5074 = vpow.pop %v5073
        %v5075 = vmul.f32 %v4955, 1.442695
        %v5076 = vpow.pop %v5075
        %v5077 = vmul.f32 %v4956, 1.442695
        %v5078 = vpow.pop %v5077
        %v5079 = vmul.f32 %v4957, 1.442695
        %v5080 = vpow.pop %v5079
        %v5081 = vmul.f32 %v4958, 1.442695
        %v5082 = vpow.pop %v5081
        %v5083 = vmul.f32 %v4959, 1.442695
        %v5084 = vpow.pop %v5083
        %v5085 = vmul.f32 %v4960, 1.442695
        %v5086 = vpow.pop %v5085
        %v5087 = vmul.f32 %v4961, 1.442695
        %v5088 = vpow.pop %v5087
        %v5089 = vmul.f32 %v4962, 1.442695
        %v5090 = vpow.pop %v5089
        %v5091 = vadd.f32 %v4964, 1.0
        %v5092 = vadd.f32 %v4966, 1.0
        %v5093 = vadd.f32 %v4968, 1.0
        %v5094 = vadd.f32 %v4970, 1.0
        %v5095 = vadd.f32 %v4972, 1.0
        %v5096 = vadd.f32 %v4974, 1.0
        %v5097 = vadd.f32 %v4976, 1.0
        %v5098 = vadd.f32 %v4978, 1.0
        %v5099 = vadd.f32 %v4980, 1.0
        %v5100 = vadd.f32 %v4982, 1.0
        %v5101 = vadd.f32 %v4984, 1.0
        %v5102 = vadd.f32 %v4986, 1.0
        %v5103 = vadd.f32 %v4988, 1.0
        %v5104 = vadd.f32 %v4990, 1.0
        %v5105 = vadd.f32 %v4992, 1.0
        %v5106 = vadd.f32 %v4994, 1.0
        %v5107 = vadd.f32 %v4996, 1.0
        %v5108 = vadd.f32 %v4998, 1.0
        %v5109 = vadd.f32 %v5000, 1.0
        %v5110 = vadd.f32 %v5002, 1.0
        %v5111 = vadd.f32 %v5004, 1.0
        %v5112 = vadd.f32 %v5006, 1.0
        %v5113 = vadd.f32 %v5008, 1.0
        %v5114 = vadd.f32 %v5010, 1.0
        %v5115 = vadd.f32 %v5012, 1.0
        %v5116 = vadd.f32 %v5014, 1.0
        %v5117 = vadd.f32 %v5016, 1.0
        %v5118 = vadd.f32 %v5018, 1.0
        %v5119 = vadd.f32 %v5020, 1.0
        %v5120 = vadd.f32 %v5022, 1.0
        %v5121 = vadd.f32 %v5024, 1.0
        %v5122 = vadd.f32 %v5026, 1.0
        %v5123 = vadd.f32 %v5028, 1.0
        %v5124 = vadd.f32 %v5030, 1.0
        %v5125 = vadd.f32 %v5032, 1.0
        %v5126 = vadd.f32 %v5034, 1.0
        %v5127 = vadd.f32 %v5036, 1.0
        %v5128 = vadd.f32 %v5038, 1.0
        %v5129 = vadd.f32 %v5040, 1.0
        %v5130 = vadd.f32 %v5042, 1.0
        %v5131 = vadd.f32 %v5044, 1.0
        %v5132 = vadd.f32 %v5046, 1.0
        %v5133 = vadd.f32 %v5048, 1.0
        %v5134 = vadd.f32 %v5050, 1.0
        %v5135 = vadd.f32 %v5052, 1.0
        %v5136 = vadd.f32 %v5054, 1.0
        %v5137 = vadd.f32 %v5056, 1.0
        %v5138 = vadd.f32 %v5058, 1.0
        %v5139 = vadd.f32 %v5060, 1.0
        %v5140 = vadd.f32 %v5062, 1.0
        %v5141 = vadd.f32 %v5064, 1.0
        %v5142 = vadd.f32 %v5066, 1.0
        %v5143 = vadd.f32 %v5068, 1.0
        %v5144 = vadd.f32 %v5070, 1.0
        %v5145 = vadd.f32 %v5072, 1.0
        %v5146 = vadd.f32 %v5074, 1.0
        %v5147 = vadd.f32 %v5076, 1.0
        %v5148 = vadd.f32 %v5078, 1.0
        %v5149 = vadd.f32 %v5080, 1.0
        %v5150 = vadd.f32 %v5082, 1.0
        %v5151 = vadd.f32 %v5084, 1.0
        %v5152 = vadd.f32 %v5086, 1.0
        %v5153 = vadd.f32 %v5088, 1.0
        %v5154 = vadd.f32 %v5090, 1.0
        %v5155 = vrcp.pop %v5091
        %v5156 = vmul.f32 1.0, %v5155
        %v5157 = vrcp.pop %v5092
        %v5158 = vmul.f32 1.0, %v5157
        %v5159 = vrcp.pop %v5093
        %v5160 = vmul.f32 1.0, %v5159
        %v5161 = vrcp.pop %v5094
        %v5162 = vmul.f32 1.0, %v5161
        %v5163 = vrcp.pop %v5095
        %v5164 = vmul.f32 1.0, %v5163
        %v5165 = vrcp.pop %v5096
        %v5166 = vmul.f32 1.0, %v5165
        %v5167 = vrcp.pop %v5097
        %v5168 = vmul.f32 1.0, %v5167
        %v5169 = vrcp.pop %v5098
        %v5170 = vmul.f32 1.0, %v5169
        %v5171 = vrcp.pop %v5099
        %v5172 = vmul.f32 1.0, %v5171
        %v5173 = vrcp.pop %v5100
        %v5174 = vmul.f32 1.0, %v5173
        %v5175 = vrcp.pop %v5101
        %v5176 = vmul.f32 1.0, %v5175
        %v5177 = vrcp.pop %v5102
        %v5178 = vmul.f32 1.0, %v5177
        %v5179 = vrcp.pop %v5103
        %v5180 = vmul.f32 1.0, %v5179
        %v5181 = vrcp.pop %v5104
        %v5182 = vmul.f32 1.0, %v5181
        %v5183 = vrcp.pop %v5105
        %v5184 = vmul.f32 1.0, %v5183
        %v5185 = vrcp.pop %v5106
        %v5186 = vmul.f32 1.0, %v5185
        %v5187 = vrcp.pop %v5107
        %v5188 = vmul.f32 1.0, %v5187
        %v5189 = vrcp.pop %v5108
        %v5190 = vmul.f32 1.0, %v5189
        %v5191 = vrcp.pop %v5109
        %v5192 = vmul.f32 1.0, %v5191
        %v5193 = vrcp.pop %v5110
        %v5194 = vmul.f32 1.0, %v5193
        %v5195 = vrcp.pop %v5111
        %v5196 = vmul.f32 1.0, %v5195
        %v5197 = vrcp.pop %v5112
        %v5198 = vmul.f32 1.0, %v5197
        %v5199 = vrcp.pop %v5113
        %v5200 = vmul.f32 1.0, %v5199
        %v5201 = vrcp.pop %v5114
        %v5202 = vmul.f32 1.0, %v5201
        %v5203 = vrcp.pop %v5115
        %v5204 = vmul.f32 1.0, %v5203
        %v5205 = vrcp.pop %v5116
        %v5206 = vmul.f32 1.0, %v5205
        %v5207 = vrcp.pop %v5117
        %v5208 = vmul.f32 1.0, %v5207
        %v5209 = vrcp.pop %v5118
        %v5210 = vmul.f32 1.0, %v5209
        %v5211 = vrcp.pop %v5119
        %v5212 = vmul.f32 1.0, %v5211
        %v5213 = vrcp.pop %v5120
        %v5214 = vmul.f32 1.0, %v5213
        %v5215 = vrcp.pop %v5121
        %v5216 = vmul.f32 1.0, %v5215
        %v5217 = vrcp.pop %v5122
        %v5218 = vmul.f32 1.0, %v5217
        %v5219 = vrcp.pop %v5123
        %v5220 = vmul.f32 1.0, %v5219
        %v5221 = vrcp.pop %v5124
        %v5222 = vmul.f32 1.0, %v5221
        %v5223 = vrcp.pop %v5125
        %v5224 = vmul.f32 1.0, %v5223
        %v5225 = vrcp.pop %v5126
        %v5226 = vmul.f32 1.0, %v5225
        %v5227 = vrcp.pop %v5127
        %v5228 = vmul.f32 1.0, %v5227
        %v5229 = vrcp.pop %v5128
        %v5230 = vmul.f32 1.0, %v5229
        %v5231 = vrcp.pop %v5129
        %v5232 = vmul.f32 1.0, %v5231
        %v5233 = vrcp.pop %v5130
        %v5234 = vmul.f32 1.0, %v5233
        %v5235 = vrcp.pop %v5131
        %v5236 = vmul.f32 1.0, %v5235
        %v5237 = vrcp.pop %v5132
        %v5238 = vmul.f32 1.0, %v5237
        %v5239 = vrcp.pop %v5133
        %v5240 = vmul.f32 1.0, %v5239
        %v5241 = vrcp.pop %v5134
        %v5242 = vmul.f32 1.0, %v5241
        %v5243 = vrcp.pop %v5135
        %v5244 = vmul.f32 1.0, %v5243
        %v5245 = vrcp.pop %v5136
        %v5246 = vmul.f32 1.0, %v5245
        %v5247 = vrcp.pop %v5137
        %v5248 = vmul.f32 1.0, %v5247
        %v5249 = vrcp.pop %v5138
        %v5250 = vmul.f32 1.0, %v5249
        %v5251 = vrcp.pop %v5139
        %v5252 = vmul.f32 1.0, %v5251
        %v5253 = vrcp.pop %v5140
        %v5254 = vmul.f32 1.0, %v5253
        %v5255 = vrcp.pop %v5141
        %v5256 = vmul.f32 1.0, %v5255
        %v5257 = vrcp.pop %v5142
        %v5258 = vmul.f32 1.0, %v5257
        %v5259 = vrcp.pop %v5143
        %v5260 = vmul.f32 1.0, %v5259
        %v5261 = vrcp.pop %v5144
        %v5262 = vmul.f32 1.0, %v5261
        %v5263 = vrcp.pop %v5145
        %v5264 = vmul.f32 1.0, %v5263
        %v5265 = vrcp.pop %v5146
        %v5266 = vmul.f32 1.0, %v5265
        %v5267 = vrcp.pop %v5147
        %v5268 = vmul.f32 1.0, %v5267
        %v5269 = vrcp.pop %v5148
        %v5270 = vmul.f32 1.0, %v5269
        %v5271 = vrcp.pop %v5149
        %v5272 = vmul.f32 1.0, %v5271
        %v5273 = vrcp.pop %v5150
        %v5274 = vmul.f32 1.0, %v5273
        %v5275 = vrcp.pop %v5151
        %v5276 = vmul.f32 1.0, %v5275
        %v5277 = vrcp.pop %v5152
        %v5278 = vmul.f32 1.0, %v5277
        %v5279 = vrcp.pop %v5153
        %v5280 = vmul.f32 1.0, %v5279
        %v5281 = vrcp.pop %v5154
        %v5282 = vmul.f32 1.0, %v5281
        %v5283 = vmul.f32 %v4645, %v5156
        %v5284 = vmul.f32 %v4648, %v5158
        %v5285 = vmul.f32 %v4653, %v5160
        %v5286 = vmul.f32 %v4656, %v5162
        %v5287 = vmul.f32 %v4661, %v5164
        %v5288 = vmul.f32 %v4664, %v5166
        %v5289 = vmul.f32 %v4669, %v5168
        %v5290 = vmul.f32 %v4672, %v5170
        %v5291 = vmul.f32 %v4677, %v5172
        %v5292 = vmul.f32 %v4680, %v5174
        %v5293 = vmul.f32 %v4685, %v5176
        %v5294 = vmul.f32 %v4688, %v5178
        %v5295 = vmul.f32 %v4693, %v5180
        %v5296 = vmul.f32 %v4696, %v5182
        %v5297 = vmul.f32 %v4701, %v5184
        %v5298 = vmul.f32 %v4704, %v5186
        %v5299 = vmul.f32 %v4709, %v5188
        %v5300 = vmul.f32 %v4712, %v5190
        %v5301 = vmul.f32 %v4717, %v5192
        %v5302 = vmul.f32 %v4720, %v5194
        %v5303 = vmul.f32 %v4725, %v5196
        %v5304 = vmul.f32 %v4728, %v5198
        %v5305 = vmul.f32 %v4733, %v5200
        %v5306 = vmul.f32 %v4736, %v5202
        %v5307 = vmul.f32 %v4741, %v5204
        %v5308 = vmul.f32 %v4744, %v5206
        %v5309 = vmul.f32 %v4749, %v5208
        %v5310 = vmul.f32 %v4752, %v5210
        %v5311 = vmul.f32 %v4757, %v5212
        %v5312 = vmul.f32 %v4760, %v5214
        %v5313 = vmul.f32 %v4765, %v5216
        %v5314 = vmul.f32 %v4768, %v5218
        %v5315 = vmul.f32 %v4773, %v5220
        %v5316 = vmul.f32 %v4776, %v5222
        %v5317 = vmul.f32 %v4781, %v5224
        %v5318 = vmul.f32 %v4784, %v5226
        %v5319 = vmul.f32 %v4789, %v5228
        %v5320 = vmul.f32 %v4792, %v5230
        %v5321 = vmul.f32 %v4797, %v5232
        %v5322 = vmul.f32 %v4800, %v5234
        %v5323 = vmul.f32 %v4805, %v5236
        %v5324 = vmul.f32 %v4808, %v5238
        %v5325 = vmul.f32 %v4813, %v5240
        %v5326 = vmul.f32 %v4816, %v5242
        %v5327 = vmul.f32 %v4821, %v5244
        %v5328 = vmul.f32 %v4824, %v5246
        %v5329 = vmul.f32 %v4829, %v5248
        %v5330 = vmul.f32 %v4832, %v5250
        %v5331 = vmul.f32 %v4837, %v5252
        %v5332 = vmul.f32 %v4840, %v5254
        %v5333 = vmul.f32 %v4845, %v5256
        %v5334 = vmul.f32 %v4848, %v5258
        %v5335 = vmul.f32 %v4853, %v5260
        %v5336 = vmul.f32 %v4856, %v5262
        %v5337 = vmul.f32 %v4861, %v5264
        %v5338 = vmul.f32 %v4864, %v5266
        %v5339 = vmul.f32 %v4869, %v5268
        %v5340 = vmul.f32 %v4872, %v5270
        %v5341 = vmul.f32 %v4877, %v5272
        %v5342 = vmul.f32 %v4880, %v5274
        %v5343 = vmul.f32 %v4885, %v5276
        %v5344 = vmul.f32 %v4888, %v5278
        %v5345 = vmul.f32 %v4893, %v5280
        %v5346 = vmul.f32 %v4896, %v5282
        %vm5347 = vcmask 523264
        %v5348 = vsel %vm5347, %v5283, 0.0
        %v5349 = vsel %vm5347, %v5284, 0.0
        %v5350 = vadd.f32 %v5348, %v5349
        %v5351 = vsel %vm5347, %v5285, 0.0
        %v5352 = vadd.f32 %v5350, %v5351
        %v5353 = vsel %vm5347, %v5286, 0.0
        %v5354 = vadd.f32 %v5352, %v5353
        %v5355 = vsel %vm5347, %v5287, 0.0
        %v5356 = vadd.f32 %v5354, %v5355
        %v5357 = vsel %vm5347, %v5288, 0.0
        %v5358 = vadd.f32 %v5356, %v5357
        %v5359 = vsel %vm5347, %v5289, 0.0
        %v5360 = vadd.f32 %v5358, %v5359
        %v5361 = vsel %vm5347, %v5290, 0.0
        %v5362 = vadd.f32 %v5360, %v5361
        %v5363 = vsel %vm5347, %v5291, 0.0
        %v5364 = vadd.f32 %v5362, %v5363
        %v5365 = vsel %vm5347, %v5292, 0.0
        %v5366 = vadd.f32 %v5364, %v5365
        %v5367 = vsel %vm5347, %v5293, 0.0
        %v5368 = vadd.f32 %v5366, %v5367
        %v5369 = vsel %vm5347, %v5294, 0.0
        %v5370 = vadd.f32 %v5368, %v5369
        %v5371 = vsel %vm5347, %v5295, 0.0
        %v5372 = vadd.f32 %v5370, %v5371
        %v5373 = vsel %vm5347, %v5296, 0.0
        %v5374 = vadd.f32 %v5372, %v5373
        %v5375 = vsel %vm5347, %v5297, 0.0
        %v5376 = vadd.f32 %v5374, %v5375
        %v5377 = vsel %vm5347, %v5298, 0.0
        %v5378 = vadd.f32 %v5376, %v5377
        %v5379 = vsel %vm5347, %v5299, 0.0
        %v5380 = vadd.f32 %v5378, %v5379
        %v5381 = vsel %vm5347, %v5300, 0.0
        %v5382 = vadd.f32 %v5380, %v5381
        %v5383 = vsel %vm5347, %v5301, 0.0
        %v5384 = vadd.f32 %v5382, %v5383
        %v5385 = vsel %vm5347, %v5302, 0.0
        %v5386 = vadd.f32 %v5384, %v5385
        %v5387 = vsel %vm5347, %v5303, 0.0
        %v5388 = vadd.f32 %v5386, %v5387
        %v5389 = vsel %vm5347, %v5304, 0.0
        %v5390 = vadd.f32 %v5388, %v5389
        %v5391 = vsel %vm5347, %v5305, 0.0
        %v5392 = vadd.f32 %v5390, %v5391
        %v5393 = vsel %vm5347, %v5306, 0.0
        %v5394 = vadd.f32 %v5392, %v5393
        %v5395 = vsel %vm5347, %v5307, 0.0
        %v5396 = vadd.f32 %v5394, %v5395
        %v5397 = vsel %vm5347, %v5308, 0.0
        %v5398 = vadd.f32 %v5396, %v5397
        %v5399 = vsel %vm5347, %v5309, 0.0
        %v5400 = vadd.f32 %v5398, %v5399
        %v5401 = vsel %vm5347, %v5310, 0.0
        %v5402 = vadd.f32 %v5400, %v5401
        %v5403 = vsel %vm5347, %v5311, 0.0
        %v5404 = vadd.f32 %v5402, %v5403
        %v5405 = vsel %vm5347, %v5312, 0.0
        %v5406 = vadd.f32 %v5404, %v5405
        %v5407 = vsel %vm5347, %v5313, 0.0
        %v5408 = vadd.f32 %v5406, %v5407
        %v5409 = vsel %vm5347, %v5314, 0.0
        %v5410 = vadd.f32 %v5408, %v5409
        %v5411 = vrot.slane %v5410, 4
        %v5412 = vadd.f32 %v5410, %v5411
        %v5413 = vrot.slane %v5412, 2
        %v5414 = vadd.f32 %v5412, %v5413
        %v5415 = vrot.slane %v5414, 1
        %v5416 = vadd.f32 %v5414, %v5415
        %v5417 = vsel %vm5347, %v5315, 0.0
        %v5418 = vsel %vm5347, %v5316, 0.0
        %v5419 = vadd.f32 %v5417, %v5418
        %v5420 = vsel %vm5347, %v5317, 0.0
        %v5421 = vadd.f32 %v5419, %v5420
        %v5422 = vsel %vm5347, %v5318, 0.0
        %v5423 = vadd.f32 %v5421, %v5422
        %v5424 = vsel %vm5347, %v5319, 0.0
        %v5425 = vadd.f32 %v5423, %v5424
        %v5426 = vsel %vm5347, %v5320, 0.0
        %v5427 = vadd.f32 %v5425, %v5426
        %v5428 = vsel %vm5347, %v5321, 0.0
        %v5429 = vadd.f32 %v5427, %v5428
        %v5430 = vsel %vm5347, %v5322, 0.0
        %v5431 = vadd.f32 %v5429, %v5430
        %v5432 = vsel %vm5347, %v5323, 0.0
        %v5433 = vadd.f32 %v5431, %v5432
        %v5434 = vsel %vm5347, %v5324, 0.0
        %v5435 = vadd.f32 %v5433, %v5434
        %v5436 = vsel %vm5347, %v5325, 0.0
        %v5437 = vadd.f32 %v5435, %v5436
        %v5438 = vsel %vm5347, %v5326, 0.0
        %v5439 = vadd.f32 %v5437, %v5438
        %v5440 = vsel %vm5347, %v5327, 0.0
        %v5441 = vadd.f32 %v5439, %v5440
        %v5442 = vsel %vm5347, %v5328, 0.0
        %v5443 = vadd.f32 %v5441, %v5442
        %v5444 = vsel %vm5347, %v5329, 0.0
        %v5445 = vadd.f32 %v5443, %v5444
        %v5446 = vsel %vm5347, %v5330, 0.0
        %v5447 = vadd.f32 %v5445, %v5446
        %v5448 = vsel %vm5347, %v5331, 0.0
        %v5449 = vadd.f32 %v5447, %v5448
        %v5450 = vsel %vm5347, %v5332, 0.0
        %v5451 = vadd.f32 %v5449, %v5450
        %v5452 = vsel %vm5347, %v5333, 0.0
        %v5453 = vadd.f32 %v5451, %v5452
        %v5454 = vsel %vm5347, %v5334, 0.0
        %v5455 = vadd.f32 %v5453, %v5454
        %v5456 = vsel %vm5347, %v5335, 0.0
        %v5457 = vadd.f32 %v5455, %v5456
        %v5458 = vsel %vm5347, %v5336, 0.0
        %v5459 = vadd.f32 %v5457, %v5458
        %v5460 = vsel %vm5347, %v5337, 0.0
        %v5461 = vadd.f32 %v5459, %v5460
        %v5462 = vsel %vm5347, %v5338, 0.0
        %v5463 = vadd.f32 %v5461, %v5462
        %v5464 = vsel %vm5347, %v5339, 0.0
        %v5465 = vadd.f32 %v5463, %v5464
        %v5466 = vsel %vm5347, %v5340, 0.0
        %v5467 = vadd.f32 %v5465, %v5466
        %v5468 = vsel %vm5347, %v5341, 0.0
        %v5469 = vadd.f32 %v5467, %v5468
        %v5470 = vsel %vm5347, %v5342, 0.0
        %v5471 = vadd.f32 %v5469, %v5470
        %v5472 = vsel %vm5347, %v5343, 0.0
        %v5473 = vadd.f32 %v5471, %v5472
        %v5474 = vsel %vm5347, %v5344, 0.0
        %v5475 = vadd.f32 %v5473, %v5474
        %v5476 = vsel %vm5347, %v5345, 0.0
        %v5477 = vadd.f32 %v5475, %v5476
        %v5478 = vsel %vm5347, %v5346, 0.0
        %v5479 = vadd.f32 %v5477, %v5478
        %v5480 = vrot.slane %v5479, 4
        %v5481 = vadd.f32 %v5479, %v5480
        %v5482 = vrot.slane %v5481, 2
        %v5483 = vadd.f32 %v5481, %v5482
        %v5484 = vrot.slane %v5483, 1
        %v5485 = vadd.f32 %v5483, %v5484
        %v5486 = vrcp.pop 256.0
        %v5487 = vmul.f32 %v5416, %v5486
        %v5488 = vmul.f32 %v5485, %v5486
        %v5489 = vld [vmem:[%s9] sm:$0xff]
        %v5490 = vld [vmem:[%s9 + $0x8] sm:$0xff]
        %v5491 = vld [vmem:[%s9 + $0x10] sm:$0xff]
        %v5492 = vld [vmem:[%s9 + $0x18] sm:$0xff]
        %v5493 = vld [vmem:[%s9 + $0x20] sm:$0xff]
        %v5494 = vld [vmem:[%s9 + $0x28] sm:$0xff]
        %v5495 = vld [vmem:[%s9 + $0x30] sm:$0xff]
        %v5496 = vld [vmem:[%s9 + $0x38] sm:$0xff]
        %v5497 = vld [vmem:[%s10] sm:$0x1]
        %v5499 = vlaneseq
        %v5500 = vshrl.u32 %v5499, 7
        %v5501 = vsub.s32 0, %v5500
        %v5502 = vrot.slane %v5497, %v5501
        %vm5506 = vcmask 1041409
        %v5507 = vsel %vm5506, %v5488, %v5487
        %v5508 = vsel %vm5347, %v5507, 0
        %5510 = vmatprep.subr.mxu0 0.0
        %5511 = vmatpush1.msra.mxu0 %v5489
        %5512 = vmatprep.subr.mxu0 0.0
        %5513 = vmatpush1.msra.mxu0 %v5490
        %5514 = vmatprep.subr.mxu0 0.0
        %5515 = vmatpush1.msra.mxu0 %v5491
        %5516 = vmatprep.subr.mxu0 0.0
        %5517 = vmatpush1.msra.mxu0 %v5492
        %5518 = vmatprep.subr.mxu0 0.0
        %5519 = vmatpush1.msra.mxu0 %v5493
        %5520 = vmatprep.subr.mxu0 0.0
        %5521 = vmatpush1.msra.mxu0 %v5494
        %5522 = vmatprep.subr.mxu0 0.0
        %5523 = vmatpush1.msra.mxu0 %v5495
        %5524 = vmatprep.subr.mxu0 0.0
        %5525 = vmatpush1.msra.mxu0 %v5496
        %5526 = vmatprep.subr.mxu0 0.0
        %5527 = vmatpush1.msra.mxu0 0.0
        %5528 = vmatprep.subr.mxu0 0.0
        %5529 = vmatpush1.msra.mxu0 0.0
        %5530 = vmatprep.subr.mxu0 0.0
        %5531 = vmatpush1.msra.mxu0 0.0
        %5532 = vmatprep.subr.mxu0 0.0
        %5533 = vmatpush1.msra.mxu0 0.0
        %5534 = vmatprep.subr.mxu0 0.0
        %5535 = vmatpush1.msra.mxu0 0.0
        %5536 = vmatprep.subr.mxu0 0.0
        %5537 = vmatpush1.msra.mxu0 0.0
        %5538 = vmatprep.subr.mxu0 0.0
        %5539 = vmatpush1.msra.mxu0 0.0
        %5540 = vmatprep.subr.mxu0 0.0
        %5541 = vmatpush1.msra.mxu0 0.0
        %5542 = vmatprep.subr.mxu0 0.0
        %5543 = vmatpush1.msra.mxu0 0.0
        %5544 = vmatprep.subr.mxu0 0.0
        %5545 = vmatpush1.msra.mxu0 0.0
        %5546 = vmatprep.subr.mxu0 0.0
        %5547 = vmatpush1.msra.mxu0 0.0
        %5548 = vmatprep.subr.mxu0 0.0
        %5549 = vmatpush1.msra.mxu0 0.0
        %5550 = vmatprep.subr.mxu0 0.0
        %5551 = vmatpush1.msra.mxu0 0.0
        %5552 = vmatprep.subr.mxu0 0.0
        %5553 = vmatpush1.msra.mxu0 0.0
        %5554 = vmatprep.subr.mxu0 0.0
        %5555 = vmatpush1.msra.mxu0 0.0
        %5556 = vmatprep.subr.mxu0 0.0
        %5557 = vmatpush1.msra.mxu0 0.0
        %5558 = vmatprep.subr.mxu0 0.0
        %5559 = vmatpush1.msra.mxu0 0.0
        %5560 = vmatprep.subr.mxu0 0.0
        %5561 = vmatpush1.msra.mxu0 0.0
        %5562 = vmatprep.subr.mxu0 0.0
        %5563 = vmatpush1.msra.mxu0 0.0
        %5564 = vmatprep.subr.mxu0 0.0
        %5565 = vmatpush1.msra.mxu0 0.0
        %5566 = vmatprep.subr.mxu0 0.0
        %5567 = vmatpush1.msra.mxu0 0.0
        %5568 = vmatprep.subr.mxu0 0.0
        %5569 = vmatpush1.msra.mxu0 0.0
        %5570 = vmatprep.subr.mxu0 0.0
        %5571 = vmatpush1.msra.mxu0 0.0
        %5572 = vmatprep.subr.mxu0 0.0
        %5573 = vmatpush1.msra.mxu0 0.0
        %5574 = vmatprep.mubr.f32.mxu0 0.0
        %5575 = vmatmul.mubr.f32.gmra.mrb[0].mxu0 %v5508
        %v5576 = vpop.f32.mrb[0].mxu0
        %v5577 = vadd.f32 %v5502, %v5576
        %v5578 = vpop.f32.mrb[0].mxu0
        %5579 = vdwg.mxu0
        %vm5580 = vcmask 74752
        %5581 = vst.msk [vmem:[%s382] sm:$0x3] %vm5580, %v5577
        %s5582 = sand.u32 %s269, 1
        %s5583 = scalar_lea.sflag [#allocation4], %s5582
        %s5584 = sand.u32 %s269, 1
        %s5585 = smul.addr %s5584, 2
        %s5586 = scalar_lea.vmem [#allocation3], %s5585
        // Predicated region
        $region65: #{effnet_forward.1} parent=63 // pred_check
          %p5587 = pneg %p279
        $region66: #{effnet_forward.1} parent=63 // pred_check_branch
          %5589 = sbr.rel (%p5587) target = $region68
        $region67: #{effnet_forward.1} parent=63 // pred_region
          %s5591 = ssub.s32 32, 32
          %5592 = vsyncadd %s5583, %s5591
          %s5593 = smul.addr %s25, 32
          %s5594 = scalar_lea.hbm %s11, %s5593
          %s5596 = sshll.u32 %s5586, 4
          %s5597 = int_to_ptr.vmem [resolvable:$true] %s5596
          %5599 = dma.vmem_to_hbm [thread:$0]  %s5597, 32, %s5594, %s5583
        $region68: #{effnet_forward.1} parent=63 // pred_fallthru
          _
      $region64: #{effnet_forward.1} parent=5 // pred_fallthru
        _
      %p5600 = scmp.le.s32.totalorder 2, %s20
      // Predicated region
      $region69: #{effnet_forward.1} parent=5 // pred_check
        %p5601 = pneg %p5600
      $region70: #{effnet_forward.1} parent=5 // pred_check_branch
        %5603 = sbr.rel (%p5601) target = $region72
      $region71: #{effnet_forward.1} parent=5 // pred_region
        %s5604 = ssub.s32 %s20, 2
        // Predicated region
        $region73: #{effnet_forward.1} parent=71 // pred_check
          %p5605 = pneg %p285
        $region74: #{effnet_forward.1} parent=71 // pred_check_branch
          %5607 = sbr.rel (%p5605) target = $region76
        $region75: #{effnet_forward.1} parent=71 // pred_region
          %s5608 = sand.u32 %s270, 1
          %s5609 = scalar_lea.sflag [#allocation4], %s5608
          %s5610 = sand.u32 %s270, 1
          %s5611 = smul.addr %s5610, 2
          %s5612 = scalar_lea.vmem [#allocation3], %s5611
          %5613 = dma.done %s5609, 32
        $region76: #{effnet_forward.1} parent=71 // pred_fallthru
          _
      $region72: #{effnet_forward.1} parent=5 // pred_fallthru
        _
    $region6: #{effnet_forward.1} parent=1 // loop_footer
      %s24 = sadd.s32 1, %s20
    $region7: #{effnet_forward.1} parent=1 // loop_footer_branch
      %19 = sbr.rel target = $region3
    $region8: #{effnet_forward.1} parent=1 // loop_exit
      _
    %5614 = vsyncpa [#allocation4], 1
    %s5615 = scalar_lea.sflag [#allocation4], 1
    %5616 = vsyncpa %s5615, 1

</llo_original>
